<compile_context>
chip_gen: v5e
topology: v5e:2x2
jax: 0.10.0
libtpu: 0.0.40
codegen_flags: <defaults>
</compile_context>

<pallas_src>
import functools
import math
import numpy as np
import jax
import jax.numpy as jnp
from jax import lax
from jax.experimental import pallas as pl
from jax.experimental.pallas import tpu as pltpu

B_J0 = 0.1   # baseline threshold (b_j0)
BETA = 1.8   # adaptation strength (isAdapt=1)


def _round_up(x, m):
    return ((x + m - 1) // m) * m


# ----------------------------- Pallas kernel ------------------------------ #

def snn_seq_kernel(xproj_ref, xgate_ref, wfused_ref, w3_ref, b3_ref, stauo_ref,
                   mem0_ref, spk0_ref, b0_ref, mo0_ref,
                   fout_ref, mem_ref, spk_ref, badp_ref, mo_ref,
                   *, unroll):
    # Load the initial hidden state into the resident state blocks at the
    # first time block of each batch block.
    @pl.when(pl.program_id(1) == 0)
    def _():
        mem_ref[...] = mem0_ref[...]
        spk_ref[...] = spk0_ref[...]
        badp_ref[...] = b0_ref[...]
        mo_ref[...] = mo0_ref[...]

    Hp = mem_ref.shape[1]
    TB = xproj_ref.shape[0]

    # Loop-invariant weight loads (hoisted out of the time loop).
    wfused = wfused_ref[...]
    w3 = w3_ref[...]
    b3 = b3_ref[...]
    stauo = stauo_ref[...]
    mm_dtype = wfused.dtype

    def step(s, carry):
        mem, spk, b, mo = carry

        # Single fused state-dependent matmul per step:
        #   [spk | mem | b] @ [[w1s, w1s@wtm_d, -(w1s@wta_d)],
        #                      [ 0 ,   wtm_m  ,      0      ],
        #                      [ 0 ,     0    ,   -wta_b    ]]
        # -> [dense_x spk-half | arg(tau_m) state | -arg(tau_adp) state]
        lhs = jnp.concatenate([spk, mem, b], axis=1).astype(mm_dtype)
        fused = jnp.dot(lhs, wfused, preferred_element_type=jnp.float32)

        # dense_x = layer1_x(cat(x_t, spk)); x-half (+bias) hoisted to wrapper.
        dense_x = xproj_ref[s] + fused[:, :Hp]

        # gate = [tau_m | 1 - tau_adp] (tau_adp half negated in weights/bias)
        # so both state updates are the same lerp; splits at Hp are tile-aligned.
        gate = jax.nn.sigmoid(xgate_ref[s] + fused[:, Hp:])
        gate_m = gate[:, :Hp]
        gate_a = gate[:, Hp:]

        mem_new = mem + (dense_x - mem) * gate_m           # membrane lerp (tau_m)
        b_new = b + (spk - b) * gate_a                     # adaptation lerp (1 - tau_adp)
        thr = B_J0 + BETA * b_new
        spike = (mem_new - thr > 0.0).astype(jnp.float32)  # ActFun_adp forward (hard threshold)
        mem_new = (1.0 - spike) * mem_new                  # reset by spike

        # TODO(synk): nn.Dropout(0.1) on the spike output is treated as identity
        # (eval mode); the surrogate-gradient backward of ActFun_adp is not implemented.
        dense3 = jnp.dot(spike.astype(mm_dtype), w3,
                         preferred_element_type=jnp.float32) + b3
        mo_new = mo + (dense3 - mo) * stauo                # output_Neuron (sigmoid pre-applied)

        fout_ref[s] = mo_new                               # lane-dense (128-multiple) store
        return (mem_new, spike, b_new, mo_new)

    carry0 = (mem_ref[...], spk_ref[...], badp_ref[...], mo_ref[...])
    mem, spk, b, mo = lax.fori_loop(0, TB, step, carry0, unroll=unroll)

    # Write the carried state back to the resident blocks once per grid step.
    mem_ref[...] = mem
    spk_ref[...] = spk
    badp_ref[...] = b
    mo_ref[...] = mo


# ------------------------------- Wrapper ----------------------------------- #

def _pick_time_block(T, Bb, Hp, NP, budget_bytes=8 << 20, max_tb=64):
    # x_proj (Hp) + x_gate (2Hp) + fout (NP) lanes per timestep, double-buffered.
    per_step = Bb * (3 * Hp + NP) * 4 * 2
    cap = int(max(1, min(max_tb, budget_bytes // per_step)))
    for tb in range(min(T, cap), 0, -1):
        if T % tb == 0:
            return tb
    return 1


def seq_model_forward(x, params, hidden, *, batch_blocks=None, time_block=None,
                      matmul_dtype=jnp.float32):
    B, T, C, D1, D2 = x.shape
    H = hidden[0].shape[1]
    NOUT = hidden[3].shape[1]

    Hp = _round_up(H, 128)          # lane-dense hidden dim
    NP = _round_up(NOUT, 128)       # lane-dense class dim

    # Batch-block layout (leading "parallel" grid axis -> megacore on v7x).
    if batch_blocks is not None:
        nB = batch_blocks
    else:
        nB = 2 if B >= 16 else 1    # only split when each core gets >= 8 real rows
    Bpb = -(-B // nB)               # real rows per batch block
    Bb = _round_up(Bpb, 8)          # sublane-padded rows per batch block
    Bp = nB * Bb

    def pad_lane(a, to):
        return jnp.pad(a, ((0, 0), (0, to - a.shape[1])))

    def pad2(w, r, c):
        return jnp.pad(w, ((0, r - w.shape[0]), (0, c - w.shape[1])))

    def pad_batch(a, baxis):
        pads = [(0, 0)] * a.ndim
        pads[baxis] = (0, nB * Bpb - B)
        a = jnp.pad(a, pads)
        shp = a.shape
        a = a.reshape(shp[:baxis] + (nB, Bpb) + shp[baxis + 1:])
        pads2 = [(0, 0)] * a.ndim
        pads2[baxis + 1] = (0, Bb - Bpb)
        a = jnp.pad(a, pads2)
        return a.reshape(shp[:baxis] + (nB * Bb,) + shp[baxis + 1:])

    def unpad_batch(a, baxis):
        shp = a.shape
        a = a.reshape(shp[:baxis] + (nB, Bb) + shp[baxis + 1:])
        a = lax.slice_in_dim(a, 0, Bpb, axis=baxis + 1)
        a = a.reshape(shp[:baxis] + (nB * Bpb,) + shp[baxis + 1:])
        return lax.slice_in_dim(a, 0, B, axis=baxis)

    # ---- Hoisted, state-independent preprocessing (big XLA matmuls, M=T*B) ----
    # F.avg_pool2d(k=4, s=4).view(B, -1) as reshape + mean (no sparse matmul).
    xt = jnp.transpose(x, (1, 0, 2, 3, 4)).astype(jnp.float32)
    xp = xt.reshape(T * B, C, D1 // 4, 4, D2 // 4, 4).mean(axis=(3, 5))
    xp = xp.reshape(T * B, -1)
    # Input half of layer1_x (+ bias) for all timesteps at once.
    x_proj = xp @ params["w1x"] + params["b1"]                       # (T*B, H)
    # State-independent halves of the tau gate arguments (tau_adp half negated).
    xg_m = x_proj @ params["wtm_d"] + params["btm"]                  # (T*B, H)
    xg_a = -(x_proj @ params["wta_d"] + params["bta"])               # (T*B, H)

    xproj_f = pad_batch(pad_lane(x_proj, Hp).reshape(T, B, Hp), 1)   # (T, Bp, Hp)
    xgate_f = pad_batch(
        jnp.concatenate([pad_lane(xg_m, Hp), pad_lane(xg_a, Hp)],
                        axis=1).reshape(T, B, 2 * Hp), 1)            # (T, Bp, 2Hp)

    # ---- Fused / precomposed / padded weights for the recurrent core ----
    w1s, wtm_d, wta_d = params["w1s"], params["wtm_d"], params["wta_d"]
    wtm_m, wta_b = params["wtm_m"], params["wta_b"]
    zHp = jnp.zeros((Hp, Hp), jnp.float32)
    row_spk = jnp.concatenate([pad2(w1s, Hp, Hp),
                               pad2(w1s @ wtm_d, Hp, Hp),
                               pad2(-(w1s @ wta_d), Hp, Hp)], axis=1)
    row_mem = jnp.concatenate([zHp, pad2(wtm_m, Hp, Hp), zHp], axis=1)
    row_b = jnp.concatenate([zHp, zHp, pad2(-wta_b, Hp, Hp)], axis=1)
    wfused = jnp.concatenate([row_spk, row_mem, row_b], axis=0)      # (3Hp, 3Hp)

    w3p = pad2(params["w3"], Hp, NP)                                 # (Hp, NP)
    b3p = pad_lane(params["b3"], NP)                                 # (1, NP)
    stauo = pad_lane(jax.nn.sigmoid(params["tauo"]), NP)             # (1, NP)

    # Optional bf16 MXU operands (f32 accumulation) for v6e/v7x production scale.
    wfused = wfused.astype(matmul_dtype)
    w3p = w3p.astype(matmul_dtype)

    # Initial hidden state, lane- and batch-padded.
    mem0 = pad_batch(pad_lane(hidden[0], Hp), 0)
    spk0 = pad_batch(pad_lane(hidden[1], Hp), 0)
    b0 = pad_batch(pad_lane(hidden[2], Hp), 0)
    mo0 = pad_batch(pad_lane(hidden[3], NP), 0)

    # ---- Grid / VMEM sizing ----
    TB = time_block if time_block is not None else _pick_time_block(T, Bb, Hp, NP)
    assert T % TB == 0
    grid = (nB, T // TB)
    unroll = max(1, min(TB, 8))

    stream_bytes = TB * Bb * (3 * Hp + NP) * 4 * 2                   # double-buffered streams
    weight_bytes = (wfused.size * wfused.dtype.itemsize
                    + w3p.size * w3p.dtype.itemsize
                    + (b3p.size + stauo.size) * 4) * 2
    state_bytes = Bb * (3 * Hp + NP) * 4 * 4
    vmem_limit = int(min(max(2 * (stream_bytes + weight_bytes + state_bytes),
                             16 << 20), 64 << 20))

    operands = [xproj_f, xgate_f, wfused, w3p, b3p, stauo, mem0, spk0, b0, mo0]

    def full_spec(a):
        nd = a.ndim
        return pl.BlockSpec(a.shape, lambda bb, ti, _nd=nd: (0,) * _nd)

    in_specs = [
        pl.BlockSpec((TB, Bb, Hp), lambda bb, ti: (ti, bb, 0)),
        pl.BlockSpec((TB, Bb, 2 * Hp), lambda bb, ti: (ti, bb, 0)),
        full_spec(wfused), full_spec(w3p), full_spec(b3p), full_spec(stauo),
        pl.BlockSpec((Bb, Hp), lambda bb, ti: (bb, 0)),
        pl.BlockSpec((Bb, Hp), lambda bb, ti: (bb, 0)),
        pl.BlockSpec((Bb, Hp), lambda bb, ti: (bb, 0)),
        pl.BlockSpec((Bb, NP), lambda bb, ti: (bb, 0)),
    ]
    out_shape = (
        jax.ShapeDtypeStruct((T, Bp, NP), jnp.float32),   # output-neuron mem / step
        jax.ShapeDtypeStruct((Bp, Hp), jnp.float32),      # final mem
        jax.ShapeDtypeStruct((Bp, Hp), jnp.float32),      # final spk
        jax.ShapeDtypeStruct((Bp, Hp), jnp.float32),      # final b
        jax.ShapeDtypeStruct((Bp, NP), jnp.float32),      # final mem_out (padded)
    )
    out_specs = (
        pl.BlockSpec((TB, Bb, NP), lambda bb, ti: (ti, bb, 0)),
        pl.BlockSpec((Bb, Hp), lambda bb, ti: (bb, 0)),
        pl.BlockSpec((Bb, Hp), lambda bb, ti: (bb, 0)),
        pl.BlockSpec((Bb, Hp), lambda bb, ti: (bb, 0)),
        pl.BlockSpec((Bb, NP), lambda bb, ti: (bb, 0)),
    )

    kernel = functools.partial(snn_seq_kernel, unroll=unroll)
    memout_seq, mem, spk, badp, memout = pl.pallas_call(
        kernel,
        grid=grid,
        in_specs=in_specs,
        out_specs=out_specs,
        out_shape=out_shape,
        compiler_params=pltpu.CompilerParams(
            dimension_semantics=("parallel", "arbitrary"),   # batch-blocks parallel, time sequential
            vmem_limit_bytes=vmem_limit),
    )(*operands)

    # log_softmax once over the whole (T, B, NOUT) tensor (outside the kernel).
    fout = jax.nn.log_softmax(unpad_batch(memout_seq, 1)[:, :, :NOUT], axis=-1)
    mem_f = unpad_batch(mem, 0)[:, :H]
    spk_f = unpad_batch(spk, 0)[:, :H]
    b_f = unpad_batch(badp, 0)[:, :H]
    mo_f = unpad_batch(memout, 0)[:, :NOUT]
    recon_loss = jnp.zeros((1,), jnp.float32)    # torch.zeros(1) in SeqModel.forward
    return fout, (mem_f, spk_f, b_f, mo_f), recon_loss


# ------------------------ Params / reference / test ------------------------ #

def xavier_uniform(key, fan_in, fan_out):
    limit = math.sqrt(6.0 / (fan_in + fan_out))
    return jax.random.uniform(key, (fan_in, fan_out), jnp.float32, -limit, limit)


def linear_bias(key, fan_in, fan_out):
    bound = 1.0 / math.sqrt(fan_in)
    return jax.random.uniform(key, (1, fan_out), jnp.float32, -bound, bound)


def init_params(key, feat, hidden, nout):
    ks = jax.random.split(key, 8)
    w1 = xavier_uniform(ks[0], feat + hidden, hidden)        # layer1_x^T
    wtm = xavier_uniform(ks[1], 2 * hidden, hidden)          # layer1_tauM^T
    wta = xavier_uniform(ks[2], 2 * hidden, hidden)          # layer1_tauAdp^T
    w3 = xavier_uniform(ks[3], hidden, nout)                 # layer3_x^T
    return dict(
        w1x=w1[:feat], w1s=w1[feat:],
        b1=linear_bias(ks[4], feat + hidden, hidden),
        wtm_d=wtm[:hidden], wtm_m=wtm[hidden:],
        btm=linear_bias(ks[5], 2 * hidden, hidden),
        wta_d=wta[:hidden], wta_b=wta[hidden:],
        bta=linear_bias(ks[6], 2 * hidden, hidden),
        w3=w3, b3=linear_bias(ks[7], hidden, nout),
        tauo=jnp.zeros((1, nout), jnp.float32),              # tau_m_o init: 0
    )


def init_hidden(key, bsz, hidden, nout):
    # matches SeqModel.init_hidden: uniform, zeros, b_j0 fill, zeros
    return (jax.random.uniform(key, (bsz, hidden), jnp.float32),
            jnp.zeros((bsz, hidden), jnp.float32),
            jnp.full((bsz, hidden), B_J0, jnp.float32),
            jnp.zeros((bsz, nout), jnp.float32))


def reference_forward(x, params, hidden):
    """Pure-JAX reference mirroring the PyTorch math (for validation)."""
    B, T, C, D1, D2 = x.shape
    mem, spk, badp, memout = hidden
    outs = []
    for i in range(T):
        xt = x[:, i]
        xd = xt.reshape(B, C, D1 // 4, 4, D2 // 4, 4).mean(axis=(3, 5)).reshape(B, -1)
        dense_x = xd @ params["w1x"] + spk @ params["w1s"] + params["b1"]
        tau_m = jax.nn.sigmoid(dense_x @ params["wtm_d"] + mem @ params["wtm_m"]
                               + params["btm"])
        tau_adp = jax.nn.sigmoid(dense_x @ params["wta_d"] + badp @ params["wta_b"]
                                 + params["bta"])
        badp = tau_adp * badp + (1.0 - tau_adp) * spk
        Bth = B_J0 + BETA * badp
        mem = mem + (-mem + dense_x) * tau_m
        spk = (mem - Bth > 0.0).astype(jnp.float32)
        mem = (1.0 - spk) * mem
        dense3 = spk @ params["w3"] + params["b3"]
        memout = memout + (-memout + dense3) * jax.nn.sigmoid(params["tauo"])
        outs.append(jax.nn.log_softmax(memout, axis=1))
    return jnp.stack(outs, 0), (mem, spk, badp, memout)


if __name__ == "__main__":
    key = jax.random.PRNGKey(0)
    kx, kp, kh = jax.random.split(key, 3)

    # small shapes consistent with the module (DVS-gesture-like: 2-ch NCHW frames)
    B, T, C, D1, D2 = 2, 8, 2, 32, 32
    H, NOUT = 32, 11
    FEAT = C * (D1 // 4) * (D2 // 4)   # flattened size after 4x4 avg-pool

    x = jax.random.normal(kx, (B, T, C, D1, D2), jnp.float32)
    params = init_params(kp, FEAT, H, NOUT)
    hidden = init_hidden(kh, B, H, NOUT)

    fwd = jax.jit(seq_model_forward,
                  static_argnames=("batch_blocks", "time_block", "matmul_dtype"))
    # batch_blocks=2 exercises the megacore ("parallel") batch-block axis;
    # each batch block owns its own resident state blocks.
    fout, final_hidden, recon = fwd(x, params, hidden, batch_blocks=2)
    jax.block_until_ready((fout, final_hidden, recon))

    ref_out, ref_hidden = reference_forward(x, params, hidden)
    np.testing.assert_allclose(np.asarray(fout), np.asarray(ref_out),
                               rtol=1e-4, atol=1e-4)
    for a, b in zip(final_hidden, ref_hidden):
        np.testing.assert_allclose(np.asarray(a), np.asarray(b),
                                   rtol=1e-4, atol=1e-4)

    print("KERNEL_OK")
</pallas_src>

<mosaic_0001>
module attributes {stable_mosaic.version = 11 : i64} {
  func.func @snn_seq_kernel(%arg0: i32, %arg1: i32, %arg2: memref<8x8x128xf32, #tpu.memory_space<vmem>>, %arg3: memref<8x8x256xf32, #tpu.memory_space<vmem>>, %arg4: memref<384x384xf32, #tpu.memory_space<vmem>>, %arg5: memref<128x128xf32, #tpu.memory_space<vmem>>, %arg6: memref<1x128xf32, #tpu.memory_space<vmem>>, %arg7: memref<1x128xf32, #tpu.memory_space<vmem>>, %arg8: memref<8x128xf32, #tpu.memory_space<vmem>>, %arg9: memref<8x128xf32, #tpu.memory_space<vmem>>, %arg10: memref<8x128xf32, #tpu.memory_space<vmem>>, %arg11: memref<8x128xf32, #tpu.memory_space<vmem>>, %arg12: memref<8x8x128xf32, #tpu.memory_space<vmem>>, %arg13: memref<8x128xf32, #tpu.memory_space<vmem>>, %arg14: memref<8x128xf32, #tpu.memory_space<vmem>>, %arg15: memref<8x128xf32, #tpu.memory_space<vmem>>, %arg16: memref<8x128xf32, #tpu.memory_space<vmem>>) attributes {dimension_semantics = [#tpu.dimension_semantics<parallel>, #tpu.dimension_semantics<arbitrary>], iteration_bounds = array<i64: 2, 1>, scalar_prefetch = 0 : i64, scratch_operands = 0 : i64, tpu.core_type = #tpu.core_type<tc>, window_params = [{transform_indices = @transform_0, window_bounds = array<i64: 8, 8, 128>}, {transform_indices = @transform_1, window_bounds = array<i64: 8, 8, 256>}, {pipeline_mode = #tpu.pipeline_mode<synchronous>, transform_indices = @transform_2, window_bounds = array<i64: 384, 384>}, {pipeline_mode = #tpu.pipeline_mode<synchronous>, transform_indices = @transform_3, window_bounds = array<i64: 128, 128>}, {pipeline_mode = #tpu.pipeline_mode<synchronous>, transform_indices = @transform_4, window_bounds = array<i64: 1, 128>}, {pipeline_mode = #tpu.pipeline_mode<synchronous>, transform_indices = @transform_5, window_bounds = array<i64: 1, 128>}, {transform_indices = @transform_6, window_bounds = array<i64: 8, 128>}, {transform_indices = @transform_7, window_bounds = array<i64: 8, 128>}, {transform_indices = @transform_8, window_bounds = array<i64: 8, 128>}, {transform_indices = @transform_9, window_bounds = array<i64: 8, 128>}, {transform_indices = @transform_10, window_bounds = array<i64: 8, 8, 128>}, {transform_indices = @transform_11, window_bounds = array<i64: 8, 128>}, {transform_indices = @transform_12, window_bounds = array<i64: 8, 128>}, {transform_indices = @transform_13, window_bounds = array<i64: 8, 128>}, {transform_indices = @transform_14, window_bounds = array<i64: 8, 128>}]} {
    %c0_i32 = arith.constant 0 : i32
    %0 = arith.cmpi eq, %arg1, %c0_i32 : i32
    %1 = arith.extui %0 : i1 to i32
    %c0_i32_0 = arith.constant 0 : i32
    %2 = arith.cmpi ne, %1, %c0_i32_0 : i32
    scf.if %2 {
      %c0_128 = arith.constant 0 : index
      %c0_129 = arith.constant 0 : index
      %399 = vector.load %arg8[%c0_128, %c0_129] : memref<8x128xf32, #tpu.memory_space<vmem>>, vector<8x128xf32>
      %c0_130 = arith.constant 0 : index
      %c0_131 = arith.constant 0 : index
      %400 = vector.load %arg13[%c0_130, %c0_131] : memref<8x128xf32, #tpu.memory_space<vmem>>, vector<8x128xf32>
      tpu.vector_store %arg13[%c0_130, %c0_131], %399 {strides = array<i32>} : memref<8x128xf32, #tpu.memory_space<vmem>>, vector<8x128xf32>,
      %c0_132 = arith.constant 0 : index
      %c0_133 = arith.constant 0 : index
      %401 = vector.load %arg9[%c0_132, %c0_133] : memref<8x128xf32, #tpu.memory_space<vmem>>, vector<8x128xf32>
      %c0_134 = arith.constant 0 : index
      %c0_135 = arith.constant 0 : index
      %402 = vector.load %arg14[%c0_134, %c0_135] : memref<8x128xf32, #tpu.memory_space<vmem>>, vector<8x128xf32>
      tpu.vector_store %arg14[%c0_134, %c0_135], %401 {strides = array<i32>} : memref<8x128xf32, #tpu.memory_space<vmem>>, vector<8x128xf32>,
      %c0_136 = arith.constant 0 : index
      %c0_137 = arith.constant 0 : index
      %403 = vector.load %arg10[%c0_136, %c0_137] : memref<8x128xf32, #tpu.memory_space<vmem>>, vector<8x128xf32>
      %c0_138 = arith.constant 0 : index
      %c0_139 = arith.constant 0 : index
      %404 = vector.load %arg15[%c0_138, %c0_139] : memref<8x128xf32, #tpu.memory_space<vmem>>, vector<8x128xf32>
      tpu.vector_store %arg15[%c0_138, %c0_139], %403 {strides = array<i32>} : memref<8x128xf32, #tpu.memory_space<vmem>>, vector<8x128xf32>,
      %c0_140 = arith.constant 0 : index
      %c0_141 = arith.constant 0 : index
      %405 = vector.load %arg11[%c0_140, %c0_141] : memref<8x128xf32, #tpu.memory_space<vmem>>, vector<8x128xf32>
      %c0_142 = arith.constant 0 : index
      %c0_143 = arith.constant 0 : index
      %406 = vector.load %arg16[%c0_142, %c0_143] : memref<8x128xf32, #tpu.memory_space<vmem>>, vector<8x128xf32>
      tpu.vector_store %arg16[%c0_142, %c0_143], %405 {strides = array<i32>} : memref<8x128xf32, #tpu.memory_space<vmem>>, vector<8x128xf32>,
    } else {
    }
    %c0 = arith.constant 0 : index
    %c0_1 = arith.constant 0 : index
    %3 = vector.load %arg4[%c0, %c0_1] : memref<384x384xf32, #tpu.memory_space<vmem>>, vector<384x384xf32>
    %c0_2 = arith.constant 0 : index
    %c0_3 = arith.constant 0 : index
    %4 = vector.load %arg5[%c0_2, %c0_3] : memref<128x128xf32, #tpu.memory_space<vmem>>, vector<128x128xf32>
    %c0_4 = arith.constant 0 : index
    %c0_5 = arith.constant 0 : index
    %5 = vector.load %arg6[%c0_4, %c0_5] : memref<1x128xf32, #tpu.memory_space<vmem>>, vector<1x128xf32>
    %c0_6 = arith.constant 0 : index
    %c0_7 = arith.constant 0 : index
    %6 = vector.load %arg7[%c0_6, %c0_7] : memref<1x128xf32, #tpu.memory_space<vmem>>, vector<1x128xf32>
    %c0_8 = arith.constant 0 : index
    %c0_9 = arith.constant 0 : index
    %7 = vector.load %arg13[%c0_8, %c0_9] : memref<8x128xf32, #tpu.memory_space<vmem>>, vector<8x128xf32>
    %c0_10 = arith.constant 0 : index
    %c0_11 = arith.constant 0 : index
    %8 = vector.load %arg14[%c0_10, %c0_11] : memref<8x128xf32, #tpu.memory_space<vmem>>, vector<8x128xf32>
    %c0_12 = arith.constant 0 : index
    %c0_13 = arith.constant 0 : index
    %9 = vector.load %arg15[%c0_12, %c0_13] : memref<8x128xf32, #tpu.memory_space<vmem>>, vector<8x128xf32>
    %c0_14 = arith.constant 0 : index
    %c0_15 = arith.constant 0 : index
    %10 = vector.load %arg16[%c0_14, %c0_15] : memref<8x128xf32, #tpu.memory_space<vmem>>, vector<8x128xf32>
    %c0_i32_16 = arith.constant 0 : i32
    %11 = tpu.concatenate %8, %7, %9 in 1 : vector<8x128xf32>, vector<8x128xf32>, vector<8x128xf32> -> vector<8x384xf32>
    %cst = arith.constant dense<0.000000e+00> : vector<8x384xf32>
    %12 = tpu.matmul %11, %3, %cst {dimension_numbers = #tpu.dot_dimension_numbers<[1], [0], [0], [1], [0, 0, 1, 1], [], []>} : vector<8x384xf32>, vector<384x384xf32>, vector<8x384xf32> -> vector<8x384xf32>
    %13 = arith.index_cast %c0_i32_16 : i32 to index
    %c0_17 = arith.constant 0 : index
    %c0_18 = arith.constant 0 : index
    %14 = vector.load %arg2[%13, %c0_17, %c0_18] : memref<8x8x128xf32, #tpu.memory_space<vmem>>, vector<1x8x128xf32>
    %15 = vector.shape_cast %14 : vector<1x8x128xf32> to vector<8x128xf32>
    %16 = vector.extract_strided_slice %12 {offsets = [0, 0], sizes = [8, 128], strides = [1, 1]} : vector<8x384xf32> to vector<8x128xf32>
    %17 = arith.addf %15, %16 : vector<8x128xf32>
    %18 = arith.index_cast %c0_i32_16 : i32 to index
    %c0_19 = arith.constant 0 : index
    %c0_20 = arith.constant 0 : index
    %19 = vector.load %arg3[%18, %c0_19, %c0_20] : memref<8x8x256xf32, #tpu.memory_space<vmem>>, vector<1x8x256xf32>
    %20 = vector.shape_cast %19 : vector<1x8x256xf32> to vector<8x256xf32>
    %21 = vector.extract_strided_slice %12 {offsets = [0, 128], sizes = [8, 256], strides = [1, 1]} : vector<8x384xf32> to vector<8x256xf32>
    %22 = arith.addf %20, %21 : vector<8x256xf32>
    %23 = arith.negf %22 : vector<8x256xf32>
    %24 = math.exp %23 : vector<8x256xf32>
    %cst_21 = arith.constant 1.000000e+00 : f32
    %25 = vector.broadcast %cst_21 : f32 to vector<8x256xf32>
    %26 = arith.addf %25, %24 : vector<8x256xf32>
    %27 = arith.divf %25, %26 : vector<8x256xf32>
    %28 = vector.extract_strided_slice %27 {offsets = [0, 0], sizes = [8, 128], strides = [1, 1]} : vector<8x256xf32> to vector<8x128xf32>
    %29 = vector.extract_strided_slice %27 {offsets = [0, 128], sizes = [8, 128], strides = [1, 1]} : vector<8x256xf32> to vector<8x128xf32>
    %30 = arith.subf %17, %7 : vector<8x128xf32>
    %31 = arith.mulf %30, %28 : vector<8x128xf32>
    %32 = arith.addf %7, %31 : vector<8x128xf32>
    %33 = arith.subf %8, %9 : vector<8x128xf32>
    %34 = arith.mulf %33, %29 : vector<8x128xf32>
    %35 = arith.addf %9, %34 : vector<8x128xf32>
    %cst_22 = arith.constant 1.800000e+00 : f32
    %36 = vector.broadcast %cst_22 : f32 to vector<8x128xf32>
    %37 = arith.mulf %36, %35 : vector<8x128xf32>
    %cst_23 = arith.constant 1.000000e-01 : f32
    %38 = vector.broadcast %cst_23 : f32 to vector<8x128xf32>
    %39 = arith.addf %38, %37 : vector<8x128xf32>
    %40 = arith.subf %32, %39 : vector<8x128xf32>
    %cst_24 = arith.constant 0.000000e+00 : f32
    %41 = vector.broadcast %cst_24 : f32 to vector<8x128xf32>
    %42 = arith.cmpf ogt, %40, %41 : vector<8x128xf32>
    %43 = arith.extui %42 : vector<8x128xi1> to vector<8x128xi32>
    %44 = arith.sitofp %43 : vector<8x128xi32> to vector<8x128xf32>
    %cst_25 = arith.constant 1.000000e+00 : f32
    %45 = vector.broadcast %cst_25 : f32 to vector<8x128xf32>
    %46 = arith.subf %45, %44 : vector<8x128xf32>
    %47 = arith.mulf %46, %32 : vector<8x128xf32>
    %cst_26 = arith.constant dense<0.000000e+00> : vector<8x128xf32>
    %48 = tpu.matmul %44, %4, %cst_26 {dimension_numbers = #tpu.dot_dimension_numbers<[1], [0], [0], [1], [0, 0, 1, 1], [], []>} : vector<8x128xf32>, vector<128x128xf32>, vector<8x128xf32> -> vector<8x128xf32>
    %49 = vector.broadcast %5 : vector<1x128xf32> to vector<8x128xf32>
    %50 = arith.addf %48, %49 : vector<8x128xf32>
    %51 = arith.subf %50, %10 : vector<8x128xf32>
    %52 = vector.broadcast %6 : vector<1x128xf32> to vector<8x128xf32>
    %53 = arith.mulf %51, %52 : vector<8x128xf32>
    %54 = arith.addf %10, %53 : vector<8x128xf32>
    %55 = arith.index_cast %c0_i32_16 : i32 to index
    %c0_27 = arith.constant 0 : index
    %c0_28 = arith.constant 0 : index
    %56 = vector.load %arg12[%55, %c0_27, %c0_28] : memref<8x8x128xf32, #tpu.memory_space<vmem>>, vector<1x8x128xf32>
    %57 = vector.shape_cast %56 : vector<1x8x128xf32> to vector<8x128xf32>
    %58 = vector.shape_cast %54 : vector<8x128xf32> to vector<1x8x128xf32>
    tpu.vector_store %arg12[%55, %c0_27, %c0_28], %58 {strides = array<i32>} : memref<8x8x128xf32, #tpu.memory_space<vmem>>, vector<1x8x128xf32>,
    %c1_i32 = arith.constant 1 : i32
    %59 = tpu.concatenate %44, %47, %35 in 1 : vector<8x128xf32>, vector<8x128xf32>, vector<8x128xf32> -> vector<8x384xf32>
    %cst_29 = arith.constant dense<0.000000e+00> : vector<8x384xf32>
    %60 = tpu.matmul %59, %3, %cst_29 {dimension_numbers = #tpu.dot_dimension_numbers<[1], [0], [0], [1], [0, 0, 1, 1], [], []>} : vector<8x384xf32>, vector<384x384xf32>, vector<8x384xf32> -> vector<8x384xf32>
    %61 = arith.index_cast %c1_i32 : i32 to index
    %c0_30 = arith.constant 0 : index
    %c0_31 = arith.constant 0 : index
    %62 = vector.load %arg2[%61, %c0_30, %c0_31] : memref<8x8x128xf32, #tpu.memory_space<vmem>>, vector<1x8x128xf32>
    %63 = vector.shape_cast %62 : vector<1x8x128xf32> to vector<8x128xf32>
    %64 = vector.extract_strided_slice %60 {offsets = [0, 0], sizes = [8, 128], strides = [1, 1]} : vector<8x384xf32> to vector<8x128xf32>
    %65 = arith.addf %63, %64 : vector<8x128xf32>
    %66 = arith.index_cast %c1_i32 : i32 to index
    %c0_32 = arith.constant 0 : index
    %c0_33 = arith.constant 0 : index
    %67 = vector.load %arg3[%66, %c0_32, %c0_33] : memref<8x8x256xf32, #tpu.memory_space<vmem>>, vector<1x8x256xf32>
    %68 = vector.shape_cast %67 : vector<1x8x256xf32> to vector<8x256xf32>
    %69 = vector.extract_strided_slice %60 {offsets = [0, 128], sizes = [8, 256], strides = [1, 1]} : vector<8x384xf32> to vector<8x256xf32>
    %70 = arith.addf %68, %69 : vector<8x256xf32>
    %71 = arith.negf %70 : vector<8x256xf32>
    %72 = math.exp %71 : vector<8x256xf32>
    %cst_34 = arith.constant 1.000000e+00 : f32
    %73 = vector.broadcast %cst_34 : f32 to vector<8x256xf32>
    %74 = arith.addf %73, %72 : vector<8x256xf32>
    %75 = arith.divf %73, %74 : vector<8x256xf32>
    %76 = vector.extract_strided_slice %75 {offsets = [0, 0], sizes = [8, 128], strides = [1, 1]} : vector<8x256xf32> to vector<8x128xf32>
    %77 = vector.extract_strided_slice %75 {offsets = [0, 128], sizes = [8, 128], strides = [1, 1]} : vector<8x256xf32> to vector<8x128xf32>
    %78 = arith.subf %65, %47 : vector<8x128xf32>
    %79 = arith.mulf %78, %76 : vector<8x128xf32>
    %80 = arith.addf %47, %79 : vector<8x128xf32>
    %81 = arith.subf %44, %35 : vector<8x128xf32>
    %82 = arith.mulf %81, %77 : vector<8x128xf32>
    %83 = arith.addf %35, %82 : vector<8x128xf32>
    %cst_35 = arith.constant 1.800000e+00 : f32
    %84 = vector.broadcast %cst_35 : f32 to vector<8x128xf32>
    %85 = arith.mulf %84, %83 : vector<8x128xf32>
    %cst_36 = arith.constant 1.000000e-01 : f32
    %86 = vector.broadcast %cst_36 : f32 to vector<8x128xf32>
    %87 = arith.addf %86, %85 : vector<8x128xf32>
    %88 = arith.subf %80, %87 : vector<8x128xf32>
    %cst_37 = arith.constant 0.000000e+00 : f32
    %89 = vector.broadcast %cst_37 : f32 to vector<8x128xf32>
    %90 = arith.cmpf ogt, %88, %89 : vector<8x128xf32>
    %91 = arith.extui %90 : vector<8x128xi1> to vector<8x128xi32>
    %92 = arith.sitofp %91 : vector<8x128xi32> to vector<8x128xf32>
    %cst_38 = arith.constant 1.000000e+00 : f32
    %93 = vector.broadcast %cst_38 : f32 to vector<8x128xf32>
    %94 = arith.subf %93, %92 : vector<8x128xf32>
    %95 = arith.mulf %94, %80 : vector<8x128xf32>
    %cst_39 = arith.constant dense<0.000000e+00> : vector<8x128xf32>
    %96 = tpu.matmul %92, %4, %cst_39 {dimension_numbers = #tpu.dot_dimension_numbers<[1], [0], [0], [1], [0, 0, 1, 1], [], []>} : vector<8x128xf32>, vector<128x128xf32>, vector<8x128xf32> -> vector<8x128xf32>
    %97 = vector.broadcast %5 : vector<1x128xf32> to vector<8x128xf32>
    %98 = arith.addf %96, %97 : vector<8x128xf32>
    %99 = arith.subf %98, %54 : vector<8x128xf32>
    %100 = vector.broadcast %6 : vector<1x128xf32> to vector<8x128xf32>
    %101 = arith.mulf %99, %100 : vector<8x128xf32>
    %102 = arith.addf %54, %101 : vector<8x128xf32>
    %103 = arith.index_cast %c1_i32 : i32 to index
    %c0_40 = arith.constant 0 : index
    %c0_41 = arith.constant 0 : index
    %104 = vector.load %arg12[%103, %c0_40, %c0_41] : memref<8x8x128xf32, #tpu.memory_space<vmem>>, vector<1x8x128xf32>
    %105 = vector.shape_cast %104 : vector<1x8x128xf32> to vector<8x128xf32>
    %106 = vector.shape_cast %102 : vector<8x128xf32> to vector<1x8x128xf32>
    tpu.vector_store %arg12[%103, %c0_40, %c0_41], %106 {strides = array<i32>} : memref<8x8x128xf32, #tpu.memory_space<vmem>>, vector<1x8x128xf32>,
    %c2_i32 = arith.constant 2 : i32
    %107 = tpu.concatenate %92, %95, %83 in 1 : vector<8x128xf32>, vector<8x128xf32>, vector<8x128xf32> -> vector<8x384xf32>
    %cst_42 = arith.constant dense<0.000000e+00> : vector<8x384xf32>
    %108 = tpu.matmul %107, %3, %cst_42 {dimension_numbers = #tpu.dot_dimension_numbers<[1], [0], [0], [1], [0, 0, 1, 1], [], []>} : vector<8x384xf32>, vector<384x384xf32>, vector<8x384xf32> -> vector<8x384xf32>
    %109 = arith.index_cast %c2_i32 : i32 to index
    %c0_43 = arith.constant 0 : index
    %c0_44 = arith.constant 0 : index
    %110 = vector.load %arg2[%109, %c0_43, %c0_44] : memref<8x8x128xf32, #tpu.memory_space<vmem>>, vector<1x8x128xf32>
    %111 = vector.shape_cast %110 : vector<1x8x128xf32> to vector<8x128xf32>
    %112 = vector.extract_strided_slice %108 {offsets = [0, 0], sizes = [8, 128], strides = [1, 1]} : vector<8x384xf32> to vector<8x128xf32>
    %113 = arith.addf %111, %112 : vector<8x128xf32>
    %114 = arith.index_cast %c2_i32 : i32 to index
    %c0_45 = arith.constant 0 : index
    %c0_46 = arith.constant 0 : index
    %115 = vector.load %arg3[%114, %c0_45, %c0_46] : memref<8x8x256xf32, #tpu.memory_space<vmem>>, vector<1x8x256xf32>
    %116 = vector.shape_cast %115 : vector<1x8x256xf32> to vector<8x256xf32>
    %117 = vector.extract_strided_slice %108 {offsets = [0, 128], sizes = [8, 256], strides = [1, 1]} : vector<8x384xf32> to vector<8x256xf32>
    %118 = arith.addf %116, %117 : vector<8x256xf32>
    %119 = arith.negf %118 : vector<8x256xf32>
    %120 = math.exp %119 : vector<8x256xf32>
    %cst_47 = arith.constant 1.000000e+00 : f32
    %121 = vector.broadcast %cst_47 : f32 to vector<8x256xf32>
    %122 = arith.addf %121, %120 : vector<8x256xf32>
    %123 = arith.divf %121, %122 : vector<8x256xf32>
    %124 = vector.extract_strided_slice %123 {offsets = [0, 0], sizes = [8, 128], strides = [1, 1]} : vector<8x256xf32> to vector<8x128xf32>
    %125 = vector.extract_strided_slice %123 {offsets = [0, 128], sizes = [8, 128], strides = [1, 1]} : vector<8x256xf32> to vector<8x128xf32>
    %126 = arith.subf %113, %95 : vector<8x128xf32>
    %127 = arith.mulf %126, %124 : vector<8x128xf32>
    %128 = arith.addf %95, %127 : vector<8x128xf32>
    %129 = arith.subf %92, %83 : vector<8x128xf32>
    %130 = arith.mulf %129, %125 : vector<8x128xf32>
    %131 = arith.addf %83, %130 : vector<8x128xf32>
    %cst_48 = arith.constant 1.800000e+00 : f32
    %132 = vector.broadcast %cst_48 : f32 to vector<8x128xf32>
    %133 = arith.mulf %132, %131 : vector<8x128xf32>
    %cst_49 = arith.constant 1.000000e-01 : f32
    %134 = vector.broadcast %cst_49 : f32 to vector<8x128xf32>
    %135 = arith.addf %134, %133 : vector<8x128xf32>
    %136 = arith.subf %128, %135 : vector<8x128xf32>
    %cst_50 = arith.constant 0.000000e+00 : f32
    %137 = vector.broadcast %cst_50 : f32 to vector<8x128xf32>
    %138 = arith.cmpf ogt, %136, %137 : vector<8x128xf32>
    %139 = arith.extui %138 : vector<8x128xi1> to vector<8x128xi32>
    %140 = arith.sitofp %139 : vector<8x128xi32> to vector<8x128xf32>
    %cst_51 = arith.constant 1.000000e+00 : f32
    %141 = vector.broadcast %cst_51 : f32 to vector<8x128xf32>
    %142 = arith.subf %141, %140 : vector<8x128xf32>
    %143 = arith.mulf %142, %128 : vector<8x128xf32>
    %cst_52 = arith.constant dense<0.000000e+00> : vector<8x128xf32>
    %144 = tpu.matmul %140, %4, %cst_52 {dimension_numbers = #tpu.dot_dimension_numbers<[1], [0], [0], [1], [0, 0, 1, 1], [], []>} : vector<8x128xf32>, vector<128x128xf32>, vector<8x128xf32> -> vector<8x128xf32>
    %145 = vector.broadcast %5 : vector<1x128xf32> to vector<8x128xf32>
    %146 = arith.addf %144, %145 : vector<8x128xf32>
    %147 = arith.subf %146, %102 : vector<8x128xf32>
    %148 = vector.broadcast %6 : vector<1x128xf32> to vector<8x128xf32>
    %149 = arith.mulf %147, %148 : vector<8x128xf32>
    %150 = arith.addf %102, %149 : vector<8x128xf32>
    %151 = arith.index_cast %c2_i32 : i32 to index
    %c0_53 = arith.constant 0 : index
    %c0_54 = arith.constant 0 : index
    %152 = vector.load %arg12[%151, %c0_53, %c0_54] : memref<8x8x128xf32, #tpu.memory_space<vmem>>, vector<1x8x128xf32>
    %153 = vector.shape_cast %152 : vector<1x8x128xf32> to vector<8x128xf32>
    %154 = vector.shape_cast %150 : vector<8x128xf32> to vector<1x8x128xf32>
    tpu.vector_store %arg12[%151, %c0_53, %c0_54], %154 {strides = array<i32>} : memref<8x8x128xf32, #tpu.memory_space<vmem>>, vector<1x8x128xf32>,
    %c3_i32 = arith.constant 3 : i32
    %155 = tpu.concatenate %140, %143, %131 in 1 : vector<8x128xf32>, vector<8x128xf32>, vector<8x128xf32> -> vector<8x384xf32>
    %cst_55 = arith.constant dense<0.000000e+00> : vector<8x384xf32>
    %156 = tpu.matmul %155, %3, %cst_55 {dimension_numbers = #tpu.dot_dimension_numbers<[1], [0], [0], [1], [0, 0, 1, 1], [], []>} : vector<8x384xf32>, vector<384x384xf32>, vector<8x384xf32> -> vector<8x384xf32>
    %157 = arith.index_cast %c3_i32 : i32 to index
    %c0_56 = arith.constant 0 : index
    %c0_57 = arith.constant 0 : index
    %158 = vector.load %arg2[%157, %c0_56, %c0_57] : memref<8x8x128xf32, #tpu.memory_space<vmem>>, vector<1x8x128xf32>
    %159 = vector.shape_cast %158 : vector<1x8x128xf32> to vector<8x128xf32>
    %160 = vector.extract_strided_slice %156 {offsets = [0, 0], sizes = [8, 128], strides = [1, 1]} : vector<8x384xf32> to vector<8x128xf32>
    %161 = arith.addf %159, %160 : vector<8x128xf32>
    %162 = arith.index_cast %c3_i32 : i32 to index
    %c0_58 = arith.constant 0 : index
    %c0_59 = arith.constant 0 : index
    %163 = vector.load %arg3[%162, %c0_58, %c0_59] : memref<8x8x256xf32, #tpu.memory_space<vmem>>, vector<1x8x256xf32>
    %164 = vector.shape_cast %163 : vector<1x8x256xf32> to vector<8x256xf32>
    %165 = vector.extract_strided_slice %156 {offsets = [0, 128], sizes = [8, 256], strides = [1, 1]} : vector<8x384xf32> to vector<8x256xf32>
    %166 = arith.addf %164, %165 : vector<8x256xf32>
    %167 = arith.negf %166 : vector<8x256xf32>
    %168 = math.exp %167 : vector<8x256xf32>
    %cst_60 = arith.constant 1.000000e+00 : f32
    %169 = vector.broadcast %cst_60 : f32 to vector<8x256xf32>
    %170 = arith.addf %169, %168 : vector<8x256xf32>
    %171 = arith.divf %169, %170 : vector<8x256xf32>
    %172 = vector.extract_strided_slice %171 {offsets = [0, 0], sizes = [8, 128], strides = [1, 1]} : vector<8x256xf32> to vector<8x128xf32>
    %173 = vector.extract_strided_slice %171 {offsets = [0, 128], sizes = [8, 128], strides = [1, 1]} : vector<8x256xf32> to vector<8x128xf32>
    %174 = arith.subf %161, %143 : vector<8x128xf32>
    %175 = arith.mulf %174, %172 : vector<8x128xf32>
    %176 = arith.addf %143, %175 : vector<8x128xf32>
    %177 = arith.subf %140, %131 : vector<8x128xf32>
    %178 = arith.mulf %177, %173 : vector<8x128xf32>
    %179 = arith.addf %131, %178 : vector<8x128xf32>
    %cst_61 = arith.constant 1.800000e+00 : f32
    %180 = vector.broadcast %cst_61 : f32 to vector<8x128xf32>
    %181 = arith.mulf %180, %179 : vector<8x128xf32>
    %cst_62 = arith.constant 1.000000e-01 : f32
    %182 = vector.broadcast %cst_62 : f32 to vector<8x128xf32>
    %183 = arith.addf %182, %181 : vector<8x128xf32>
    %184 = arith.subf %176, %183 : vector<8x128xf32>
    %cst_63 = arith.constant 0.000000e+00 : f32
    %185 = vector.broadcast %cst_63 : f32 to vector<8x128xf32>
    %186 = arith.cmpf ogt, %184, %185 : vector<8x128xf32>
    %187 = arith.extui %186 : vector<8x128xi1> to vector<8x128xi32>
    %188 = arith.sitofp %187 : vector<8x128xi32> to vector<8x128xf32>
    %cst_64 = arith.constant 1.000000e+00 : f32
    %189 = vector.broadcast %cst_64 : f32 to vector<8x128xf32>
    %190 = arith.subf %189, %188 : vector<8x128xf32>
    %191 = arith.mulf %190, %176 : vector<8x128xf32>
    %cst_65 = arith.constant dense<0.000000e+00> : vector<8x128xf32>
    %192 = tpu.matmul %188, %4, %cst_65 {dimension_numbers = #tpu.dot_dimension_numbers<[1], [0], [0], [1], [0, 0, 1, 1], [], []>} : vector<8x128xf32>, vector<128x128xf32>, vector<8x128xf32> -> vector<8x128xf32>
    %193 = vector.broadcast %5 : vector<1x128xf32> to vector<8x128xf32>
    %194 = arith.addf %192, %193 : vector<8x128xf32>
    %195 = arith.subf %194, %150 : vector<8x128xf32>
    %196 = vector.broadcast %6 : vector<1x128xf32> to vector<8x128xf32>
    %197 = arith.mulf %195, %196 : vector<8x128xf32>
    %198 = arith.addf %150, %197 : vector<8x128xf32>
    %199 = arith.index_cast %c3_i32 : i32 to index
    %c0_66 = arith.constant 0 : index
    %c0_67 = arith.constant 0 : index
    %200 = vector.load %arg12[%199, %c0_66, %c0_67] : memref<8x8x128xf32, #tpu.memory_space<vmem>>, vector<1x8x128xf32>
    %201 = vector.shape_cast %200 : vector<1x8x128xf32> to vector<8x128xf32>
    %202 = vector.shape_cast %198 : vector<8x128xf32> to vector<1x8x128xf32>
    tpu.vector_store %arg12[%199, %c0_66, %c0_67], %202 {strides = array<i32>} : memref<8x8x128xf32, #tpu.memory_space<vmem>>, vector<1x8x128xf32>,
    %c4_i32 = arith.constant 4 : i32
    %203 = tpu.concatenate %188, %191, %179 in 1 : vector<8x128xf32>, vector<8x128xf32>, vector<8x128xf32> -> vector<8x384xf32>
    %cst_68 = arith.constant dense<0.000000e+00> : vector<8x384xf32>
    %204 = tpu.matmul %203, %3, %cst_68 {dimension_numbers = #tpu.dot_dimension_numbers<[1], [0], [0], [1], [0, 0, 1, 1], [], []>} : vector<8x384xf32>, vector<384x384xf32>, vector<8x384xf32> -> vector<8x384xf32>
    %205 = arith.index_cast %c4_i32 : i32 to index
    %c0_69 = arith.constant 0 : index
    %c0_70 = arith.constant 0 : index
    %206 = vector.load %arg2[%205, %c0_69, %c0_70] : memref<8x8x128xf32, #tpu.memory_space<vmem>>, vector<1x8x128xf32>
    %207 = vector.shape_cast %206 : vector<1x8x128xf32> to vector<8x128xf32>
    %208 = vector.extract_strided_slice %204 {offsets = [0, 0], sizes = [8, 128], strides = [1, 1]} : vector<8x384xf32> to vector<8x128xf32>
    %209 = arith.addf %207, %208 : vector<8x128xf32>
    %210 = arith.index_cast %c4_i32 : i32 to index
    %c0_71 = arith.constant 0 : index
    %c0_72 = arith.constant 0 : index
    %211 = vector.load %arg3[%210, %c0_71, %c0_72] : memref<8x8x256xf32, #tpu.memory_space<vmem>>, vector<1x8x256xf32>
    %212 = vector.shape_cast %211 : vector<1x8x256xf32> to vector<8x256xf32>
    %213 = vector.extract_strided_slice %204 {offsets = [0, 128], sizes = [8, 256], strides = [1, 1]} : vector<8x384xf32> to vector<8x256xf32>
    %214 = arith.addf %212, %213 : vector<8x256xf32>
    %215 = arith.negf %214 : vector<8x256xf32>
    %216 = math.exp %215 : vector<8x256xf32>
    %cst_73 = arith.constant 1.000000e+00 : f32
    %217 = vector.broadcast %cst_73 : f32 to vector<8x256xf32>
    %218 = arith.addf %217, %216 : vector<8x256xf32>
    %219 = arith.divf %217, %218 : vector<8x256xf32>
    %220 = vector.extract_strided_slice %219 {offsets = [0, 0], sizes = [8, 128], strides = [1, 1]} : vector<8x256xf32> to vector<8x128xf32>
    %221 = vector.extract_strided_slice %219 {offsets = [0, 128], sizes = [8, 128], strides = [1, 1]} : vector<8x256xf32> to vector<8x128xf32>
    %222 = arith.subf %209, %191 : vector<8x128xf32>
    %223 = arith.mulf %222, %220 : vector<8x128xf32>
    %224 = arith.addf %191, %223 : vector<8x128xf32>
    %225 = arith.subf %188, %179 : vector<8x128xf32>
    %226 = arith.mulf %225, %221 : vector<8x128xf32>
    %227 = arith.addf %179, %226 : vector<8x128xf32>
    %cst_74 = arith.constant 1.800000e+00 : f32
    %228 = vector.broadcast %cst_74 : f32 to vector<8x128xf32>
    %229 = arith.mulf %228, %227 : vector<8x128xf32>
    %cst_75 = arith.constant 1.000000e-01 : f32
    %230 = vector.broadcast %cst_75 : f32 to vector<8x128xf32>
    %231 = arith.addf %230, %229 : vector<8x128xf32>
    %232 = arith.subf %224, %231 : vector<8x128xf32>
    %cst_76 = arith.constant 0.000000e+00 : f32
    %233 = vector.broadcast %cst_76 : f32 to vector<8x128xf32>
    %234 = arith.cmpf ogt, %232, %233 : vector<8x128xf32>
    %235 = arith.extui %234 : vector<8x128xi1> to vector<8x128xi32>
    %236 = arith.sitofp %235 : vector<8x128xi32> to vector<8x128xf32>
    %cst_77 = arith.constant 1.000000e+00 : f32
    %237 = vector.broadcast %cst_77 : f32 to vector<8x128xf32>
    %238 = arith.subf %237, %236 : vector<8x128xf32>
    %239 = arith.mulf %238, %224 : vector<8x128xf32>
    %cst_78 = arith.constant dense<0.000000e+00> : vector<8x128xf32>
    %240 = tpu.matmul %236, %4, %cst_78 {dimension_numbers = #tpu.dot_dimension_numbers<[1], [0], [0], [1], [0, 0, 1, 1], [], []>} : vector<8x128xf32>, vector<128x128xf32>, vector<8x128xf32> -> vector<8x128xf32>
    %241 = vector.broadcast %5 : vector<1x128xf32> to vector<8x128xf32>
    %242 = arith.addf %240, %241 : vector<8x128xf32>
    %243 = arith.subf %242, %198 : vector<8x128xf32>
    %244 = vector.broadcast %6 : vector<1x128xf32> to vector<8x128xf32>
    %245 = arith.mulf %243, %244 : vector<8x128xf32>
    %246 = arith.addf %198, %245 : vector<8x128xf32>
    %247 = arith.index_cast %c4_i32 : i32 to index
    %c0_79 = arith.constant 0 : index
    %c0_80 = arith.constant 0 : index
    %248 = vector.load %arg12[%247, %c0_79, %c0_80] : memref<8x8x128xf32, #tpu.memory_space<vmem>>, vector<1x8x128xf32>
    %249 = vector.shape_cast %248 : vector<1x8x128xf32> to vector<8x128xf32>
    %250 = vector.shape_cast %246 : vector<8x128xf32> to vector<1x8x128xf32>
    tpu.vector_store %arg12[%247, %c0_79, %c0_80], %250 {strides = array<i32>} : memref<8x8x128xf32, #tpu.memory_space<vmem>>, vector<1x8x128xf32>,
    %c5_i32 = arith.constant 5 : i32
    %251 = tpu.concatenate %236, %239, %227 in 1 : vector<8x128xf32>, vector<8x128xf32>, vector<8x128xf32> -> vector<8x384xf32>
    %cst_81 = arith.constant dense<0.000000e+00> : vector<8x384xf32>
    %252 = tpu.matmul %251, %3, %cst_81 {dimension_numbers = #tpu.dot_dimension_numbers<[1], [0], [0], [1], [0, 0, 1, 1], [], []>} : vector<8x384xf32>, vector<384x384xf32>, vector<8x384xf32> -> vector<8x384xf32>
    %253 = arith.index_cast %c5_i32 : i32 to index
    %c0_82 = arith.constant 0 : index
    %c0_83 = arith.constant 0 : index
    %254 = vector.load %arg2[%253, %c0_82, %c0_83] : memref<8x8x128xf32, #tpu.memory_space<vmem>>, vector<1x8x128xf32>
    %255 = vector.shape_cast %254 : vector<1x8x128xf32> to vector<8x128xf32>
    %256 = vector.extract_strided_slice %252 {offsets = [0, 0], sizes = [8, 128], strides = [1, 1]} : vector<8x384xf32> to vector<8x128xf32>
    %257 = arith.addf %255, %256 : vector<8x128xf32>
    %258 = arith.index_cast %c5_i32 : i32 to index
    %c0_84 = arith.constant 0 : index
    %c0_85 = arith.constant 0 : index
    %259 = vector.load %arg3[%258, %c0_84, %c0_85] : memref<8x8x256xf32, #tpu.memory_space<vmem>>, vector<1x8x256xf32>
    %260 = vector.shape_cast %259 : vector<1x8x256xf32> to vector<8x256xf32>
    %261 = vector.extract_strided_slice %252 {offsets = [0, 128], sizes = [8, 256], strides = [1, 1]} : vector<8x384xf32> to vector<8x256xf32>
    %262 = arith.addf %260, %261 : vector<8x256xf32>
    %263 = arith.negf %262 : vector<8x256xf32>
    %264 = math.exp %263 : vector<8x256xf32>
    %cst_86 = arith.constant 1.000000e+00 : f32
    %265 = vector.broadcast %cst_86 : f32 to vector<8x256xf32>
    %266 = arith.addf %265, %264 : vector<8x256xf32>
    %267 = arith.divf %265, %266 : vector<8x256xf32>
    %268 = vector.extract_strided_slice %267 {offsets = [0, 0], sizes = [8, 128], strides = [1, 1]} : vector<8x256xf32> to vector<8x128xf32>
    %269 = vector.extract_strided_slice %267 {offsets = [0, 128], sizes = [8, 128], strides = [1, 1]} : vector<8x256xf32> to vector<8x128xf32>
    %270 = arith.subf %257, %239 : vector<8x128xf32>
    %271 = arith.mulf %270, %268 : vector<8x128xf32>
    %272 = arith.addf %239, %271 : vector<8x128xf32>
    %273 = arith.subf %236, %227 : vector<8x128xf32>
    %274 = arith.mulf %273, %269 : vector<8x128xf32>
    %275 = arith.addf %227, %274 : vector<8x128xf32>
    %cst_87 = arith.constant 1.800000e+00 : f32
    %276 = vector.broadcast %cst_87 : f32 to vector<8x128xf32>
    %277 = arith.mulf %276, %275 : vector<8x128xf32>
    %cst_88 = arith.constant 1.000000e-01 : f32
    %278 = vector.broadcast %cst_88 : f32 to vector<8x128xf32>
    %279 = arith.addf %278, %277 : vector<8x128xf32>
    %280 = arith.subf %272, %279 : vector<8x128xf32>
    %cst_89 = arith.constant 0.000000e+00 : f32
    %281 = vector.broadcast %cst_89 : f32 to vector<8x128xf32>
    %282 = arith.cmpf ogt, %280, %281 : vector<8x128xf32>
    %283 = arith.extui %282 : vector<8x128xi1> to vector<8x128xi32>
    %284 = arith.sitofp %283 : vector<8x128xi32> to vector<8x128xf32>
    %cst_90 = arith.constant 1.000000e+00 : f32
    %285 = vector.broadcast %cst_90 : f32 to vector<8x128xf32>
    %286 = arith.subf %285, %284 : vector<8x128xf32>
    %287 = arith.mulf %286, %272 : vector<8x128xf32>
    %cst_91 = arith.constant dense<0.000000e+00> : vector<8x128xf32>
    %288 = tpu.matmul %284, %4, %cst_91 {dimension_numbers = #tpu.dot_dimension_numbers<[1], [0], [0], [1], [0, 0, 1, 1], [], []>} : vector<8x128xf32>, vector<128x128xf32>, vector<8x128xf32> -> vector<8x128xf32>
    %289 = vector.broadcast %5 : vector<1x128xf32> to vector<8x128xf32>
    %290 = arith.addf %288, %289 : vector<8x128xf32>
    %291 = arith.subf %290, %246 : vector<8x128xf32>
    %292 = vector.broadcast %6 : vector<1x128xf32> to vector<8x128xf32>
    %293 = arith.mulf %291, %292 : vector<8x128xf32>
    %294 = arith.addf %246, %293 : vector<8x128xf32>
    %295 = arith.index_cast %c5_i32 : i32 to index
    %c0_92 = arith.constant 0 : index
    %c0_93 = arith.constant 0 : index
    %296 = vector.load %arg12[%295, %c0_92, %c0_93] : memref<8x8x128xf32, #tpu.memory_space<vmem>>, vector<1x8x128xf32>
    %297 = vector.shape_cast %296 : vector<1x8x128xf32> to vector<8x128xf32>
    %298 = vector.shape_cast %294 : vector<8x128xf32> to vector<1x8x128xf32>
    tpu.vector_store %arg12[%295, %c0_92, %c0_93], %298 {strides = array<i32>} : memref<8x8x128xf32, #tpu.memory_space<vmem>>, vector<1x8x128xf32>,
    %c6_i32 = arith.constant 6 : i32
    %299 = tpu.concatenate %284, %287, %275 in 1 : vector<8x128xf32>, vector<8x128xf32>, vector<8x128xf32> -> vector<8x384xf32>
    %cst_94 = arith.constant dense<0.000000e+00> : vector<8x384xf32>
    %300 = tpu.matmul %299, %3, %cst_94 {dimension_numbers = #tpu.dot_dimension_numbers<[1], [0], [0], [1], [0, 0, 1, 1], [], []>} : vector<8x384xf32>, vector<384x384xf32>, vector<8x384xf32> -> vector<8x384xf32>
    %301 = arith.index_cast %c6_i32 : i32 to index
    %c0_95 = arith.constant 0 : index
    %c0_96 = arith.constant 0 : index
    %302 = vector.load %arg2[%301, %c0_95, %c0_96] : memref<8x8x128xf32, #tpu.memory_space<vmem>>, vector<1x8x128xf32>
    %303 = vector.shape_cast %302 : vector<1x8x128xf32> to vector<8x128xf32>
    %304 = vector.extract_strided_slice %300 {offsets = [0, 0], sizes = [8, 128], strides = [1, 1]} : vector<8x384xf32> to vector<8x128xf32>
    %305 = arith.addf %303, %304 : vector<8x128xf32>
    %306 = arith.index_cast %c6_i32 : i32 to index
    %c0_97 = arith.constant 0 : index
    %c0_98 = arith.constant 0 : index
    %307 = vector.load %arg3[%306, %c0_97, %c0_98] : memref<8x8x256xf32, #tpu.memory_space<vmem>>, vector<1x8x256xf32>
    %308 = vector.shape_cast %307 : vector<1x8x256xf32> to vector<8x256xf32>
    %309 = vector.extract_strided_slice %300 {offsets = [0, 128], sizes = [8, 256], strides = [1, 1]} : vector<8x384xf32> to vector<8x256xf32>
    %310 = arith.addf %308, %309 : vector<8x256xf32>
    %311 = arith.negf %310 : vector<8x256xf32>
    %312 = math.exp %311 : vector<8x256xf32>
    %cst_99 = arith.constant 1.000000e+00 : f32
    %313 = vector.broadcast %cst_99 : f32 to vector<8x256xf32>
    %314 = arith.addf %313, %312 : vector<8x256xf32>
    %315 = arith.divf %313, %314 : vector<8x256xf32>
    %316 = vector.extract_strided_slice %315 {offsets = [0, 0], sizes = [8, 128], strides = [1, 1]} : vector<8x256xf32> to vector<8x128xf32>
    %317 = vector.extract_strided_slice %315 {offsets = [0, 128], sizes = [8, 128], strides = [1, 1]} : vector<8x256xf32> to vector<8x128xf32>
    %318 = arith.subf %305, %287 : vector<8x128xf32>
    %319 = arith.mulf %318, %316 : vector<8x128xf32>
    %320 = arith.addf %287, %319 : vector<8x128xf32>
    %321 = arith.subf %284, %275 : vector<8x128xf32>
    %322 = arith.mulf %321, %317 : vector<8x128xf32>
    %323 = arith.addf %275, %322 : vector<8x128xf32>
    %cst_100 = arith.constant 1.800000e+00 : f32
    %324 = vector.broadcast %cst_100 : f32 to vector<8x128xf32>
    %325 = arith.mulf %324, %323 : vector<8x128xf32>
    %cst_101 = arith.constant 1.000000e-01 : f32
    %326 = vector.broadcast %cst_101 : f32 to vector<8x128xf32>
    %327 = arith.addf %326, %325 : vector<8x128xf32>
    %328 = arith.subf %320, %327 : vector<8x128xf32>
    %cst_102 = arith.constant 0.000000e+00 : f32
    %329 = vector.broadcast %cst_102 : f32 to vector<8x128xf32>
    %330 = arith.cmpf ogt, %328, %329 : vector<8x128xf32>
    %331 = arith.extui %330 : vector<8x128xi1> to vector<8x128xi32>
    %332 = arith.sitofp %331 : vector<8x128xi32> to vector<8x128xf32>
    %cst_103 = arith.constant 1.000000e+00 : f32
    %333 = vector.broadcast %cst_103 : f32 to vector<8x128xf32>
    %334 = arith.subf %333, %332 : vector<8x128xf32>
    %335 = arith.mulf %334, %320 : vector<8x128xf32>
    %cst_104 = arith.constant dense<0.000000e+00> : vector<8x128xf32>
    %336 = tpu.matmul %332, %4, %cst_104 {dimension_numbers = #tpu.dot_dimension_numbers<[1], [0], [0], [1], [0, 0, 1, 1], [], []>} : vector<8x128xf32>, vector<128x128xf32>, vector<8x128xf32> -> vector<8x128xf32>
    %337 = vector.broadcast %5 : vector<1x128xf32> to vector<8x128xf32>
    %338 = arith.addf %336, %337 : vector<8x128xf32>
    %339 = arith.subf %338, %294 : vector<8x128xf32>
    %340 = vector.broadcast %6 : vector<1x128xf32> to vector<8x128xf32>
    %341 = arith.mulf %339, %340 : vector<8x128xf32>
    %342 = arith.addf %294, %341 : vector<8x128xf32>
    %343 = arith.index_cast %c6_i32 : i32 to index
    %c0_105 = arith.constant 0 : index
    %c0_106 = arith.constant 0 : index
    %344 = vector.load %arg12[%343, %c0_105, %c0_106] : memref<8x8x128xf32, #tpu.memory_space<vmem>>, vector<1x8x128xf32>
    %345 = vector.shape_cast %344 : vector<1x8x128xf32> to vector<8x128xf32>
    %346 = vector.shape_cast %342 : vector<8x128xf32> to vector<1x8x128xf32>
    tpu.vector_store %arg12[%343, %c0_105, %c0_106], %346 {strides = array<i32>} : memref<8x8x128xf32, #tpu.memory_space<vmem>>, vector<1x8x128xf32>,
    %c7_i32 = arith.constant 7 : i32
    %347 = tpu.concatenate %332, %335, %323 in 1 : vector<8x128xf32>, vector<8x128xf32>, vector<8x128xf32> -> vector<8x384xf32>
    %cst_107 = arith.constant dense<0.000000e+00> : vector<8x384xf32>
    %348 = tpu.matmul %347, %3, %cst_107 {dimension_numbers = #tpu.dot_dimension_numbers<[1], [0], [0], [1], [0, 0, 1, 1], [], []>} : vector<8x384xf32>, vector<384x384xf32>, vector<8x384xf32> -> vector<8x384xf32>
    %349 = arith.index_cast %c7_i32 : i32 to index
    %c0_108 = arith.constant 0 : index
    %c0_109 = arith.constant 0 : index
    %350 = vector.load %arg2[%349, %c0_108, %c0_109] : memref<8x8x128xf32, #tpu.memory_space<vmem>>, vector<1x8x128xf32>
    %351 = vector.shape_cast %350 : vector<1x8x128xf32> to vector<8x128xf32>
    %352 = vector.extract_strided_slice %348 {offsets = [0, 0], sizes = [8, 128], strides = [1, 1]} : vector<8x384xf32> to vector<8x128xf32>
    %353 = arith.addf %351, %352 : vector<8x128xf32>
    %354 = arith.index_cast %c7_i32 : i32 to index
    %c0_110 = arith.constant 0 : index
    %c0_111 = arith.constant 0 : index
    %355 = vector.load %arg3[%354, %c0_110, %c0_111] : memref<8x8x256xf32, #tpu.memory_space<vmem>>, vector<1x8x256xf32>
    %356 = vector.shape_cast %355 : vector<1x8x256xf32> to vector<8x256xf32>
    %357 = vector.extract_strided_slice %348 {offsets = [0, 128], sizes = [8, 256], strides = [1, 1]} : vector<8x384xf32> to vector<8x256xf32>
    %358 = arith.addf %356, %357 : vector<8x256xf32>
    %359 = arith.negf %358 : vector<8x256xf32>
    %360 = math.exp %359 : vector<8x256xf32>
    %cst_112 = arith.constant 1.000000e+00 : f32
    %361 = vector.broadcast %cst_112 : f32 to vector<8x256xf32>
    %362 = arith.addf %361, %360 : vector<8x256xf32>
    %363 = arith.divf %361, %362 : vector<8x256xf32>
    %364 = vector.extract_strided_slice %363 {offsets = [0, 0], sizes = [8, 128], strides = [1, 1]} : vector<8x256xf32> to vector<8x128xf32>
    %365 = vector.extract_strided_slice %363 {offsets = [0, 128], sizes = [8, 128], strides = [1, 1]} : vector<8x256xf32> to vector<8x128xf32>
    %366 = arith.subf %353, %335 : vector<8x128xf32>
    %367 = arith.mulf %366, %364 : vector<8x128xf32>
    %368 = arith.addf %335, %367 : vector<8x128xf32>
    %369 = arith.subf %332, %323 : vector<8x128xf32>
    %370 = arith.mulf %369, %365 : vector<8x128xf32>
    %371 = arith.addf %323, %370 : vector<8x128xf32>
    %cst_113 = arith.constant 1.800000e+00 : f32
    %372 = vector.broadcast %cst_113 : f32 to vector<8x128xf32>
    %373 = arith.mulf %372, %371 : vector<8x128xf32>
    %cst_114 = arith.constant 1.000000e-01 : f32
    %374 = vector.broadcast %cst_114 : f32 to vector<8x128xf32>
    %375 = arith.addf %374, %373 : vector<8x128xf32>
    %376 = arith.subf %368, %375 : vector<8x128xf32>
    %cst_115 = arith.constant 0.000000e+00 : f32
    %377 = vector.broadcast %cst_115 : f32 to vector<8x128xf32>
    %378 = arith.cmpf ogt, %376, %377 : vector<8x128xf32>
    %379 = arith.extui %378 : vector<8x128xi1> to vector<8x128xi32>
    %380 = arith.sitofp %379 : vector<8x128xi32> to vector<8x128xf32>
    %cst_116 = arith.constant 1.000000e+00 : f32
    %381 = vector.broadcast %cst_116 : f32 to vector<8x128xf32>
    %382 = arith.subf %381, %380 : vector<8x128xf32>
    %383 = arith.mulf %382, %368 : vector<8x128xf32>
    %cst_117 = arith.constant dense<0.000000e+00> : vector<8x128xf32>
    %384 = tpu.matmul %380, %4, %cst_117 {dimension_numbers = #tpu.dot_dimension_numbers<[1], [0], [0], [1], [0, 0, 1, 1], [], []>} : vector<8x128xf32>, vector<128x128xf32>, vector<8x128xf32> -> vector<8x128xf32>
    %385 = vector.broadcast %5 : vector<1x128xf32> to vector<8x128xf32>
    %386 = arith.addf %384, %385 : vector<8x128xf32>
    %387 = arith.subf %386, %342 : vector<8x128xf32>
    %388 = vector.broadcast %6 : vector<1x128xf32> to vector<8x128xf32>
    %389 = arith.mulf %387, %388 : vector<8x128xf32>
    %390 = arith.addf %342, %389 : vector<8x128xf32>
    %391 = arith.index_cast %c7_i32 : i32 to index
    %c0_118 = arith.constant 0 : index
    %c0_119 = arith.constant 0 : index
    %392 = vector.load %arg12[%391, %c0_118, %c0_119] : memref<8x8x128xf32, #tpu.memory_space<vmem>>, vector<1x8x128xf32>
    %393 = vector.shape_cast %392 : vector<1x8x128xf32> to vector<8x128xf32>
    %394 = vector.shape_cast %390 : vector<8x128xf32> to vector<1x8x128xf32>
    tpu.vector_store %arg12[%391, %c0_118, %c0_119], %394 {strides = array<i32>} : memref<8x8x128xf32, #tpu.memory_space<vmem>>, vector<1x8x128xf32>,
    %c8_i32 = arith.constant 8 : i32
    %c0_120 = arith.constant 0 : index
    %c0_121 = arith.constant 0 : index
    %395 = vector.load %arg13[%c0_120, %c0_121] : memref<8x128xf32, #tpu.memory_space<vmem>>, vector<8x128xf32>
    tpu.vector_store %arg13[%c0_120, %c0_121], %383 {strides = array<i32>} : memref<8x128xf32, #tpu.memory_space<vmem>>, vector<8x128xf32>,
    %c0_122 = arith.constant 0 : index
    %c0_123 = arith.constant 0 : index
    %396 = vector.load %arg14[%c0_122, %c0_123] : memref<8x128xf32, #tpu.memory_space<vmem>>, vector<8x128xf32>
    tpu.vector_store %arg14[%c0_122, %c0_123], %380 {strides = array<i32>} : memref<8x128xf32, #tpu.memory_space<vmem>>, vector<8x128xf32>,
    %c0_124 = arith.constant 0 : index
    %c0_125 = arith.constant 0 : index
    %397 = vector.load %arg15[%c0_124, %c0_125] : memref<8x128xf32, #tpu.memory_space<vmem>>, vector<8x128xf32>
    tpu.vector_store %arg15[%c0_124, %c0_125], %371 {strides = array<i32>} : memref<8x128xf32, #tpu.memory_space<vmem>>, vector<8x128xf32>,
    %c0_126 = arith.constant 0 : index
    %c0_127 = arith.constant 0 : index
    %398 = vector.load %arg16[%c0_126, %c0_127] : memref<8x128xf32, #tpu.memory_space<vmem>>, vector<8x128xf32>
    tpu.vector_store %arg16[%c0_126, %c0_127], %390 {strides = array<i32>} : memref<8x128xf32, #tpu.memory_space<vmem>>, vector<8x128xf32>,
    return
  }
  func.func @transform_0(%arg0: i32, %arg1: i32) -> (i32, i32, i32) {
    %c0_i32 = arith.constant 0 : i32
    %c0_i32_0 = arith.constant 0 : i32
    return %arg1, %arg0, %c0_i32 : i32, i32, i32
  }
  func.func @transform_1(%arg0: i32, %arg1: i32) -> (i32, i32, i32) {
    %c0_i32 = arith.constant 0 : i32
    %c0_i32_0 = arith.constant 0 : i32
    return %arg1, %arg0, %c0_i32 : i32, i32, i32
  }
  func.func @transform_2(%arg0: i32, %arg1: i32) -> (i32, i32) {
    %c0_i32 = arith.constant 0 : i32
    %c0_i32_0 = arith.constant 0 : i32
    %c0_i32_1 = arith.constant 0 : i32
    return %c0_i32, %c0_i32_0 : i32, i32
  }
  func.func @transform_3(%arg0: i32, %arg1: i32) -> (i32, i32) {
    %c0_i32 = arith.constant 0 : i32
    %c0_i32_0 = arith.constant 0 : i32
    %c0_i32_1 = arith.constant 0 : i32
    return %c0_i32, %c0_i32_0 : i32, i32
  }
  func.func @transform_4(%arg0: i32, %arg1: i32) -> (i32, i32) {
    %c0_i32 = arith.constant 0 : i32
    %c0_i32_0 = arith.constant 0 : i32
    %c0_i32_1 = arith.constant 0 : i32
    return %c0_i32, %c0_i32_0 : i32, i32
  }
  func.func @transform_5(%arg0: i32, %arg1: i32) -> (i32, i32) {
    %c0_i32 = arith.constant 0 : i32
    %c0_i32_0 = arith.constant 0 : i32
    %c0_i32_1 = arith.constant 0 : i32
    return %c0_i32, %c0_i32_0 : i32, i32
  }
  func.func @transform_6(%arg0: i32, %arg1: i32) -> (i32, i32) {
    %c0_i32 = arith.constant 0 : i32
    %c0_i32_0 = arith.constant 0 : i32
    return %arg0, %c0_i32 : i32, i32
  }
  func.func @transform_7(%arg0: i32, %arg1: i32) -> (i32, i32) {
    %c0_i32 = arith.constant 0 : i32
    %c0_i32_0 = arith.constant 0 : i32
    return %arg0, %c0_i32 : i32, i32
  }
  func.func @transform_8(%arg0: i32, %arg1: i32) -> (i32, i32) {
    %c0_i32 = arith.constant 0 : i32
    %c0_i32_0 = arith.constant 0 : i32
    return %arg0, %c0_i32 : i32, i32
  }
  func.func @transform_9(%arg0: i32, %arg1: i32) -> (i32, i32) {
    %c0_i32 = arith.constant 0 : i32
    %c0_i32_0 = arith.constant 0 : i32
    return %arg0, %c0_i32 : i32, i32
  }
  func.func @transform_10(%arg0: i32, %arg1: i32) -> (i32, i32, i32) {
    %c0_i32 = arith.constant 0 : i32
    %c0_i32_0 = arith.constant 0 : i32
    return %arg1, %arg0, %c0_i32 : i32, i32, i32
  }
  func.func @transform_11(%arg0: i32, %arg1: i32) -> (i32, i32) {
    %c0_i32 = arith.constant 0 : i32
    %c0_i32_0 = arith.constant 0 : i32
    return %arg0, %c0_i32 : i32, i32
  }
  func.func @transform_12(%arg0: i32, %arg1: i32) -> (i32, i32) {
    %c0_i32 = arith.constant 0 : i32
    %c0_i32_0 = arith.constant 0 : i32
    return %arg0, %c0_i32 : i32, i32
  }
  func.func @transform_13(%arg0: i32, %arg1: i32) -> (i32, i32) {
    %c0_i32 = arith.constant 0 : i32
    %c0_i32_0 = arith.constant 0 : i32
    return %arg0, %c0_i32 : i32, i32
  }
  func.func @transform_14(%arg0: i32, %arg1: i32) -> (i32, i32) {
    %c0_i32 = arith.constant 0 : i32
    %c0_i32_0 = arith.constant 0 : i32
    return %arg0, %c0_i32 : i32, i32
  }
}

</mosaic_0001>

<llo_original>
// kernel: neg.6
$region0: #{neg.6}
  #allocation0 [shape = 's32[1]{0}', space=sflag, size = 0x4, scoped, tag = 'scoped memory for neg.6']
  %s0 = inlined_call_operand.vmem [shape: f32[32,32], index: 0, kind: input, shape index: {}]
  %s1 = inlined_call_operand.vmem [shape: f32[32,32], index: 1, kind: output, shape index: {}]
  %v2 = vld [vmem:[%s0] sm:$0xff]
  %3 = xla_tuple %v2
  %4 = xla_tuple %3
  %v5 = vxor.u32 %v2, 2147483648
  %6 = xla_tuple %v5
  %7 = vst [vmem:[%s1] sm:$0xff] %v5
  %s8 = scalar_lea.vmem %s0, 8
  %v9 = vld [vmem:[%s8] sm:$0xff]
  %10 = xla_tuple %v9
  %11 = xla_tuple %10
  %v12 = vxor.u32 %v9, 2147483648
  %13 = xla_tuple %v12
  %s14 = scalar_lea.vmem %s1, 8
  %15 = vst [vmem:[%s14] sm:$0xff] %v12
  %s16 = scalar_lea.vmem %s0, 16
  %v17 = vld [vmem:[%s16] sm:$0xff]
  %18 = xla_tuple %v17
  %19 = xla_tuple %18
  %v20 = vxor.u32 %v17, 2147483648
  %21 = xla_tuple %v20
  %s22 = scalar_lea.vmem %s1, 16
  %23 = vst [vmem:[%s22] sm:$0xff] %v20
  %s24 = scalar_lea.vmem %s0, 24
  %v25 = vld [vmem:[%s24] sm:$0xff]
  %26 = xla_tuple %v25
  %27 = xla_tuple %26
  %v28 = vxor.u32 %v25, 2147483648
  %29 = xla_tuple %v28
  %s30 = scalar_lea.vmem %s1, 24
  %31 = vst [vmem:[%s30] sm:$0xff] %v28

// kernel: seq_model_forward.1
$region0: #{seq_model_forward.1}
  #allocation0 [shape = 'u32[]', space=smem, size = 0x4, offset = 0x4, fixed_abs, tag = 'smem constant byte address 0x4 - core index']
  #allocation1 [shape = 'u32[72,128]{1,0:T(1,128)}', space=vmem, size = 0x9000, scoped, tag = 'internal scratch']
  %s0 = inlined_call_operand.vmem [shape: f32[8,16,128], index: 0, kind: input, shape index: {}]
  %s1 = inlined_call_operand.vmem [shape: f32[8,16,256], index: 1, kind: input, shape index: {}]
  %s2 = inlined_call_operand.vmem [shape: f32[384,384], index: 2, kind: input, shape index: {}]
  %s3 = inlined_call_operand.vmem [shape: f32[128,128], index: 3, kind: input, shape index: {}]
  %s4 = inlined_call_operand.vmem [shape: f32[1,128], index: 4, kind: input, shape index: {}]
  %s5 = inlined_call_operand.vmem [shape: f32[1,128], index: 5, kind: input, shape index: {}]
  %s6 = inlined_call_operand.vmem [shape: f32[16,128], index: 6, kind: input, shape index: {}]
  %s7 = inlined_call_operand.vmem [shape: f32[16,128], index: 7, kind: input, shape index: {}]
  %s8 = inlined_call_operand.vmem [shape: f32[16,128], index: 8, kind: input, shape index: {}]
  %s9 = inlined_call_operand.vmem [shape: f32[16,128], index: 9, kind: input, shape index: {}]
  %s10 = inlined_call_operand.vmem [shape: f32[8,16,128], index: 10, kind: output, shape index: {0}]
  %s11 = inlined_call_operand.vmem [shape: f32[16,128], index: 11, kind: output, shape index: {1}]
  %s12 = inlined_call_operand.vmem [shape: f32[16,128], index: 12, kind: output, shape index: {2}]
  %s13 = inlined_call_operand.vmem [shape: f32[16,128], index: 13, kind: output, shape index: {3}]
  %s14 = inlined_call_operand.vmem [shape: f32[16,128], index: 14, kind: output, shape index: {4}]
  %15 = xla_tuple %s10, %s11, %s12, %s13, %s14
  %s16 = sld [smem:[#allocation0]]
  $region204: #{seq_model_forward.1} parent=0
    _
  %s18 = ssub.s32 1, %s16
  %s19 = scalar_select 0, %s18, %s16
  $region1: #{seq_model_forward.1} parent=0
    #allocation2 [shape = 'u8[65536]{0}', space=vmem, size = 0x10000, scoped, tag = 'input window, operand 0']
    #allocation3 [shape = 'u8[131072]{0}', space=vmem, size = 0x20000, scoped, tag = 'input window, operand 1']
    #allocation4 [shape = 'u8[65536]{0}', space=vmem, size = 0x10000, scoped, tag = 'output window, operand 0']
    loop: start=0, step=1, limit=4
    $region2: #{seq_model_forward.1} parent=1 // loop_pre_header
      _
    $region3: #{seq_model_forward.1} parent=1 // loop_header
      %s21 = sphi 0, %s25
      %p22 = scmp.ge.s32.totalorder %s21, 4
      %s28 = sphi 0, %s40
      %s29 = sphi 0, %s36
      %s30 = sphi 0, %s28
      %s31 = sphi 0, %s29
      %s32 = sphi 0, %s30
      %s33 = sphi 0, %s31
      %s45 = sphi 0, %s47
      %s48 = sphi 0, %s45
      %s49 = sphi 0, %s48
      %s65 = sphi 0, %s49
      %s73 = sphi 0, %s75
      %s76 = sphi 0, %s73
      %s77 = sphi 0, %s76
      %s93 = sphi 0, %s77
      %s97 = sphi 0, %s97
      %s99 = sphi 0, %s97
      %s100 = sphi 0, %s99
      %s114 = sphi 0, %s100
      %s118 = sphi 0, %s118
      %s120 = sphi 0, %s118
      %s121 = sphi 0, %s120
      %s135 = sphi 0, %s121
      %s139 = sphi 0, %s139
      %s141 = sphi 0, %s139
      %s142 = sphi 0, %s141
      %s156 = sphi 0, %s142
      %s160 = sphi 0, %s160
      %s162 = sphi 0, %s160
      %s163 = sphi 0, %s162
      %s177 = sphi 0, %s163
      %s183 = sphi 0, %s185
      %s186 = sphi 0, %s183
      %s187 = sphi 0, %s186
      %s203 = sphi 0, %s187
      %s209 = sphi 0, %s211
      %s212 = sphi 0, %s209
      %s213 = sphi 0, %s212
      %s229 = sphi 0, %s213
      %s235 = sphi 0, %s237
      %s238 = sphi 0, %s235
      %s239 = sphi 0, %s238
      %s255 = sphi 0, %s239
      %s261 = sphi 0, %s263
      %s264 = sphi 0, %s261
      %s265 = sphi 0, %s264
      %s281 = sphi 0, %s265
      %s289 = sphi 0, %s291
      %s292 = sphi 0, %s289
      %s293 = sphi 0, %s292
      %s309 = sphi 0, %s293
      %s315 = sphi 0, %s317
      %s318 = sphi 0, %s315
      %s319 = sphi 0, %s318
      %s335 = sphi 0, %s319
      %s341 = sphi 0, %s343
      %s344 = sphi 0, %s341
      %s345 = sphi 0, %s344
      %s361 = sphi 0, %s345
      %s367 = sphi 0, %s369
      %s370 = sphi 0, %s367
      %s371 = sphi 0, %s370
      %s387 = sphi 0, %s371
      %s393 = sphi 0, %s395
      %s396 = sphi 0, %s393
      %s397 = sphi 0, %s396
      %s413 = sphi 0, %s397
    $region4: #{seq_model_forward.1} parent=1 // loop_header_branch
      %24 = sbr.rel (%p22) target = $region8
    $region5: #{seq_model_forward.1} parent=1 // loop_body
      %s26 = ssub.s32 %s21, 1
      %s27 = ssub.s32 %s21, 2
      %s34 = sadd.s32 1, %s29
      %p35 = scmp.ge.s32.totalorder %s34, 1
      %s36 = scalar_select %p35, 0, %s34
      %s37 = sadd.s32 1, %s28
      %s38 = scalar_select %p35, %s37, %s28
      %p39 = scmp.ge.s32.totalorder %s38, 2
      %s40 = scalar_select %p39, 0, %s38
      %s41 = ssub.s32 %s29, %s36
      %s42 = ssub.s32 %s28, %s40
      %s43 = sor.u32 %s41, %s42
      %p44 = scmp.eq.s32.totalorder %s43, 0
      %s46 = sadd.s32 %s45, 1
      %s47 = scalar_select %p44, %s45, %s46
      %p50 = pneg %p44
      %p51 = scmp.eq.s32.totalorder %s21, 1
      %p52 = por %p50, %p51
      %p53 = scmp.ne.s32.totalorder %s45, %s48
      %p54 = scmp.eq.s32.totalorder %s21, 0
      %p55 = por %p53, %p54
      %p56 = scmp.ne.s32.totalorder %s45, %s48
      %p57 = scmp.eq.s32.totalorder %s26, 1
      %p58 = por %p56, %p57
      %p59 = scmp.ne.s32.totalorder %s48, %s49
      %p60 = scmp.eq.s32.totalorder %s26, 0
      %p61 = por %p59, %p60
      %p62 = scmp.ne.s32.totalorder %s48, %s49
      %p63 = scmp.eq.s32.totalorder %s27, 1
      %p64 = por %p62, %p63
      %p66 = scmp.ne.s32.totalorder %s49, %s65
      %p67 = scmp.eq.s32.totalorder %s27, 0
      %p68 = por %p66, %p67
      %s69 = ssub.s32 %s29, %s36
      %s70 = ssub.s32 %s28, %s40
      %s71 = sor.u32 %s69, %s70
      %p72 = scmp.eq.s32.totalorder %s71, 0
      %s74 = sadd.s32 %s73, 1
      %s75 = scalar_select %p72, %s73, %s74
      %p78 = pneg %p72
      %p79 = scmp.eq.s32.totalorder %s21, 1
      %p80 = por %p78, %p79
      %p81 = scmp.ne.s32.totalorder %s73, %s76
      %p82 = scmp.eq.s32.totalorder %s21, 0
      %p83 = por %p81, %p82
      %p84 = scmp.ne.s32.totalorder %s73, %s76
      %p85 = scmp.eq.s32.totalorder %s26, 1
      %p86 = por %p84, %p85
      %p87 = scmp.ne.s32.totalorder %s76, %s77
      %p88 = scmp.eq.s32.totalorder %s26, 0
      %p89 = por %p87, %p88
      %p90 = scmp.ne.s32.totalorder %s76, %s77
      %p91 = scmp.eq.s32.totalorder %s27, 1
      %p92 = por %p90, %p91
      %p94 = scmp.ne.s32.totalorder %s77, %s93
      %p95 = scmp.eq.s32.totalorder %s27, 0
      %p96 = por %p94, %p95
      %s98 = sadd.s32 %s97, 1
      %p101 = scmp.eq.s32.totalorder %s21, 1
      %p102 = scmp.ne.s32.totalorder %s97, %s99
      %p103 = scmp.eq.s32.totalorder %s21, 0
      %p104 = por %p102, %p103
      %p105 = scmp.ne.s32.totalorder %s97, %s99
      %p106 = scmp.eq.s32.totalorder %s26, 1
      %p107 = por %p105, %p106
      %p108 = scmp.ne.s32.totalorder %s99, %s100
      %p109 = scmp.eq.s32.totalorder %s26, 0
      %p110 = por %p108, %p109
      %p111 = scmp.ne.s32.totalorder %s99, %s100
      %p112 = scmp.eq.s32.totalorder %s27, 1
      %p113 = por %p111, %p112
      %p115 = scmp.ne.s32.totalorder %s100, %s114
      %p116 = scmp.eq.s32.totalorder %s27, 0
      %p117 = por %p115, %p116
      %s119 = sadd.s32 %s118, 1
      %p122 = scmp.eq.s32.totalorder %s21, 1
      %p123 = scmp.ne.s32.totalorder %s118, %s120
      %p124 = scmp.eq.s32.totalorder %s21, 0
      %p125 = por %p123, %p124
      %p126 = scmp.ne.s32.totalorder %s118, %s120
      %p127 = scmp.eq.s32.totalorder %s26, 1
      %p128 = por %p126, %p127
      %p129 = scmp.ne.s32.totalorder %s120, %s121
      %p130 = scmp.eq.s32.totalorder %s26, 0
      %p131 = por %p129, %p130
      %p132 = scmp.ne.s32.totalorder %s120, %s121
      %p133 = scmp.eq.s32.totalorder %s27, 1
      %p134 = por %p132, %p133
      %p136 = scmp.ne.s32.totalorder %s121, %s135
      %p137 = scmp.eq.s32.totalorder %s27, 0
      %p138 = por %p136, %p137
      %s140 = sadd.s32 %s139, 1
      %p143 = scmp.eq.s32.totalorder %s21, 1
      %p144 = scmp.ne.s32.totalorder %s139, %s141
      %p145 = scmp.eq.s32.totalorder %s21, 0
      %p146 = por %p144, %p145
      %p147 = scmp.ne.s32.totalorder %s139, %s141
      %p148 = scmp.eq.s32.totalorder %s26, 1
      %p149 = por %p147, %p148
      %p150 = scmp.ne.s32.totalorder %s141, %s142
      %p151 = scmp.eq.s32.totalorder %s26, 0
      %p152 = por %p150, %p151
      %p153 = scmp.ne.s32.totalorder %s141, %s142
      %p154 = scmp.eq.s32.totalorder %s27, 1
      %p155 = por %p153, %p154
      %p157 = scmp.ne.s32.totalorder %s142, %s156
      %p158 = scmp.eq.s32.totalorder %s27, 0
      %p159 = por %p157, %p158
      %s161 = sadd.s32 %s160, 1
      %p164 = scmp.eq.s32.totalorder %s21, 1
      %p165 = scmp.ne.s32.totalorder %s160, %s162
      %p166 = scmp.eq.s32.totalorder %s21, 0
      %p167 = por %p165, %p166
      %p168 = scmp.ne.s32.totalorder %s160, %s162
      %p169 = scmp.eq.s32.totalorder %s26, 1
      %p170 = por %p168, %p169
      %p171 = scmp.ne.s32.totalorder %s162, %s163
      %p172 = scmp.eq.s32.totalorder %s26, 0
      %p173 = por %p171, %p172
      %p174 = scmp.ne.s32.totalorder %s162, %s163
      %p175 = scmp.eq.s32.totalorder %s27, 1
      %p176 = por %p174, %p175
      %p178 = scmp.ne.s32.totalorder %s163, %s177
      %p179 = scmp.eq.s32.totalorder %s27, 0
      %p180 = por %p178, %p179
      %s181 = ssub.s32 %s28, %s40
      %p182 = scmp.eq.s32.totalorder %s181, 0
      %s184 = sadd.s32 %s183, 1
      %s185 = scalar_select %p182, %s183, %s184
      %p188 = pneg %p182
      %p189 = scmp.eq.s32.totalorder %s21, 1
      %p190 = por %p188, %p189
      %p191 = scmp.ne.s32.totalorder %s183, %s186
      %p192 = scmp.eq.s32.totalorder %s21, 0
      %p193 = por %p191, %p192
      %p194 = scmp.ne.s32.totalorder %s183, %s186
      %p195 = scmp.eq.s32.totalorder %s26, 1
      %p196 = por %p194, %p195
      %p197 = scmp.ne.s32.totalorder %s186, %s187
      %p198 = scmp.eq.s32.totalorder %s26, 0
      %p199 = por %p197, %p198
      %p200 = scmp.ne.s32.totalorder %s186, %s187
      %p201 = scmp.eq.s32.totalorder %s27, 1
      %p202 = por %p200, %p201
      %p204 = scmp.ne.s32.totalorder %s187, %s203
      %p205 = scmp.eq.s32.totalorder %s27, 0
      %p206 = por %p204, %p205
      %s207 = ssub.s32 %s28, %s40
      %p208 = scmp.eq.s32.totalorder %s207, 0
      %s210 = sadd.s32 %s209, 1
      %s211 = scalar_select %p208, %s209, %s210
      %p214 = pneg %p208
      %p215 = scmp.eq.s32.totalorder %s21, 1
      %p216 = por %p214, %p215
      %p217 = scmp.ne.s32.totalorder %s209, %s212
      %p218 = scmp.eq.s32.totalorder %s21, 0
      %p219 = por %p217, %p218
      %p220 = scmp.ne.s32.totalorder %s209, %s212
      %p221 = scmp.eq.s32.totalorder %s26, 1
      %p222 = por %p220, %p221
      %p223 = scmp.ne.s32.totalorder %s212, %s213
      %p224 = scmp.eq.s32.totalorder %s26, 0
      %p225 = por %p223, %p224
      %p226 = scmp.ne.s32.totalorder %s212, %s213
      %p227 = scmp.eq.s32.totalorder %s27, 1
      %p228 = por %p226, %p227
      %p230 = scmp.ne.s32.totalorder %s213, %s229
      %p231 = scmp.eq.s32.totalorder %s27, 0
      %p232 = por %p230, %p231
      %s233 = ssub.s32 %s28, %s40
      %p234 = scmp.eq.s32.totalorder %s233, 0
      %s236 = sadd.s32 %s235, 1
      %s237 = scalar_select %p234, %s235, %s236
      %p240 = pneg %p234
      %p241 = scmp.eq.s32.totalorder %s21, 1
      %p242 = por %p240, %p241
      %p243 = scmp.ne.s32.totalorder %s235, %s238
      %p244 = scmp.eq.s32.totalorder %s21, 0
      %p245 = por %p243, %p244
      %p246 = scmp.ne.s32.totalorder %s235, %s238
      %p247 = scmp.eq.s32.totalorder %s26, 1
      %p248 = por %p246, %p247
      %p249 = scmp.ne.s32.totalorder %s238, %s239
      %p250 = scmp.eq.s32.totalorder %s26, 0
      %p251 = por %p249, %p250
      %p252 = scmp.ne.s32.totalorder %s238, %s239
      %p253 = scmp.eq.s32.totalorder %s27, 1
      %p254 = por %p252, %p253
      %p256 = scmp.ne.s32.totalorder %s239, %s255
      %p257 = scmp.eq.s32.totalorder %s27, 0
      %p258 = por %p256, %p257
      %s259 = ssub.s32 %s28, %s40
      %p260 = scmp.eq.s32.totalorder %s259, 0
      %s262 = sadd.s32 %s261, 1
      %s263 = scalar_select %p260, %s261, %s262
      %p266 = pneg %p260
      %p267 = scmp.eq.s32.totalorder %s21, 1
      %p268 = por %p266, %p267
      %p269 = scmp.ne.s32.totalorder %s261, %s264
      %p270 = scmp.eq.s32.totalorder %s21, 0
      %p271 = por %p269, %p270
      %p272 = scmp.ne.s32.totalorder %s261, %s264
      %p273 = scmp.eq.s32.totalorder %s26, 1
      %p274 = por %p272, %p273
      %p275 = scmp.ne.s32.totalorder %s264, %s265
      %p276 = scmp.eq.s32.totalorder %s26, 0
      %p277 = por %p275, %p276
      %p278 = scmp.ne.s32.totalorder %s264, %s265
      %p279 = scmp.eq.s32.totalorder %s27, 1
      %p280 = por %p278, %p279
      %p282 = scmp.ne.s32.totalorder %s265, %s281
      %p283 = scmp.eq.s32.totalorder %s27, 0
      %p284 = por %p282, %p283
      %s285 = ssub.s32 %s29, %s36
      %s286 = ssub.s32 %s28, %s40
      %s287 = sor.u32 %s285, %s286
      %p288 = scmp.eq.s32.totalorder %s287, 0
      %s290 = sadd.s32 %s289, 1
      %s291 = scalar_select %p288, %s289, %s290
      %p294 = pneg %p288
      %p295 = scmp.eq.s32.totalorder %s21, 1
      %p296 = por %p294, %p295
      %p297 = scmp.ne.s32.totalorder %s289, %s292
      %p298 = scmp.eq.s32.totalorder %s21, 0
      %p299 = por %p297, %p298
      %p300 = scmp.ne.s32.totalorder %s289, %s292
      %p301 = scmp.eq.s32.totalorder %s26, 1
      %p302 = por %p300, %p301
      %p303 = scmp.ne.s32.totalorder %s292, %s293
      %p304 = scmp.eq.s32.totalorder %s26, 0
      %p305 = por %p303, %p304
      %p306 = scmp.ne.s32.totalorder %s292, %s293
      %p307 = scmp.eq.s32.totalorder %s27, 1
      %p308 = por %p306, %p307
      %p310 = scmp.ne.s32.totalorder %s293, %s309
      %p311 = scmp.eq.s32.totalorder %s27, 0
      %p312 = por %p310, %p311
      %s313 = ssub.s32 %s28, %s40
      %p314 = scmp.eq.s32.totalorder %s313, 0
      %s316 = sadd.s32 %s315, 1
      %s317 = scalar_select %p314, %s315, %s316
      %p320 = pneg %p314
      %p321 = scmp.eq.s32.totalorder %s21, 1
      %p322 = por %p320, %p321
      %p323 = scmp.ne.s32.totalorder %s315, %s318
      %p324 = scmp.eq.s32.totalorder %s21, 0
      %p325 = por %p323, %p324
      %p326 = scmp.ne.s32.totalorder %s315, %s318
      %p327 = scmp.eq.s32.totalorder %s26, 1
      %p328 = por %p326, %p327
      %p329 = scmp.ne.s32.totalorder %s318, %s319
      %p330 = scmp.eq.s32.totalorder %s26, 0
      %p331 = por %p329, %p330
      %p332 = scmp.ne.s32.totalorder %s318, %s319
      %p333 = scmp.eq.s32.totalorder %s27, 1
      %p334 = por %p332, %p333
      %p336 = scmp.ne.s32.totalorder %s319, %s335
      %p337 = scmp.eq.s32.totalorder %s27, 0
      %p338 = por %p336, %p337
      %s339 = ssub.s32 %s28, %s40
      %p340 = scmp.eq.s32.totalorder %s339, 0
      %s342 = sadd.s32 %s341, 1
      %s343 = scalar_select %p340, %s341, %s342
      %p346 = pneg %p340
      %p347 = scmp.eq.s32.totalorder %s21, 1
      %p348 = por %p346, %p347
      %p349 = scmp.ne.s32.totalorder %s341, %s344
      %p350 = scmp.eq.s32.totalorder %s21, 0
      %p351 = por %p349, %p350
      %p352 = scmp.ne.s32.totalorder %s341, %s344
      %p353 = scmp.eq.s32.totalorder %s26, 1
      %p354 = por %p352, %p353
      %p355 = scmp.ne.s32.totalorder %s344, %s345
      %p356 = scmp.eq.s32.totalorder %s26, 0
      %p357 = por %p355, %p356
      %p358 = scmp.ne.s32.totalorder %s344, %s345
      %p359 = scmp.eq.s32.totalorder %s27, 1
      %p360 = por %p358, %p359
      %p362 = scmp.ne.s32.totalorder %s345, %s361
      %p363 = scmp.eq.s32.totalorder %s27, 0
      %p364 = por %p362, %p363
      %s365 = ssub.s32 %s28, %s40
      %p366 = scmp.eq.s32.totalorder %s365, 0
      %s368 = sadd.s32 %s367, 1
      %s369 = scalar_select %p366, %s367, %s368
      %p372 = pneg %p366
      %p373 = scmp.eq.s32.totalorder %s21, 1
      %p374 = por %p372, %p373
      %p375 = scmp.ne.s32.totalorder %s367, %s370
      %p376 = scmp.eq.s32.totalorder %s21, 0
      %p377 = por %p375, %p376
      %p378 = scmp.ne.s32.totalorder %s367, %s370
      %p379 = scmp.eq.s32.totalorder %s26, 1
      %p380 = por %p378, %p379
      %p381 = scmp.ne.s32.totalorder %s370, %s371
      %p382 = scmp.eq.s32.totalorder %s26, 0
      %p383 = por %p381, %p382
      %p384 = scmp.ne.s32.totalorder %s370, %s371
      %p385 = scmp.eq.s32.totalorder %s27, 1
      %p386 = por %p384, %p385
      %p388 = scmp.ne.s32.totalorder %s371, %s387
      %p389 = scmp.eq.s32.totalorder %s27, 0
      %p390 = por %p388, %p389
      %s391 = ssub.s32 %s28, %s40
      %p392 = scmp.eq.s32.totalorder %s391, 0
      %s394 = sadd.s32 %s393, 1
      %s395 = scalar_select %p392, %s393, %s394
      %p398 = pneg %p392
      %p399 = scmp.eq.s32.totalorder %s21, 1
      %p400 = por %p398, %p399
      %p401 = scmp.ne.s32.totalorder %s393, %s396
      %p402 = scmp.eq.s32.totalorder %s21, 0
      %p403 = por %p401, %p402
      %p404 = scmp.ne.s32.totalorder %s393, %s396
      %p405 = scmp.eq.s32.totalorder %s26, 1
      %p406 = por %p404, %p405
      %p407 = scmp.ne.s32.totalorder %s396, %s397
      %p408 = scmp.eq.s32.totalorder %s26, 0
      %p409 = por %p407, %p408
      %p410 = scmp.ne.s32.totalorder %s396, %s397
      %p411 = scmp.eq.s32.totalorder %s27, 1
      %p412 = por %p410, %p411
      %p414 = scmp.ne.s32.totalorder %s397, %s413
      %p415 = scmp.eq.s32.totalorder %s27, 0
      %p416 = por %p414, %p415
      %p417 = scmp.le.s32.totalorder 1, %s21
      %p418 = scmp.lt.s32.totalorder %s21, 3
      %p419 = pnand %p417, %p418
      %p420 = pneg %p419
      // Predicated region
      $region9: #{seq_model_forward.1} parent=5 // pred_check
        _
      $region10: #{seq_model_forward.1} parent=5 // pred_check_branch
        %422 = sbr.rel (%p419) target = $region12
      $region11: #{seq_model_forward.1} parent=5 // pred_region
        %s423 = ssub.s32 %s21, 1
        // Predicated region
        $region13: #{seq_model_forward.1} parent=11 // pred_check
          %p424 = pneg %p110
        $region14: #{seq_model_forward.1} parent=11 // pred_check_branch
          %426 = sbr.rel (%p424) target = $region16
        $region15: #{seq_model_forward.1} parent=11 // pred_region
          _
        $region16: #{seq_model_forward.1} parent=11 // pred_fallthru
          _
        // Predicated region
        $region17: #{seq_model_forward.1} parent=11 // pred_check
          %p427 = pneg %p131
        $region18: #{seq_model_forward.1} parent=11 // pred_check_branch
          %429 = sbr.rel (%p427) target = $region20
        $region19: #{seq_model_forward.1} parent=11 // pred_region
          _
        $region20: #{seq_model_forward.1} parent=11 // pred_fallthru
          _
        // Predicated region
        $region21: #{seq_model_forward.1} parent=11 // pred_check
          %p430 = pneg %p152
        $region22: #{seq_model_forward.1} parent=11 // pred_check_branch
          %432 = sbr.rel (%p430) target = $region24
        $region23: #{seq_model_forward.1} parent=11 // pred_region
          _
        $region24: #{seq_model_forward.1} parent=11 // pred_fallthru
          _
        // Predicated region
        $region25: #{seq_model_forward.1} parent=11 // pred_check
          %p433 = pneg %p173
        $region26: #{seq_model_forward.1} parent=11 // pred_check_branch
          %435 = sbr.rel (%p433) target = $region28
        $region27: #{seq_model_forward.1} parent=11 // pred_region
          _
        $region28: #{seq_model_forward.1} parent=11 // pred_fallthru
          _
      $region12: #{seq_model_forward.1} parent=5 // pred_fallthru
        _
      %p436 = scmp.lt.s32.totalorder %s21, 2
      // Predicated region
      $region29: #{seq_model_forward.1} parent=5 // pred_check
        %p437 = pneg %p436
      $region30: #{seq_model_forward.1} parent=5 // pred_check_branch
        %439 = sbr.rel (%p437) target = $region32
      $region31: #{seq_model_forward.1} parent=5 // pred_region
        // Predicated region
        $region33: #{seq_model_forward.1} parent=31 // pred_check
          %p440 = pneg %p55
        $region34: #{seq_model_forward.1} parent=31 // pred_check_branch
          %442 = sbr.rel (%p440) target = $region36
        $region35: #{seq_model_forward.1} parent=31 // pred_region
          %s443 = sand.u32 %s45, 1
          %s444 = sand.u32 %s45, 1
          %s445 = smul.addr %s444, 64
          %s446 = scalar_lea.vmem [#allocation2], %s445
          %s447 = smul.u32 8, %s29
          %s448 = smul.addr %s447, 2
          %s449 = sadd.s32 %s28, %s448
          %s450 = smul.addr %s449, 8
          %s451 = scalar_lea.vmem %s0, %s450
          // Predicated region
          $region37: #{seq_model_forward.1} parent=35 // pred_check
            _
          $region38: #{seq_model_forward.1} parent=35 // pred_check_branch
            %453 = sbr.rel (0) target = $region40
          $region39: #{seq_model_forward.1} parent=35 // pred_region
            // Predicated region
            $region41: #{seq_model_forward.1} parent=39 // pred_check
              _
            $region42: #{seq_model_forward.1} parent=39 // pred_check_branch
              %455 = sbr.rel (0) target = $region44
            $region43: #{seq_model_forward.1} parent=39 // pred_region
              // Predicated region
              $region56: #{seq_model_forward.1} parent=43 // pred_check
                _
              $region57: #{seq_model_forward.1} parent=43 // pred_check_branch
                %485 = sbr.rel (0) target = $region59
              $region58: #{seq_model_forward.1} parent=43 // pred_region
                loop: start=0, step=1, limit=1
                $region60: #{seq_model_forward.1} parent=58 // loop_pre_header
                  _
                $region61: #{seq_model_forward.1} parent=58 // loop_header
                  %s487 = sphi 0, %s491
                  %p488 = scmp.ge.s32.totalorder %s487, 1
                  %s492 = sphi %s451, %s451
                  %s493 = sphi %s446, %s446
                $region62: #{seq_model_forward.1} parent=58 // loop_header_branch
                  %490 = sbr.rel (%p488) target = $region66
                $region63: #{seq_model_forward.1} parent=58 // loop_body
                  %v494 = vld [vmem:[%s492] sm:$0xff]
                  %495 = vst [vmem:[%s493] sm:$0xff] %v494
                  %v496 = vld [vmem:[%s492 + $0x10] sm:$0xff]
                  %497 = vst [vmem:[%s493 + $0x8] sm:$0xff] %v496
                  %v498 = vld [vmem:[%s492 + $0x20] sm:$0xff]
                  %499 = vst [vmem:[%s493 + $0x10] sm:$0xff] %v498
                  %v500 = vld [vmem:[%s492 + $0x30] sm:$0xff]
                  %501 = vst [vmem:[%s493 + $0x18] sm:$0xff] %v500
                  %v502 = vld [vmem:[%s492 + $0x40] sm:$0xff]
                  %503 = vst [vmem:[%s493 + $0x20] sm:$0xff] %v502
                  %v504 = vld [vmem:[%s492 + $0x50] sm:$0xff]
                  %505 = vst [vmem:[%s493 + $0x28] sm:$0xff] %v504
                  %v506 = vld [vmem:[%s492 + $0x60] sm:$0xff]
                  %507 = vst [vmem:[%s493 + $0x30] sm:$0xff] %v506
                  %v508 = vld [vmem:[%s492 + $0x70] sm:$0xff]
                  %509 = vst [vmem:[%s493 + $0x38] sm:$0xff] %v508
                $region64: #{seq_model_forward.1} parent=58 // loop_footer
                  %s491 = sadd.s32 1, %s487
                $region65: #{seq_model_forward.1} parent=58 // loop_footer_branch
                  %486 = sbr.rel target = $region61
                $region66: #{seq_model_forward.1} parent=58 // loop_exit
                  _
              $region59: #{seq_model_forward.1} parent=43 // pred_fallthru
                _
              // Predicated region
              $region67: #{seq_model_forward.1} parent=43 // pred_check
                _
              $region68: #{seq_model_forward.1} parent=43 // pred_check_branch
                %511 = sbr.rel target = $region70
              $region69: #{seq_model_forward.1} parent=43 // pred_region
                _
              $region70: #{seq_model_forward.1} parent=43 // pred_fallthru
                _
            $region44: #{seq_model_forward.1} parent=39 // pred_fallthru
              _
            // Predicated region
            $region45: #{seq_model_forward.1} parent=39 // pred_check
              _
            $region46: #{seq_model_forward.1} parent=39 // pred_check_branch
              %457 = sbr.rel target = $region48
            $region47: #{seq_model_forward.1} parent=39 // pred_region
              %s459 = ssub.s32 256, 1
              loop: start=0, step=1, limit=1
              $region49: #{seq_model_forward.1} parent=47 // loop_pre_header
                _
              $region50: #{seq_model_forward.1} parent=47 // loop_header
                %s461 = sphi 0, %s465
                %p462 = scmp.ge.s32.totalorder %s461, 1
                %s466 = sphi %s451, %s451
                %s467 = sphi %s446, %s446
              $region51: #{seq_model_forward.1} parent=47 // loop_header_branch
                %464 = sbr.rel (%p462) target = $region55
              $region52: #{seq_model_forward.1} parent=47 // loop_body
                %v468 = vld [vmem:[%s466] sm:%s459]
                %469 = vst [vmem:[%s467] sm:%s459] %v468
                %v470 = vld [vmem:[%s466 + $0x10] sm:%s459]
                %471 = vst [vmem:[%s467 + $0x8] sm:%s459] %v470
                %v472 = vld [vmem:[%s466 + $0x20] sm:%s459]
                %473 = vst [vmem:[%s467 + $0x10] sm:%s459] %v472
                %v474 = vld [vmem:[%s466 + $0x30] sm:%s459]
                %475 = vst [vmem:[%s467 + $0x18] sm:%s459] %v474
                %v476 = vld [vmem:[%s466 + $0x40] sm:%s459]
                %477 = vst [vmem:[%s467 + $0x20] sm:%s459] %v476
                %v478 = vld [vmem:[%s466 + $0x50] sm:%s459]
                %479 = vst [vmem:[%s467 + $0x28] sm:%s459] %v478
                %v480 = vld [vmem:[%s466 + $0x60] sm:%s459]
                %481 = vst [vmem:[%s467 + $0x30] sm:%s459] %v480
                %v482 = vld [vmem:[%s466 + $0x70] sm:%s459]
                %483 = vst [vmem:[%s467 + $0x38] sm:%s459] %v482
              $region53: #{seq_model_forward.1} parent=47 // loop_footer
                %s465 = sadd.s32 1, %s461
              $region54: #{seq_model_forward.1} parent=47 // loop_footer_branch
                %460 = sbr.rel target = $region50
              $region55: #{seq_model_forward.1} parent=47 // loop_exit
                _
            $region48: #{seq_model_forward.1} parent=39 // pred_fallthru
              _
          $region40: #{seq_model_forward.1} parent=35 // pred_fallthru
            _
          %512 = vnop
        $region36: #{seq_model_forward.1} parent=31 // pred_fallthru
          _
        // Predicated region
        $region71: #{seq_model_forward.1} parent=31 // pred_check
          %p513 = pneg %p83
        $region72: #{seq_model_forward.1} parent=31 // pred_check_branch
          %515 = sbr.rel (%p513) target = $region74
        $region73: #{seq_model_forward.1} parent=31 // pred_region
          %s516 = sand.u32 %s73, 1
          %s517 = sand.u32 %s73, 1
          %s518 = smul.addr %s517, 128
          %s519 = scalar_lea.vmem [#allocation3], %s518
          %s520 = smul.u32 8, %s29
          %s521 = smul.addr %s28, 2
          %s522 = smul.addr %s520, 4
          %s523 = sadd.s32 %s521, %s522
          %s524 = smul.addr %s523, 8
          %s525 = scalar_lea.vmem %s1, %s524
          // Predicated region
          $region75: #{seq_model_forward.1} parent=73 // pred_check
            _
          $region76: #{seq_model_forward.1} parent=73 // pred_check_branch
            %527 = sbr.rel (0) target = $region78
          $region77: #{seq_model_forward.1} parent=73 // pred_region
            // Predicated region
            $region79: #{seq_model_forward.1} parent=77 // pred_check
              _
            $region80: #{seq_model_forward.1} parent=77 // pred_check_branch
              %529 = sbr.rel (0) target = $region82
            $region81: #{seq_model_forward.1} parent=77 // pred_region
              loop: start=0, step=1, limit=1
              $region83: #{seq_model_forward.1} parent=81 // loop_pre_header
                _
              $region84: #{seq_model_forward.1} parent=81 // loop_header
                %s531 = sphi 0, %s535
                %p532 = scmp.ge.s32.totalorder %s531, 1
                %s536 = sphi %s525, %s525
                %s537 = sphi %s519, %s519
              $region85: #{seq_model_forward.1} parent=81 // loop_header_branch
                %534 = sbr.rel (%p532) target = $region89
              $region86: #{seq_model_forward.1} parent=81 // loop_body
                %v538 = vld [vmem:[%s536] sm:$0xff]
                %539 = vst [vmem:[%s537] sm:$0xff] %v538
                %v540 = vld [vmem:[%s536 + $0x8] sm:$0xff]
                %541 = vst [vmem:[%s537 + $0x8] sm:$0xff] %v540
                %v542 = vld [vmem:[%s536 + $0x20] sm:$0xff]
                %543 = vst [vmem:[%s537 + $0x10] sm:$0xff] %v542
                %v544 = vld [vmem:[%s536 + $0x28] sm:$0xff]
                %545 = vst [vmem:[%s537 + $0x18] sm:$0xff] %v544
                %v546 = vld [vmem:[%s536 + $0x40] sm:$0xff]
                %547 = vst [vmem:[%s537 + $0x20] sm:$0xff] %v546
                %v548 = vld [vmem:[%s536 + $0x48] sm:$0xff]
                %549 = vst [vmem:[%s537 + $0x28] sm:$0xff] %v548
                %v550 = vld [vmem:[%s536 + $0x60] sm:$0xff]
                %551 = vst [vmem:[%s537 + $0x30] sm:$0xff] %v550
                %v552 = vld [vmem:[%s536 + $0x68] sm:$0xff]
                %553 = vst [vmem:[%s537 + $0x38] sm:$0xff] %v552
                %v554 = vld [vmem:[%s536 + $0x80] sm:$0xff]
                %555 = vst [vmem:[%s537 + $0x40] sm:$0xff] %v554
                %v556 = vld [vmem:[%s536 + $0x88] sm:$0xff]
                %557 = vst [vmem:[%s537 + $0x48] sm:$0xff] %v556
                %v558 = vld [vmem:[%s536 + $0xa0] sm:$0xff]
                %559 = vst [vmem:[%s537 + $0x50] sm:$0xff] %v558
                %v560 = vld [vmem:[%s536 + $0xa8] sm:$0xff]
                %561 = vst [vmem:[%s537 + $0x58] sm:$0xff] %v560
                %v562 = vld [vmem:[%s536 + $0xc0] sm:$0xff]
                %563 = vst [vmem:[%s537 + $0x60] sm:$0xff] %v562
                %v564 = vld [vmem:[%s536 + $0xc8] sm:$0xff]
                %565 = vst [vmem:[%s537 + $0x68] sm:$0xff] %v564
                %v566 = vld [vmem:[%s536 + $0xe0] sm:$0xff]
                %567 = vst [vmem:[%s537 + $0x70] sm:$0xff] %v566
                %v568 = vld [vmem:[%s536 + $0xe8] sm:$0xff]
                %569 = vst [vmem:[%s537 + $0x78] sm:$0xff] %v568
              $region87: #{seq_model_forward.1} parent=81 // loop_footer
                %s535 = sadd.s32 1, %s531
              $region88: #{seq_model_forward.1} parent=81 // loop_footer_branch
                %530 = sbr.rel target = $region84
              $region89: #{seq_model_forward.1} parent=81 // loop_exit
                _
            $region82: #{seq_model_forward.1} parent=77 // pred_fallthru
              _
            // Predicated region
            $region90: #{seq_model_forward.1} parent=77 // pred_check
              _
            $region91: #{seq_model_forward.1} parent=77 // pred_check_branch
              %571 = sbr.rel target = $region93
            $region92: #{seq_model_forward.1} parent=77 // pred_region
              _
            $region93: #{seq_model_forward.1} parent=77 // pred_fallthru
              _
          $region78: #{seq_model_forward.1} parent=73 // pred_fallthru
            _
          %572 = vnop
        $region74: #{seq_model_forward.1} parent=31 // pred_fallthru
          _
        // Predicated region
        $region94: #{seq_model_forward.1} parent=31 // pred_check
          %p573 = pneg %p193
        $region95: #{seq_model_forward.1} parent=31 // pred_check_branch
          %575 = sbr.rel (%p573) target = $region97
        $region96: #{seq_model_forward.1} parent=31 // pred_region
          %p576 = scmp.lt.s32.totalorder %s28, 1
          %s577 = scalar_select %p576, %s28, 1
          %s578 = smul.addr %s577, 8
          %s579 = scalar_lea.vmem %s6, %s578
        $region97: #{seq_model_forward.1} parent=31 // pred_fallthru
          _
        // Predicated region
        $region98: #{seq_model_forward.1} parent=31 // pred_check
          %p580 = pneg %p219
        $region99: #{seq_model_forward.1} parent=31 // pred_check_branch
          %582 = sbr.rel (%p580) target = $region101
        $region100: #{seq_model_forward.1} parent=31 // pred_region
          %p583 = scmp.lt.s32.totalorder %s28, 1
          %s584 = scalar_select %p583, %s28, 1
          %s585 = smul.addr %s584, 8
          %s586 = scalar_lea.vmem %s7, %s585
        $region101: #{seq_model_forward.1} parent=31 // pred_fallthru
          _
        // Predicated region
        $region102: #{seq_model_forward.1} parent=31 // pred_check
          %p587 = pneg %p245
        $region103: #{seq_model_forward.1} parent=31 // pred_check_branch
          %589 = sbr.rel (%p587) target = $region105
        $region104: #{seq_model_forward.1} parent=31 // pred_region
          %p590 = scmp.lt.s32.totalorder %s28, 1
          %s591 = scalar_select %p590, %s28, 1
          %s592 = smul.addr %s591, 8
          %s593 = scalar_lea.vmem %s8, %s592
        $region105: #{seq_model_forward.1} parent=31 // pred_fallthru
          _
        // Predicated region
        $region106: #{seq_model_forward.1} parent=31 // pred_check
          %p594 = pneg %p271
        $region107: #{seq_model_forward.1} parent=31 // pred_check_branch
          %596 = sbr.rel (%p594) target = $region109
        $region108: #{seq_model_forward.1} parent=31 // pred_region
          %p597 = scmp.lt.s32.totalorder %s28, 1
          %s598 = scalar_select %p597, %s28, 1
          %s599 = smul.addr %s598, 8
          %s600 = scalar_lea.vmem %s9, %s599
        $region109: #{seq_model_forward.1} parent=31 // pred_fallthru
          _
      $region32: #{seq_model_forward.1} parent=5 // pred_fallthru
        _
      %p601 = scmp.le.s32.totalorder 1, %s21
      %p602 = scmp.lt.s32.totalorder %s21, 3
      %p603 = pnand %p601, %p602
      %p604 = pneg %p603
      // Predicated region
      $region110: #{seq_model_forward.1} parent=5 // pred_check
        _
      $region111: #{seq_model_forward.1} parent=5 // pred_check_branch
        %606 = sbr.rel (%p603) target = $region113
      $region112: #{seq_model_forward.1} parent=5 // pred_region
        %s607 = ssub.s32 %s21, 1
        %s608 = sand.u32 %s48, 1
        %s609 = sand.u32 %s48, 1
        %s610 = smul.addr %s609, 64
        %s611 = scalar_lea.vmem [#allocation2], %s610
        // Predicated region
        $region114: #{seq_model_forward.1} parent=112 // pred_check
          %p612 = pneg %p61
        $region115: #{seq_model_forward.1} parent=112 // pred_check_branch
          %614 = sbr.rel (%p612) target = $region117
        $region116: #{seq_model_forward.1} parent=112 // pred_region
          _
        $region117: #{seq_model_forward.1} parent=112 // pred_fallthru
          _
        %s615 = sand.u32 %s76, 1
        %s616 = sand.u32 %s76, 1
        %s617 = smul.addr %s616, 128
        %s618 = scalar_lea.vmem [#allocation3], %s617
        // Predicated region
        $region118: #{seq_model_forward.1} parent=112 // pred_check
          %p619 = pneg %p89
        $region119: #{seq_model_forward.1} parent=112 // pred_check_branch
          %621 = sbr.rel (%p619) target = $region121
        $region120: #{seq_model_forward.1} parent=112 // pred_region
          _
        $region121: #{seq_model_forward.1} parent=112 // pred_fallthru
          _
        %s622 = sand.u32 %s48, 1
        %s623 = sand.u32 %s48, 1
        %s624 = smul.addr %s623, 64
        %s625 = scalar_lea.vmem [#allocation2], %s624
        %p626 = pneg %p61
        %p627 = pneg %p58
        %s628 = sand.u32 %s76, 1
        %s629 = sand.u32 %s76, 1
        %s630 = smul.addr %s629, 128
        %s631 = scalar_lea.vmem [#allocation3], %s630
        %p632 = pneg %p89
        %p633 = pneg %p86
        %p634 = pneg %p110
        %p635 = pneg %p107
        %p636 = pneg %p131
        %p637 = pneg %p128
        %p638 = pneg %p152
        %p639 = pneg %p149
        %p640 = pneg %p173
        %p641 = pneg %p170
        %p642 = scmp.lt.s32.totalorder %s30, 1
        %s643 = scalar_select %p642, %s30, 1
        %s644 = smul.addr %s643, 8
        %s645 = scalar_lea.vmem %s6, %s644
        %p646 = pneg %p199
        %p647 = pneg %p196
        %p648 = scmp.lt.s32.totalorder %s30, 1
        %s649 = scalar_select %p648, %s30, 1
        %s650 = smul.addr %s649, 8
        %s651 = scalar_lea.vmem %s7, %s650
        %p652 = pneg %p225
        %p653 = pneg %p222
        %p654 = scmp.lt.s32.totalorder %s30, 1
        %s655 = scalar_select %p654, %s30, 1
        %s656 = smul.addr %s655, 8
        %s657 = scalar_lea.vmem %s8, %s656
        %p658 = pneg %p251
        %p659 = pneg %p248
        %p660 = scmp.lt.s32.totalorder %s30, 1
        %s661 = scalar_select %p660, %s30, 1
        %s662 = smul.addr %s661, 8
        %s663 = scalar_lea.vmem %s9, %s662
        %p664 = pneg %p277
        %p665 = pneg %p274
        %p666 = pneg %p305
        %p667 = pneg %p302
        %s668 = sand.u32 %s292, 1
        %s669 = sand.u32 %s292, 1
        %s670 = smul.addr %s669, 64
        %s671 = scalar_lea.vmem [#allocation4], %s670
        %p672 = pneg %p331
        %p673 = pneg %p328
        %p674 = scmp.lt.s32.totalorder %s30, 1
        %s675 = scalar_select %p674, %s30, 1
        %s676 = smul.addr %s675, 8
        %s677 = scalar_lea.vmem %s11, %s676
        %p678 = pneg %p357
        %p679 = pneg %p354
        %p680 = scmp.lt.s32.totalorder %s30, 1
        %s681 = scalar_select %p680, %s30, 1
        %s682 = smul.addr %s681, 8
        %s683 = scalar_lea.vmem %s12, %s682
        %p684 = pneg %p383
        %p685 = pneg %p380
        %p686 = scmp.lt.s32.totalorder %s30, 1
        %s687 = scalar_select %p686, %s30, 1
        %s688 = smul.addr %s687, 8
        %s689 = scalar_lea.vmem %s13, %s688
        %p690 = pneg %p409
        %p691 = pneg %p406
        %p692 = scmp.lt.s32.totalorder %s30, 1
        %s693 = scalar_select %p692, %s30, 1
        %s694 = smul.addr %s693, 8
        %s695 = scalar_lea.vmem %s14, %s694
        %s696 = smul.u32 8, %s31
        %s697 = smul.u32 8, %s31
        %p698 = scmp.lt.s32.totalorder %s30, 1
        %s699 = scalar_select %p698, %s30, 1
        %s700 = smul.addr %s699, 8
        %s701 = scalar_lea.vmem %s6, %s700
        %p702 = scmp.lt.s32.totalorder %s30, 1
        %s703 = scalar_select %p702, %s30, 1
        %s704 = smul.addr %s703, 8
        %s705 = scalar_lea.vmem %s7, %s704
        %p706 = scmp.lt.s32.totalorder %s30, 1
        %s707 = scalar_select %p706, %s30, 1
        %s708 = smul.addr %s707, 8
        %s709 = scalar_lea.vmem %s8, %s708
        %p710 = scmp.lt.s32.totalorder %s30, 1
        %s711 = scalar_select %p710, %s30, 1
        %s712 = smul.addr %s711, 8
        %s713 = scalar_lea.vmem %s9, %s712
        %s714 = smul.u32 8, %s31
        %p715 = scmp.lt.s32.totalorder %s30, 1
        %s716 = scalar_select %p715, %s30, 1
        %s717 = smul.addr %s716, 8
        %s718 = scalar_lea.vmem %s11, %s717
        %p719 = scmp.lt.s32.totalorder %s30, 1
        %s720 = scalar_select %p719, %s30, 1
        %s721 = smul.addr %s720, 8
        %s722 = scalar_lea.vmem %s12, %s721
        %p723 = scmp.lt.s32.totalorder %s30, 1
        %s724 = scalar_select %p723, %s30, 1
        %s725 = smul.addr %s724, 8
        %s726 = scalar_lea.vmem %s13, %s725
        %p727 = scmp.lt.s32.totalorder %s30, 1
        %s728 = scalar_select %p727, %s30, 1
        %s729 = smul.addr %s728, 8
        %s730 = scalar_lea.vmem %s14, %s729
        %p731 = scmp.eq.s32.totalorder %s31, 0
        // Predicated region
        $region122: #{seq_model_forward.1} parent=112 // pred_check
          %p732 = pneg %p731
        $region123: #{seq_model_forward.1} parent=112 // pred_check_branch
          %734 = sbr.rel (%p732) target = $region125
        $region124: #{seq_model_forward.1} parent=112 // pred_region
          %v735 = vld [vmem:[%s701] sm:$0xff]
          %736 = vst [vmem:[%s718] sm:$0xff] %v735
          %v737 = vld [vmem:[%s705] sm:$0xff]
          %738 = vst [vmem:[%s722] sm:$0xff] %v737
          %v739 = vld [vmem:[%s709] sm:$0xff]
          %740 = vst [vmem:[%s726] sm:$0xff] %v739
          %v741 = vld [vmem:[%s713] sm:$0xff]
          %742 = vst [vmem:[%s730] sm:$0xff] %v741
        $region125: #{seq_model_forward.1} parent=112 // pred_fallthru
          _
        %v743 = vld [vmem:[%s2] sm:$0xff]
        %v744 = vld [vmem:[%s2 + $0x8] sm:$0xff]
        %v745 = vld [vmem:[%s2 + $0x10] sm:$0xff]
        %v746 = vld [vmem:[%s2 + $0x18] sm:$0xff]
        %v747 = vld [vmem:[%s2 + $0x20] sm:$0xff]
        %v748 = vld [vmem:[%s2 + $0x28] sm:$0xff]
        %v749 = vld [vmem:[%s2 + $0x30] sm:$0xff]
        %v750 = vld [vmem:[%s2 + $0x38] sm:$0xff]
        %v751 = vld [vmem:[%s2 + $0x40] sm:$0xff]
        %v752 = vld [vmem:[%s2 + $0x48] sm:$0xff]
        %v753 = vld [vmem:[%s2 + $0x50] sm:$0xff]
        %v754 = vld [vmem:[%s2 + $0x58] sm:$0xff]
        %v755 = vld [vmem:[%s2 + $0x60] sm:$0xff]
        %v756 = vld [vmem:[%s2 + $0x68] sm:$0xff]
        %v757 = vld [vmem:[%s2 + $0x70] sm:$0xff]
        %v758 = vld [vmem:[%s2 + $0x78] sm:$0xff]
        %v759 = vld [vmem:[%s2 + $0x80] sm:$0xff]
        %v760 = vld [vmem:[%s2 + $0x88] sm:$0xff]
        %v761 = vld [vmem:[%s2 + $0x90] sm:$0xff]
        %v762 = vld [vmem:[%s2 + $0x98] sm:$0xff]
        %v763 = vld [vmem:[%s2 + $0xa0] sm:$0xff]
        %v764 = vld [vmem:[%s2 + $0xa8] sm:$0xff]
        %v765 = vld [vmem:[%s2 + $0xb0] sm:$0xff]
        %v766 = vld [vmem:[%s2 + $0xb8] sm:$0xff]
        %v767 = vld [vmem:[%s2 + $0xc0] sm:$0xff]
        %v768 = vld [vmem:[%s2 + $0xc8] sm:$0xff]
        %v769 = vld [vmem:[%s2 + $0xd0] sm:$0xff]
        %v770 = vld [vmem:[%s2 + $0xd8] sm:$0xff]
        %v771 = vld [vmem:[%s2 + $0xe0] sm:$0xff]
        %v772 = vld [vmem:[%s2 + $0xe8] sm:$0xff]
        %v773 = vld [vmem:[%s2 + $0xf0] sm:$0xff]
        %v774 = vld [vmem:[%s2 + $0xf8] sm:$0xff]
        %v775 = vld [vmem:[%s2 + $0x100] sm:$0xff]
        %v776 = vld [vmem:[%s2 + $0x108] sm:$0xff]
        %v777 = vld [vmem:[%s2 + $0x110] sm:$0xff]
        %v778 = vld [vmem:[%s2 + $0x118] sm:$0xff]
        %v779 = vld [vmem:[%s2 + $0x120] sm:$0xff]
        %v780 = vld [vmem:[%s2 + $0x128] sm:$0xff]
        %v781 = vld [vmem:[%s2 + $0x130] sm:$0xff]
        %v782 = vld [vmem:[%s2 + $0x138] sm:$0xff]
        %v783 = vld [vmem:[%s2 + $0x140] sm:$0xff]
        %v784 = vld [vmem:[%s2 + $0x148] sm:$0xff]
        %v785 = vld [vmem:[%s2 + $0x150] sm:$0xff]
        %v786 = vld [vmem:[%s2 + $0x158] sm:$0xff]
        %v787 = vld [vmem:[%s2 + $0x160] sm:$0xff]
        %v788 = vld [vmem:[%s2 + $0x168] sm:$0xff]
        %v789 = vld [vmem:[%s2 + $0x170] sm:$0xff]
        %v790 = vld [vmem:[%s2 + $0x178] sm:$0xff]
        %v791 = vld [vmem:[%s2 + $0x180] sm:$0xff]
        %v792 = vld [vmem:[%s2 + $0x188] sm:$0xff]
        %v793 = vld [vmem:[%s2 + $0x190] sm:$0xff]
        %v794 = vld [vmem:[%s2 + $0x198] sm:$0xff]
        %v795 = vld [vmem:[%s2 + $0x1a0] sm:$0xff]
        %v796 = vld [vmem:[%s2 + $0x1a8] sm:$0xff]
        %v797 = vld [vmem:[%s2 + $0x1b0] sm:$0xff]
        %v798 = vld [vmem:[%s2 + $0x1b8] sm:$0xff]
        %v799 = vld [vmem:[%s2 + $0x1c0] sm:$0xff]
        %v800 = vld [vmem:[%s2 + $0x1c8] sm:$0xff]
        %v801 = vld [vmem:[%s2 + $0x1d0] sm:$0xff]
        %v802 = vld [vmem:[%s2 + $0x1d8] sm:$0xff]
        %v803 = vld [vmem:[%s2 + $0x1e0] sm:$0xff]
        %v804 = vld [vmem:[%s2 + $0x1e8] sm:$0xff]
        %v805 = vld [vmem:[%s2 + $0x1f0] sm:$0xff]
        %v806 = vld [vmem:[%s2 + $0x1f8] sm:$0xff]
        %v807 = vld [vmem:[%s2 + $0x200] sm:$0xff]
        %v808 = vld [vmem:[%s2 + $0x208] sm:$0xff]
        %v809 = vld [vmem:[%s2 + $0x210] sm:$0xff]
        %v810 = vld [vmem:[%s2 + $0x218] sm:$0xff]
        %v811 = vld [vmem:[%s2 + $0x220] sm:$0xff]
        %v812 = vld [vmem:[%s2 + $0x228] sm:$0xff]
        %v813 = vld [vmem:[%s2 + $0x230] sm:$0xff]
        %v814 = vld [vmem:[%s2 + $0x238] sm:$0xff]
        %v815 = vld [vmem:[%s2 + $0x240] sm:$0xff]
        %v816 = vld [vmem:[%s2 + $0x248] sm:$0xff]
        %v817 = vld [vmem:[%s2 + $0x250] sm:$0xff]
        %v818 = vld [vmem:[%s2 + $0x258] sm:$0xff]
        %v819 = vld [vmem:[%s2 + $0x260] sm:$0xff]
        %v820 = vld [vmem:[%s2 + $0x268] sm:$0xff]
        %v821 = vld [vmem:[%s2 + $0x270] sm:$0xff]
        %v822 = vld [vmem:[%s2 + $0x278] sm:$0xff]
        %v823 = vld [vmem:[%s2 + $0x280] sm:$0xff]
        %v824 = vld [vmem:[%s2 + $0x288] sm:$0xff]
        %v825 = vld [vmem:[%s2 + $0x290] sm:$0xff]
        %v826 = vld [vmem:[%s2 + $0x298] sm:$0xff]
        %v827 = vld [vmem:[%s2 + $0x2a0] sm:$0xff]
        %v828 = vld [vmem:[%s2 + $0x2a8] sm:$0xff]
        %v829 = vld [vmem:[%s2 + $0x2b0] sm:$0xff]
        %v830 = vld [vmem:[%s2 + $0x2b8] sm:$0xff]
        %v831 = vld [vmem:[%s2 + $0x2c0] sm:$0xff]
        %v832 = vld [vmem:[%s2 + $0x2c8] sm:$0xff]
        %v833 = vld [vmem:[%s2 + $0x2d0] sm:$0xff]
        %v834 = vld [vmem:[%s2 + $0x2d8] sm:$0xff]
        %v835 = vld [vmem:[%s2 + $0x2e0] sm:$0xff]
        %v836 = vld [vmem:[%s2 + $0x2e8] sm:$0xff]
        %v837 = vld [vmem:[%s2 + $0x2f0] sm:$0xff]
        %v838 = vld [vmem:[%s2 + $0x2f8] sm:$0xff]
        %v839 = vld [vmem:[%s2 + $0x300] sm:$0xff]
        %v840 = vld [vmem:[%s2 + $0x308] sm:$0xff]
        %v841 = vld [vmem:[%s2 + $0x310] sm:$0xff]
        %v842 = vld [vmem:[%s2 + $0x318] sm:$0xff]
        %v843 = vld [vmem:[%s2 + $0x320] sm:$0xff]
        %v844 = vld [vmem:[%s2 + $0x328] sm:$0xff]
        %v845 = vld [vmem:[%s2 + $0x330] sm:$0xff]
        %v846 = vld [vmem:[%s2 + $0x338] sm:$0xff]
        %v847 = vld [vmem:[%s2 + $0x340] sm:$0xff]
        %v848 = vld [vmem:[%s2 + $0x348] sm:$0xff]
        %v849 = vld [vmem:[%s2 + $0x350] sm:$0xff]
        %v850 = vld [vmem:[%s2 + $0x358] sm:$0xff]
        %v851 = vld [vmem:[%s2 + $0x360] sm:$0xff]
        %v852 = vld [vmem:[%s2 + $0x368] sm:$0xff]
        %v853 = vld [vmem:[%s2 + $0x370] sm:$0xff]
        %v854 = vld [vmem:[%s2 + $0x378] sm:$0xff]
        %v855 = vld [vmem:[%s2 + $0x380] sm:$0xff]
        %v856 = vld [vmem:[%s2 + $0x388] sm:$0xff]
        %v857 = vld [vmem:[%s2 + $0x390] sm:$0xff]
        %v858 = vld [vmem:[%s2 + $0x398] sm:$0xff]
        %v859 = vld [vmem:[%s2 + $0x3a0] sm:$0xff]
        %v860 = vld [vmem:[%s2 + $0x3a8] sm:$0xff]
        %v861 = vld [vmem:[%s2 + $0x3b0] sm:$0xff]
        %v862 = vld [vmem:[%s2 + $0x3b8] sm:$0xff]
        %v863 = vld [vmem:[%s2 + $0x3c0] sm:$0xff]
        %v864 = vld [vmem:[%s2 + $0x3c8] sm:$0xff]
        %v865 = vld [vmem:[%s2 + $0x3d0] sm:$0xff]
        %v866 = vld [vmem:[%s2 + $0x3d8] sm:$0xff]
        %v867 = vld [vmem:[%s2 + $0x3e0] sm:$0xff]
        %v868 = vld [vmem:[%s2 + $0x3e8] sm:$0xff]
        %v869 = vld [vmem:[%s2 + $0x3f0] sm:$0xff]
        %v870 = vld [vmem:[%s2 + $0x3f8] sm:$0xff]
        %v871 = vld [vmem:[%s2 + $0x400] sm:$0xff]
        %v872 = vld [vmem:[%s2 + $0x408] sm:$0xff]
        %v873 = vld [vmem:[%s2 + $0x410] sm:$0xff]
        %v874 = vld [vmem:[%s2 + $0x418] sm:$0xff]
        %v875 = vld [vmem:[%s2 + $0x420] sm:$0xff]
        %v876 = vld [vmem:[%s2 + $0x428] sm:$0xff]
        %v877 = vld [vmem:[%s2 + $0x430] sm:$0xff]
        %v878 = vld [vmem:[%s2 + $0x438] sm:$0xff]
        %v879 = vld [vmem:[%s2 + $0x440] sm:$0xff]
        %v880 = vld [vmem:[%s2 + $0x448] sm:$0xff]
        %v881 = vld [vmem:[%s2 + $0x450] sm:$0xff]
        %v882 = vld [vmem:[%s2 + $0x458] sm:$0xff]
        %v883 = vld [vmem:[%s2 + $0x460] sm:$0xff]
        %v884 = vld [vmem:[%s2 + $0x468] sm:$0xff]
        %v885 = vld [vmem:[%s2 + $0x470] sm:$0xff]
        %v886 = vld [vmem:[%s2 + $0x478] sm:$0xff]
        %v887 = vld [vmem:[%s3] sm:$0xff]
        %v888 = vld [vmem:[%s3 + $0x8] sm:$0xff]
        %v889 = vld [vmem:[%s3 + $0x10] sm:$0xff]
        %v890 = vld [vmem:[%s3 + $0x18] sm:$0xff]
        %v891 = vld [vmem:[%s3 + $0x20] sm:$0xff]
        %v892 = vld [vmem:[%s3 + $0x28] sm:$0xff]
        %v893 = vld [vmem:[%s3 + $0x30] sm:$0xff]
        %v894 = vld [vmem:[%s3 + $0x38] sm:$0xff]
        %v895 = vld [vmem:[%s3 + $0x40] sm:$0xff]
        %v896 = vld [vmem:[%s3 + $0x48] sm:$0xff]
        %v897 = vld [vmem:[%s3 + $0x50] sm:$0xff]
        %v898 = vld [vmem:[%s3 + $0x58] sm:$0xff]
        %v899 = vld [vmem:[%s3 + $0x60] sm:$0xff]
        %v900 = vld [vmem:[%s3 + $0x68] sm:$0xff]
        %v901 = vld [vmem:[%s3 + $0x70] sm:$0xff]
        %v902 = vld [vmem:[%s3 + $0x78] sm:$0xff]
        %v903 = vld [vmem:[%s4] sm:$0x1]
        %v904 = vld [vmem:[%s5] sm:$0x1]
        %v905 = vld [vmem:[%s718] sm:$0xff]
        %v906 = vld [vmem:[%s722] sm:$0xff]
        %v907 = vld [vmem:[%s726] sm:$0xff]
        %v908 = vld [vmem:[%s730] sm:$0xff]
        %909 = vmatpush.msra.mxu0 %v788
        %910 = vmatpush.msra.mxu0 %v785
        %911 = vmatpush.msra.mxu0 %v782
        %912 = vmatpush.msra.mxu0 %v779
        %913 = vmatpush.msra.mxu0 %v776
        %914 = vmatpush.msra.mxu0 %v773
        %915 = vmatpush.msra.mxu0 %v770
        %916 = vmatpush.msra.mxu0 %v767
        %917 = vmatpush.msra.mxu0 %v764
        %918 = vmatpush.msra.mxu0 %v761
        %919 = vmatpush.msra.mxu0 %v758
        %920 = vmatpush.msra.mxu0 %v755
        %921 = vmatpush.msra.mxu0 %v752
        %922 = vmatpush.msra.mxu0 %v749
        %923 = vmatpush.msra.mxu0 %v746
        %924 = vmatpush.msra.mxu0 %v743
        %925 = vmatmul.f32.gmra.mxu0 %v906
        %v926 = vpop.f32.mrf.mxu0
        %v927 = vadd.f32 0.0, %v926
        %928 = vdwg.mxu0
        %929 = vmatpush.msra.mxu0 %v836
        %930 = vmatpush.msra.mxu0 %v833
        %931 = vmatpush.msra.mxu0 %v830
        %932 = vmatpush.msra.mxu0 %v827
        %933 = vmatpush.msra.mxu0 %v824
        %934 = vmatpush.msra.mxu0 %v821
        %935 = vmatpush.msra.mxu0 %v818
        %936 = vmatpush.msra.mxu0 %v815
        %937 = vmatpush.msra.mxu0 %v812
        %938 = vmatpush.msra.mxu0 %v809
        %939 = vmatpush.msra.mxu0 %v806
        %940 = vmatpush.msra.mxu0 %v803
        %941 = vmatpush.msra.mxu0 %v800
        %942 = vmatpush.msra.mxu0 %v797
        %943 = vmatpush.msra.mxu0 %v794
        %944 = vmatpush.msra.mxu0 %v791
        %945 = vmatmul.f32.gmra.mxu0 %v905
        %v946 = vpop.f32.mrf.mxu0
        %v947 = vadd.f32 %v927, %v946
        %948 = vdwg.mxu0
        %949 = vmatpush.msra.mxu0 %v884
        %950 = vmatpush.msra.mxu0 %v881
        %951 = vmatpush.msra.mxu0 %v878
        %952 = vmatpush.msra.mxu0 %v875
        %953 = vmatpush.msra.mxu0 %v872
        %954 = vmatpush.msra.mxu0 %v869
        %955 = vmatpush.msra.mxu0 %v866
        %956 = vmatpush.msra.mxu0 %v863
        %957 = vmatpush.msra.mxu0 %v860
        %958 = vmatpush.msra.mxu0 %v857
        %959 = vmatpush.msra.mxu0 %v854
        %960 = vmatpush.msra.mxu0 %v851
        %961 = vmatpush.msra.mxu0 %v848
        %962 = vmatpush.msra.mxu0 %v845
        %963 = vmatpush.msra.mxu0 %v842
        %964 = vmatpush.msra.mxu0 %v839
        %965 = vmatmul.f32.gmra.mxu0 %v907
        %v966 = vpop.f32.mrf.mxu0
        %v967 = vadd.f32 %v947, %v966
        %968 = vdwg.mxu0
        %969 = vmatpush.msra.mxu0 %v789
        %970 = vmatpush.msra.mxu0 %v786
        %971 = vmatpush.msra.mxu0 %v783
        %972 = vmatpush.msra.mxu0 %v780
        %973 = vmatpush.msra.mxu0 %v777
        %974 = vmatpush.msra.mxu0 %v774
        %975 = vmatpush.msra.mxu0 %v771
        %976 = vmatpush.msra.mxu0 %v768
        %977 = vmatpush.msra.mxu0 %v765
        %978 = vmatpush.msra.mxu0 %v762
        %979 = vmatpush.msra.mxu0 %v759
        %980 = vmatpush.msra.mxu0 %v756
        %981 = vmatpush.msra.mxu0 %v753
        %982 = vmatpush.msra.mxu0 %v750
        %983 = vmatpush.msra.mxu0 %v747
        %984 = vmatpush.msra.mxu0 %v744
        %985 = vmatmul.f32.gmra.mxu0 %v906
        %v986 = vpop.f32.mrf.mxu0
        %v987 = vadd.f32 0.0, %v986
        %988 = vdwg.mxu0
        %989 = vmatpush.msra.mxu0 %v837
        %990 = vmatpush.msra.mxu0 %v834
        %991 = vmatpush.msra.mxu0 %v831
        %992 = vmatpush.msra.mxu0 %v828
        %993 = vmatpush.msra.mxu0 %v825
        %994 = vmatpush.msra.mxu0 %v822
        %995 = vmatpush.msra.mxu0 %v819
        %996 = vmatpush.msra.mxu0 %v816
        %997 = vmatpush.msra.mxu0 %v813
        %998 = vmatpush.msra.mxu0 %v810
        %999 = vmatpush.msra.mxu0 %v807
        %1000 = vmatpush.msra.mxu0 %v804
        %1001 = vmatpush.msra.mxu0 %v801
        %1002 = vmatpush.msra.mxu0 %v798
        %1003 = vmatpush.msra.mxu0 %v795
        %1004 = vmatpush.msra.mxu0 %v792
        %1005 = vmatmul.f32.gmra.mxu0 %v905
        %v1006 = vpop.f32.mrf.mxu0
        %v1007 = vadd.f32 %v987, %v1006
        %1008 = vdwg.mxu0
        %1009 = vmatpush.msra.mxu0 %v885
        %1010 = vmatpush.msra.mxu0 %v882
        %1011 = vmatpush.msra.mxu0 %v879
        %1012 = vmatpush.msra.mxu0 %v876
        %1013 = vmatpush.msra.mxu0 %v873
        %1014 = vmatpush.msra.mxu0 %v870
        %1015 = vmatpush.msra.mxu0 %v867
        %1016 = vmatpush.msra.mxu0 %v864
        %1017 = vmatpush.msra.mxu0 %v861
        %1018 = vmatpush.msra.mxu0 %v858
        %1019 = vmatpush.msra.mxu0 %v855
        %1020 = vmatpush.msra.mxu0 %v852
        %1021 = vmatpush.msra.mxu0 %v849
        %1022 = vmatpush.msra.mxu0 %v846
        %1023 = vmatpush.msra.mxu0 %v843
        %1024 = vmatpush.msra.mxu0 %v840
        %1025 = vmatmul.f32.gmra.mxu0 %v907
        %v1026 = vpop.f32.mrf.mxu0
        %v1027 = vadd.f32 %v1007, %v1026
        %1028 = vdwg.mxu0
        %1029 = vmatpush.msra.mxu0 %v790
        %1030 = vmatpush.msra.mxu0 %v787
        %1031 = vmatpush.msra.mxu0 %v784
        %1032 = vmatpush.msra.mxu0 %v781
        %1033 = vmatpush.msra.mxu0 %v778
        %1034 = vmatpush.msra.mxu0 %v775
        %1035 = vmatpush.msra.mxu0 %v772
        %1036 = vmatpush.msra.mxu0 %v769
        %1037 = vmatpush.msra.mxu0 %v766
        %1038 = vmatpush.msra.mxu0 %v763
        %1039 = vmatpush.msra.mxu0 %v760
        %1040 = vmatpush.msra.mxu0 %v757
        %1041 = vmatpush.msra.mxu0 %v754
        %1042 = vmatpush.msra.mxu0 %v751
        %1043 = vmatpush.msra.mxu0 %v748
        %1044 = vmatpush.msra.mxu0 %v745
        %1045 = vmatmul.f32.gmra.mxu0 %v906
        %v1046 = vpop.f32.mrf.mxu0
        %v1047 = vadd.f32 0.0, %v1046
        %1048 = vdwg.mxu0
        %1049 = vmatpush.msra.mxu0 %v838
        %1050 = vmatpush.msra.mxu0 %v835
        %1051 = vmatpush.msra.mxu0 %v832
        %1052 = vmatpush.msra.mxu0 %v829
        %1053 = vmatpush.msra.mxu0 %v826
        %1054 = vmatpush.msra.mxu0 %v823
        %1055 = vmatpush.msra.mxu0 %v820
        %1056 = vmatpush.msra.mxu0 %v817
        %1057 = vmatpush.msra.mxu0 %v814
        %1058 = vmatpush.msra.mxu0 %v811
        %1059 = vmatpush.msra.mxu0 %v808
        %1060 = vmatpush.msra.mxu0 %v805
        %1061 = vmatpush.msra.mxu0 %v802
        %1062 = vmatpush.msra.mxu0 %v799
        %1063 = vmatpush.msra.mxu0 %v796
        %1064 = vmatpush.msra.mxu0 %v793
        %1065 = vmatmul.f32.gmra.mxu0 %v905
        %v1066 = vpop.f32.mrf.mxu0
        %v1067 = vadd.f32 %v1047, %v1066
        %1068 = vdwg.mxu0
        %1069 = vmatpush.msra.mxu0 %v886
        %1070 = vmatpush.msra.mxu0 %v883
        %1071 = vmatpush.msra.mxu0 %v880
        %1072 = vmatpush.msra.mxu0 %v877
        %1073 = vmatpush.msra.mxu0 %v874
        %1074 = vmatpush.msra.mxu0 %v871
        %1075 = vmatpush.msra.mxu0 %v868
        %1076 = vmatpush.msra.mxu0 %v865
        %1077 = vmatpush.msra.mxu0 %v862
        %1078 = vmatpush.msra.mxu0 %v859
        %1079 = vmatpush.msra.mxu0 %v856
        %1080 = vmatpush.msra.mxu0 %v853
        %1081 = vmatpush.msra.mxu0 %v850
        %1082 = vmatpush.msra.mxu0 %v847
        %1083 = vmatpush.msra.mxu0 %v844
        %1084 = vmatpush.msra.mxu0 %v841
        %1085 = vmatmul.f32.gmra.mxu0 %v907
        %v1086 = vpop.f32.mrf.mxu0
        %v1087 = vadd.f32 %v1067, %v1086
        %1088 = vdwg.mxu0
        %v1089 = vld [vmem:[%s611] sm:$0xff]
        %v1090 = vadd.f32 %v1089, %v967
        %v1091 = vld [vmem:[%s618] sm:$0xff]
        %v1092 = vld [vmem:[%s618 + $0x8] sm:$0xff]
        %v1093 = vadd.f32 %v1091, %v1027
        %v1094 = vadd.f32 %v1092, %v1087
        %v1095 = vxor.u32 %v1093, 2147483648
        %v1096 = vxor.u32 %v1094, 2147483648
        %v1097 = vmul.f32 %v1095, 1.442695
        %v1098 = vpow.pop %v1097
        %v1099 = vmul.f32 %v1096, 1.442695
        %v1100 = vpow.pop %v1099
        %v1101 = vadd.f32 %v1098, 1.0
        %v1102 = vadd.f32 %v1100, 1.0
        %v1103 = vrcp.pop %v1101
        %v1104 = vmul.f32 %v1101, %v1103
        %v1105 = vsub.f32 1.0, %v1104
        %v1106 = vmul.f32 %v1103, %v1105
        %v1107 = vadd.f32 %v1103, %v1106
        %vm1108 = vweird.f32 %v1101
        %vm1109 = vweird.f32 %v1103
        %vm1110 = vmor %vm1108, %vm1109
        %v1111 = vsel %vm1110, %v1103, %v1107
        %v1112 = vand.u32 2147483647, %v1101
        %vm1113 = vcmp.eq.f32.partialorder %v1112, 8.507059e+37
        %v1114 = vand.u32 %v1101, 2147483648
        %v1115 = vor.u32 1.1754944e-38, %v1114
        %v1116 = vsel %vm1113, %v1115, %v1111
        %v1117 = vmul.f32 1.0, %v1116
        %v1118 = vrcp.pop %v1102
        %v1119 = vmul.f32 %v1102, %v1118
        %v1120 = vsub.f32 1.0, %v1119
        %v1121 = vmul.f32 %v1118, %v1120
        %v1122 = vadd.f32 %v1118, %v1121
        %vm1123 = vweird.f32 %v1102
        %vm1124 = vweird.f32 %v1118
        %vm1125 = vmor %vm1123, %vm1124
        %v1126 = vsel %vm1125, %v1118, %v1122
        %v1127 = vand.u32 2147483647, %v1102
        %vm1128 = vcmp.eq.f32.partialorder %v1127, 8.507059e+37
        %v1129 = vand.u32 %v1102, 2147483648
        %v1130 = vor.u32 1.1754944e-38, %v1129
        %v1131 = vsel %vm1128, %v1130, %v1126
        %v1132 = vmul.f32 1.0, %v1131
        %v1133 = vsub.f32 %v1090, %v905
        %v1134 = vmul.f32 %v1133, %v1117
        %v1135 = vadd.f32 %v905, %v1134
        %v1136 = vsub.f32 %v906, %v907
        %v1137 = vmul.f32 %v1136, %v1132
        %v1138 = vadd.f32 %v907, %v1137
        %v1139 = vmul.f32 %v1138, 1.8
        %v1140 = vadd.f32 %v1139, 0.1
        %v1141 = vsub.f32 %v1135, %v1140
        %vm1142 = vcmp.gt.f32.partialorder %v1141, 0.0
        %v1143 = vsel %vm1142, 1, 0
        %v1144 = vcvt.s32.f32 %v1143
        %v1145 = vsub.f32 1.0, %v1144
        %v1146 = vmul.f32 %v1145, %v1135
        %v1148 = vperm.slane %v903, 0
        %1150 = vmatpush.msra.mxu0 %v902
        %1151 = vmatpush.msra.mxu0 %v901
        %1152 = vmatpush.msra.mxu0 %v900
        %1153 = vmatpush.msra.mxu0 %v899
        %1154 = vmatpush.msra.mxu0 %v898
        %1155 = vmatpush.msra.mxu0 %v897
        %1156 = vmatpush.msra.mxu0 %v896
        %1157 = vmatpush.msra.mxu0 %v895
        %1158 = vmatpush.msra.mxu0 %v894
        %1159 = vmatpush.msra.mxu0 %v893
        %1160 = vmatpush.msra.mxu0 %v892
        %1161 = vmatpush.msra.mxu0 %v891
        %1162 = vmatpush.msra.mxu0 %v890
        %1163 = vmatpush.msra.mxu0 %v889
        %1164 = vmatpush.msra.mxu0 %v888
        %1165 = vmatpush.msra.mxu0 %v887
        %1166 = vmatmul.f32.gmra.mxu0 %v1144
        %v1167 = vpop.f32.mrf.mxu0
        %v1168 = vadd.f32 %v1148, %v1167
        %1169 = vdwg.mxu0
        %v1170 = vsub.f32 %v1168, %v908
        %v1172 = vperm.slane %v904, 0
        %v1174 = vmul.f32 %v1170, %v1172
        %v1175 = vadd.f32 %v908, %v1174
        %1176 = vst [vmem:[%s671] sm:$0xff] %v1175
        %1177 = vmatpush.msra.mxu0 %v788
        %1178 = vmatpush.msra.mxu0 %v785
        %1179 = vmatpush.msra.mxu0 %v782
        %1180 = vmatpush.msra.mxu0 %v779
        %1181 = vmatpush.msra.mxu0 %v776
        %1182 = vmatpush.msra.mxu0 %v773
        %1183 = vmatpush.msra.mxu0 %v770
        %1184 = vmatpush.msra.mxu0 %v767
        %1185 = vmatpush.msra.mxu0 %v764
        %1186 = vmatpush.msra.mxu0 %v761
        %1187 = vmatpush.msra.mxu0 %v758
        %1188 = vmatpush.msra.mxu0 %v755
        %1189 = vmatpush.msra.mxu0 %v752
        %1190 = vmatpush.msra.mxu0 %v749
        %1191 = vmatpush.msra.mxu0 %v746
        %1192 = vmatpush.msra.mxu0 %v743
        %1193 = vmatmul.f32.gmra.mxu0 %v1144
        %v1194 = vpop.f32.mrf.mxu0
        %v1195 = vadd.f32 0.0, %v1194
        %1196 = vdwg.mxu0
        %1197 = vmatpush.msra.mxu0 %v836
        %1198 = vmatpush.msra.mxu0 %v833
        %1199 = vmatpush.msra.mxu0 %v830
        %1200 = vmatpush.msra.mxu0 %v827
        %1201 = vmatpush.msra.mxu0 %v824
        %1202 = vmatpush.msra.mxu0 %v821
        %1203 = vmatpush.msra.mxu0 %v818
        %1204 = vmatpush.msra.mxu0 %v815
        %1205 = vmatpush.msra.mxu0 %v812
        %1206 = vmatpush.msra.mxu0 %v809
        %1207 = vmatpush.msra.mxu0 %v806
        %1208 = vmatpush.msra.mxu0 %v803
        %1209 = vmatpush.msra.mxu0 %v800
        %1210 = vmatpush.msra.mxu0 %v797
        %1211 = vmatpush.msra.mxu0 %v794
        %1212 = vmatpush.msra.mxu0 %v791
        %1213 = vmatmul.f32.gmra.mxu0 %v1146
        %v1214 = vpop.f32.mrf.mxu0
        %v1215 = vadd.f32 %v1195, %v1214
        %1216 = vdwg.mxu0
        %1217 = vmatpush.msra.mxu0 %v884
        %1218 = vmatpush.msra.mxu0 %v881
        %1219 = vmatpush.msra.mxu0 %v878
        %1220 = vmatpush.msra.mxu0 %v875
        %1221 = vmatpush.msra.mxu0 %v872
        %1222 = vmatpush.msra.mxu0 %v869
        %1223 = vmatpush.msra.mxu0 %v866
        %1224 = vmatpush.msra.mxu0 %v863
        %1225 = vmatpush.msra.mxu0 %v860
        %1226 = vmatpush.msra.mxu0 %v857
        %1227 = vmatpush.msra.mxu0 %v854
        %1228 = vmatpush.msra.mxu0 %v851
        %1229 = vmatpush.msra.mxu0 %v848
        %1230 = vmatpush.msra.mxu0 %v845
        %1231 = vmatpush.msra.mxu0 %v842
        %1232 = vmatpush.msra.mxu0 %v839
        %1233 = vmatmul.f32.gmra.mxu0 %v1138
        %v1234 = vpop.f32.mrf.mxu0
        %v1235 = vadd.f32 %v1215, %v1234
        %1236 = vdwg.mxu0
        %1237 = vmatpush.msra.mxu0 %v789
        %1238 = vmatpush.msra.mxu0 %v786
        %1239 = vmatpush.msra.mxu0 %v783
        %1240 = vmatpush.msra.mxu0 %v780
        %1241 = vmatpush.msra.mxu0 %v777
        %1242 = vmatpush.msra.mxu0 %v774
        %1243 = vmatpush.msra.mxu0 %v771
        %1244 = vmatpush.msra.mxu0 %v768
        %1245 = vmatpush.msra.mxu0 %v765
        %1246 = vmatpush.msra.mxu0 %v762
        %1247 = vmatpush.msra.mxu0 %v759
        %1248 = vmatpush.msra.mxu0 %v756
        %1249 = vmatpush.msra.mxu0 %v753
        %1250 = vmatpush.msra.mxu0 %v750
        %1251 = vmatpush.msra.mxu0 %v747
        %1252 = vmatpush.msra.mxu0 %v744
        %1253 = vmatmul.f32.gmra.mxu0 %v1144
        %v1254 = vpop.f32.mrf.mxu0
        %v1255 = vadd.f32 0.0, %v1254
        %1256 = vdwg.mxu0
        %1257 = vmatpush.msra.mxu0 %v837
        %1258 = vmatpush.msra.mxu0 %v834
        %1259 = vmatpush.msra.mxu0 %v831
        %1260 = vmatpush.msra.mxu0 %v828
        %1261 = vmatpush.msra.mxu0 %v825
        %1262 = vmatpush.msra.mxu0 %v822
        %1263 = vmatpush.msra.mxu0 %v819
        %1264 = vmatpush.msra.mxu0 %v816
        %1265 = vmatpush.msra.mxu0 %v813
        %1266 = vmatpush.msra.mxu0 %v810
        %1267 = vmatpush.msra.mxu0 %v807
        %1268 = vmatpush.msra.mxu0 %v804
        %1269 = vmatpush.msra.mxu0 %v801
        %1270 = vmatpush.msra.mxu0 %v798
        %1271 = vmatpush.msra.mxu0 %v795
        %1272 = vmatpush.msra.mxu0 %v792
        %1273 = vmatmul.f32.gmra.mxu0 %v1146
        %v1274 = vpop.f32.mrf.mxu0
        %v1275 = vadd.f32 %v1255, %v1274
        %1276 = vdwg.mxu0
        %1277 = vmatpush.msra.mxu0 %v885
        %1278 = vmatpush.msra.mxu0 %v882
        %1279 = vmatpush.msra.mxu0 %v879
        %1280 = vmatpush.msra.mxu0 %v876
        %1281 = vmatpush.msra.mxu0 %v873
        %1282 = vmatpush.msra.mxu0 %v870
        %1283 = vmatpush.msra.mxu0 %v867
        %1284 = vmatpush.msra.mxu0 %v864
        %1285 = vmatpush.msra.mxu0 %v861
        %1286 = vmatpush.msra.mxu0 %v858
        %1287 = vmatpush.msra.mxu0 %v855
        %1288 = vmatpush.msra.mxu0 %v852
        %1289 = vmatpush.msra.mxu0 %v849
        %1290 = vmatpush.msra.mxu0 %v846
        %1291 = vmatpush.msra.mxu0 %v843
        %1292 = vmatpush.msra.mxu0 %v840
        %1293 = vmatmul.f32.gmra.mxu0 %v1138
        %v1294 = vpop.f32.mrf.mxu0
        %v1295 = vadd.f32 %v1275, %v1294
        %1296 = vdwg.mxu0
        %1297 = vmatpush.msra.mxu0 %v790
        %1298 = vmatpush.msra.mxu0 %v787
        %1299 = vmatpush.msra.mxu0 %v784
        %1300 = vmatpush.msra.mxu0 %v781
        %1301 = vmatpush.msra.mxu0 %v778
        %1302 = vmatpush.msra.mxu0 %v775
        %1303 = vmatpush.msra.mxu0 %v772
        %1304 = vmatpush.msra.mxu0 %v769
        %1305 = vmatpush.msra.mxu0 %v766
        %1306 = vmatpush.msra.mxu0 %v763
        %1307 = vmatpush.msra.mxu0 %v760
        %1308 = vmatpush.msra.mxu0 %v757
        %1309 = vmatpush.msra.mxu0 %v754
        %1310 = vmatpush.msra.mxu0 %v751
        %1311 = vmatpush.msra.mxu0 %v748
        %1312 = vmatpush.msra.mxu0 %v745
        %1313 = vmatmul.f32.gmra.mxu0 %v1144
        %v1314 = vpop.f32.mrf.mxu0
        %v1315 = vadd.f32 0.0, %v1314
        %1316 = vdwg.mxu0
        %1317 = vmatpush.msra.mxu0 %v838
        %1318 = vmatpush.msra.mxu0 %v835
        %1319 = vmatpush.msra.mxu0 %v832
        %1320 = vmatpush.msra.mxu0 %v829
        %1321 = vmatpush.msra.mxu0 %v826
        %1322 = vmatpush.msra.mxu0 %v823
        %1323 = vmatpush.msra.mxu0 %v820
        %1324 = vmatpush.msra.mxu0 %v817
        %1325 = vmatpush.msra.mxu0 %v814
        %1326 = vmatpush.msra.mxu0 %v811
        %1327 = vmatpush.msra.mxu0 %v808
        %1328 = vmatpush.msra.mxu0 %v805
        %1329 = vmatpush.msra.mxu0 %v802
        %1330 = vmatpush.msra.mxu0 %v799
        %1331 = vmatpush.msra.mxu0 %v796
        %1332 = vmatpush.msra.mxu0 %v793
        %1333 = vmatmul.f32.gmra.mxu0 %v1146
        %v1334 = vpop.f32.mrf.mxu0
        %v1335 = vadd.f32 %v1315, %v1334
        %1336 = vdwg.mxu0
        %1337 = vmatpush.msra.mxu0 %v886
        %1338 = vmatpush.msra.mxu0 %v883
        %1339 = vmatpush.msra.mxu0 %v880
        %1340 = vmatpush.msra.mxu0 %v877
        %1341 = vmatpush.msra.mxu0 %v874
        %1342 = vmatpush.msra.mxu0 %v871
        %1343 = vmatpush.msra.mxu0 %v868
        %1344 = vmatpush.msra.mxu0 %v865
        %1345 = vmatpush.msra.mxu0 %v862
        %1346 = vmatpush.msra.mxu0 %v859
        %1347 = vmatpush.msra.mxu0 %v856
        %1348 = vmatpush.msra.mxu0 %v853
        %1349 = vmatpush.msra.mxu0 %v850
        %1350 = vmatpush.msra.mxu0 %v847
        %1351 = vmatpush.msra.mxu0 %v844
        %1352 = vmatpush.msra.mxu0 %v841
        %1353 = vmatmul.f32.gmra.mxu0 %v1138
        %v1354 = vpop.f32.mrf.mxu0
        %v1355 = vadd.f32 %v1335, %v1354
        %1356 = vdwg.mxu0
        %s1357 = scalar_lea.vmem %s611, 8 [#allocation2]
        %v1358 = vld [vmem:[%s1357] sm:$0xff]
        %v1359 = vadd.f32 %v1358, %v1235
        %s1360 = scalar_lea.vmem %s618, 16 [#allocation3]
        %v1361 = vld [vmem:[%s1360] sm:$0xff]
        %v1362 = vld [vmem:[%s1360 + $0x8] sm:$0xff]
        %v1363 = vadd.f32 %v1361, %v1295
        %v1364 = vadd.f32 %v1362, %v1355
        %v1365 = vxor.u32 %v1363, 2147483648
        %v1366 = vxor.u32 %v1364, 2147483648
        %v1367 = vmul.f32 %v1365, 1.442695
        %v1368 = vpow.pop %v1367
        %v1369 = vmul.f32 %v1366, 1.442695
        %v1370 = vpow.pop %v1369
        %v1371 = vadd.f32 %v1368, 1.0
        %v1372 = vadd.f32 %v1370, 1.0
        %v1373 = vrcp.pop %v1371
        %v1374 = vmul.f32 %v1371, %v1373
        %v1375 = vsub.f32 1.0, %v1374
        %v1376 = vmul.f32 %v1373, %v1375
        %v1377 = vadd.f32 %v1373, %v1376
        %vm1378 = vweird.f32 %v1371
        %vm1379 = vweird.f32 %v1373
        %vm1380 = vmor %vm1378, %vm1379
        %v1381 = vsel %vm1380, %v1373, %v1377
        %v1382 = vand.u32 2147483647, %v1371
        %vm1383 = vcmp.eq.f32.partialorder %v1382, 8.507059e+37
        %v1384 = vand.u32 %v1371, 2147483648
        %v1385 = vor.u32 1.1754944e-38, %v1384
        %v1386 = vsel %vm1383, %v1385, %v1381
        %v1387 = vmul.f32 1.0, %v1386
        %v1388 = vrcp.pop %v1372
        %v1389 = vmul.f32 %v1372, %v1388
        %v1390 = vsub.f32 1.0, %v1389
        %v1391 = vmul.f32 %v1388, %v1390
        %v1392 = vadd.f32 %v1388, %v1391
        %vm1393 = vweird.f32 %v1372
        %vm1394 = vweird.f32 %v1388
        %vm1395 = vmor %vm1393, %vm1394
        %v1396 = vsel %vm1395, %v1388, %v1392
        %v1397 = vand.u32 2147483647, %v1372
        %vm1398 = vcmp.eq.f32.partialorder %v1397, 8.507059e+37
        %v1399 = vand.u32 %v1372, 2147483648
        %v1400 = vor.u32 1.1754944e-38, %v1399
        %v1401 = vsel %vm1398, %v1400, %v1396
        %v1402 = vmul.f32 1.0, %v1401
        %v1403 = vsub.f32 %v1359, %v1146
        %v1404 = vmul.f32 %v1403, %v1387
        %v1405 = vadd.f32 %v1146, %v1404
        %v1406 = vsub.f32 %v1144, %v1138
        %v1407 = vmul.f32 %v1406, %v1402
        %v1408 = vadd.f32 %v1138, %v1407
        %v1409 = vmul.f32 %v1408, 1.8
        %v1410 = vadd.f32 %v1409, 0.1
        %v1411 = vsub.f32 %v1405, %v1410
        %vm1412 = vcmp.gt.f32.partialorder %v1411, 0.0
        %v1413 = vsel %vm1412, 1, 0
        %v1414 = vcvt.s32.f32 %v1413
        %v1415 = vsub.f32 1.0, %v1414
        %v1416 = vmul.f32 %v1415, %v1405
        %1417 = vmatpush.msra.mxu0 %v902
        %1418 = vmatpush.msra.mxu0 %v901
        %1419 = vmatpush.msra.mxu0 %v900
        %1420 = vmatpush.msra.mxu0 %v899
        %1421 = vmatpush.msra.mxu0 %v898
        %1422 = vmatpush.msra.mxu0 %v897
        %1423 = vmatpush.msra.mxu0 %v896
        %1424 = vmatpush.msra.mxu0 %v895
        %1425 = vmatpush.msra.mxu0 %v894
        %1426 = vmatpush.msra.mxu0 %v893
        %1427 = vmatpush.msra.mxu0 %v892
        %1428 = vmatpush.msra.mxu0 %v891
        %1429 = vmatpush.msra.mxu0 %v890
        %1430 = vmatpush.msra.mxu0 %v889
        %1431 = vmatpush.msra.mxu0 %v888
        %1432 = vmatpush.msra.mxu0 %v887
        %1433 = vmatmul.f32.gmra.mxu0 %v1414
        %v1434 = vpop.f32.mrf.mxu0
        %v1435 = vadd.f32 %v1148, %v1434
        %1436 = vdwg.mxu0
        %v1437 = vsub.f32 %v1435, %v1175
        %v1438 = vmul.f32 %v1437, %v1172
        %v1439 = vadd.f32 %v1175, %v1438
        %s1440 = scalar_lea.vmem %s671, 8 [#allocation4]
        %1441 = vst [vmem:[%s1440] sm:$0xff] %v1439
        %1442 = vmatpush.msra.mxu0 %v788
        %1443 = vmatpush.msra.mxu0 %v785
        %1444 = vmatpush.msra.mxu0 %v782
        %1445 = vmatpush.msra.mxu0 %v779
        %1446 = vmatpush.msra.mxu0 %v776
        %1447 = vmatpush.msra.mxu0 %v773
        %1448 = vmatpush.msra.mxu0 %v770
        %1449 = vmatpush.msra.mxu0 %v767
        %1450 = vmatpush.msra.mxu0 %v764
        %1451 = vmatpush.msra.mxu0 %v761
        %1452 = vmatpush.msra.mxu0 %v758
        %1453 = vmatpush.msra.mxu0 %v755
        %1454 = vmatpush.msra.mxu0 %v752
        %1455 = vmatpush.msra.mxu0 %v749
        %1456 = vmatpush.msra.mxu0 %v746
        %1457 = vmatpush.msra.mxu0 %v743
        %1458 = vmatmul.f32.gmra.mxu0 %v1414
        %v1459 = vpop.f32.mrf.mxu0
        %v1460 = vadd.f32 0.0, %v1459
        %1461 = vdwg.mxu0
        %1462 = vmatpush.msra.mxu0 %v836
        %1463 = vmatpush.msra.mxu0 %v833
        %1464 = vmatpush.msra.mxu0 %v830
        %1465 = vmatpush.msra.mxu0 %v827
        %1466 = vmatpush.msra.mxu0 %v824
        %1467 = vmatpush.msra.mxu0 %v821
        %1468 = vmatpush.msra.mxu0 %v818
        %1469 = vmatpush.msra.mxu0 %v815
        %1470 = vmatpush.msra.mxu0 %v812
        %1471 = vmatpush.msra.mxu0 %v809
        %1472 = vmatpush.msra.mxu0 %v806
        %1473 = vmatpush.msra.mxu0 %v803
        %1474 = vmatpush.msra.mxu0 %v800
        %1475 = vmatpush.msra.mxu0 %v797
        %1476 = vmatpush.msra.mxu0 %v794
        %1477 = vmatpush.msra.mxu0 %v791
        %1478 = vmatmul.f32.gmra.mxu0 %v1416
        %v1479 = vpop.f32.mrf.mxu0
        %v1480 = vadd.f32 %v1460, %v1479
        %1481 = vdwg.mxu0
        %1482 = vmatpush.msra.mxu0 %v884
        %1483 = vmatpush.msra.mxu0 %v881
        %1484 = vmatpush.msra.mxu0 %v878
        %1485 = vmatpush.msra.mxu0 %v875
        %1486 = vmatpush.msra.mxu0 %v872
        %1487 = vmatpush.msra.mxu0 %v869
        %1488 = vmatpush.msra.mxu0 %v866
        %1489 = vmatpush.msra.mxu0 %v863
        %1490 = vmatpush.msra.mxu0 %v860
        %1491 = vmatpush.msra.mxu0 %v857
        %1492 = vmatpush.msra.mxu0 %v854
        %1493 = vmatpush.msra.mxu0 %v851
        %1494 = vmatpush.msra.mxu0 %v848
        %1495 = vmatpush.msra.mxu0 %v845
        %1496 = vmatpush.msra.mxu0 %v842
        %1497 = vmatpush.msra.mxu0 %v839
        %1498 = vmatmul.f32.gmra.mxu0 %v1408
        %v1499 = vpop.f32.mrf.mxu0
        %v1500 = vadd.f32 %v1480, %v1499
        %1501 = vdwg.mxu0
        %1502 = vmatpush.msra.mxu0 %v789
        %1503 = vmatpush.msra.mxu0 %v786
        %1504 = vmatpush.msra.mxu0 %v783
        %1505 = vmatpush.msra.mxu0 %v780
        %1506 = vmatpush.msra.mxu0 %v777
        %1507 = vmatpush.msra.mxu0 %v774
        %1508 = vmatpush.msra.mxu0 %v771
        %1509 = vmatpush.msra.mxu0 %v768
        %1510 = vmatpush.msra.mxu0 %v765
        %1511 = vmatpush.msra.mxu0 %v762
        %1512 = vmatpush.msra.mxu0 %v759
        %1513 = vmatpush.msra.mxu0 %v756
        %1514 = vmatpush.msra.mxu0 %v753
        %1515 = vmatpush.msra.mxu0 %v750
        %1516 = vmatpush.msra.mxu0 %v747
        %1517 = vmatpush.msra.mxu0 %v744
        %1518 = vmatmul.f32.gmra.mxu0 %v1414
        %v1519 = vpop.f32.mrf.mxu0
        %v1520 = vadd.f32 0.0, %v1519
        %1521 = vdwg.mxu0
        %1522 = vmatpush.msra.mxu0 %v837
        %1523 = vmatpush.msra.mxu0 %v834
        %1524 = vmatpush.msra.mxu0 %v831
        %1525 = vmatpush.msra.mxu0 %v828
        %1526 = vmatpush.msra.mxu0 %v825
        %1527 = vmatpush.msra.mxu0 %v822
        %1528 = vmatpush.msra.mxu0 %v819
        %1529 = vmatpush.msra.mxu0 %v816
        %1530 = vmatpush.msra.mxu0 %v813
        %1531 = vmatpush.msra.mxu0 %v810
        %1532 = vmatpush.msra.mxu0 %v807
        %1533 = vmatpush.msra.mxu0 %v804
        %1534 = vmatpush.msra.mxu0 %v801
        %1535 = vmatpush.msra.mxu0 %v798
        %1536 = vmatpush.msra.mxu0 %v795
        %1537 = vmatpush.msra.mxu0 %v792
        %1538 = vmatmul.f32.gmra.mxu0 %v1416
        %v1539 = vpop.f32.mrf.mxu0
        %v1540 = vadd.f32 %v1520, %v1539
        %1541 = vdwg.mxu0
        %1542 = vmatpush.msra.mxu0 %v885
        %1543 = vmatpush.msra.mxu0 %v882
        %1544 = vmatpush.msra.mxu0 %v879
        %1545 = vmatpush.msra.mxu0 %v876
        %1546 = vmatpush.msra.mxu0 %v873
        %1547 = vmatpush.msra.mxu0 %v870
        %1548 = vmatpush.msra.mxu0 %v867
        %1549 = vmatpush.msra.mxu0 %v864
        %1550 = vmatpush.msra.mxu0 %v861
        %1551 = vmatpush.msra.mxu0 %v858
        %1552 = vmatpush.msra.mxu0 %v855
        %1553 = vmatpush.msra.mxu0 %v852
        %1554 = vmatpush.msra.mxu0 %v849
        %1555 = vmatpush.msra.mxu0 %v846
        %1556 = vmatpush.msra.mxu0 %v843
        %1557 = vmatpush.msra.mxu0 %v840
        %1558 = vmatmul.f32.gmra.mxu0 %v1408
        %v1559 = vpop.f32.mrf.mxu0
        %v1560 = vadd.f32 %v1540, %v1559
        %1561 = vdwg.mxu0
        %1562 = vmatpush.msra.mxu0 %v790
        %1563 = vmatpush.msra.mxu0 %v787
        %1564 = vmatpush.msra.mxu0 %v784
        %1565 = vmatpush.msra.mxu0 %v781
        %1566 = vmatpush.msra.mxu0 %v778
        %1567 = vmatpush.msra.mxu0 %v775
        %1568 = vmatpush.msra.mxu0 %v772
        %1569 = vmatpush.msra.mxu0 %v769
        %1570 = vmatpush.msra.mxu0 %v766
        %1571 = vmatpush.msra.mxu0 %v763
        %1572 = vmatpush.msra.mxu0 %v760
        %1573 = vmatpush.msra.mxu0 %v757
        %1574 = vmatpush.msra.mxu0 %v754
        %1575 = vmatpush.msra.mxu0 %v751
        %1576 = vmatpush.msra.mxu0 %v748
        %1577 = vmatpush.msra.mxu0 %v745
        %1578 = vmatmul.f32.gmra.mxu0 %v1414
        %v1579 = vpop.f32.mrf.mxu0
        %v1580 = vadd.f32 0.0, %v1579
        %1581 = vdwg.mxu0
        %1582 = vmatpush.msra.mxu0 %v838
        %1583 = vmatpush.msra.mxu0 %v835
        %1584 = vmatpush.msra.mxu0 %v832
        %1585 = vmatpush.msra.mxu0 %v829
        %1586 = vmatpush.msra.mxu0 %v826
        %1587 = vmatpush.msra.mxu0 %v823
        %1588 = vmatpush.msra.mxu0 %v820
        %1589 = vmatpush.msra.mxu0 %v817
        %1590 = vmatpush.msra.mxu0 %v814
        %1591 = vmatpush.msra.mxu0 %v811
        %1592 = vmatpush.msra.mxu0 %v808
        %1593 = vmatpush.msra.mxu0 %v805
        %1594 = vmatpush.msra.mxu0 %v802
        %1595 = vmatpush.msra.mxu0 %v799
        %1596 = vmatpush.msra.mxu0 %v796
        %1597 = vmatpush.msra.mxu0 %v793
        %1598 = vmatmul.f32.gmra.mxu0 %v1416
        %v1599 = vpop.f32.mrf.mxu0
        %v1600 = vadd.f32 %v1580, %v1599
        %1601 = vdwg.mxu0
        %1602 = vmatpush.msra.mxu0 %v886
        %1603 = vmatpush.msra.mxu0 %v883
        %1604 = vmatpush.msra.mxu0 %v880
        %1605 = vmatpush.msra.mxu0 %v877
        %1606 = vmatpush.msra.mxu0 %v874
        %1607 = vmatpush.msra.mxu0 %v871
        %1608 = vmatpush.msra.mxu0 %v868
        %1609 = vmatpush.msra.mxu0 %v865
        %1610 = vmatpush.msra.mxu0 %v862
        %1611 = vmatpush.msra.mxu0 %v859
        %1612 = vmatpush.msra.mxu0 %v856
        %1613 = vmatpush.msra.mxu0 %v853
        %1614 = vmatpush.msra.mxu0 %v850
        %1615 = vmatpush.msra.mxu0 %v847
        %1616 = vmatpush.msra.mxu0 %v844
        %1617 = vmatpush.msra.mxu0 %v841
        %1618 = vmatmul.f32.gmra.mxu0 %v1408
        %v1619 = vpop.f32.mrf.mxu0
        %v1620 = vadd.f32 %v1600, %v1619
        %1621 = vdwg.mxu0
        %s1622 = scalar_lea.vmem %s611, 16 [#allocation2]
        %v1623 = vld [vmem:[%s1622] sm:$0xff]
        %v1624 = vadd.f32 %v1623, %v1500
        %s1625 = scalar_lea.vmem %s618, 32 [#allocation3]
        %v1626 = vld [vmem:[%s1625] sm:$0xff]
        %v1627 = vld [vmem:[%s1625 + $0x8] sm:$0xff]
        %v1628 = vadd.f32 %v1626, %v1560
        %v1629 = vadd.f32 %v1627, %v1620
        %v1630 = vxor.u32 %v1628, 2147483648
        %v1631 = vxor.u32 %v1629, 2147483648
        %v1632 = vmul.f32 %v1630, 1.442695
        %v1633 = vpow.pop %v1632
        %v1634 = vmul.f32 %v1631, 1.442695
        %v1635 = vpow.pop %v1634
        %v1636 = vadd.f32 %v1633, 1.0
        %v1637 = vadd.f32 %v1635, 1.0
        %v1638 = vrcp.pop %v1636
        %v1639 = vmul.f32 %v1636, %v1638
        %v1640 = vsub.f32 1.0, %v1639
        %v1641 = vmul.f32 %v1638, %v1640
        %v1642 = vadd.f32 %v1638, %v1641
        %vm1643 = vweird.f32 %v1636
        %vm1644 = vweird.f32 %v1638
        %vm1645 = vmor %vm1643, %vm1644
        %v1646 = vsel %vm1645, %v1638, %v1642
        %v1647 = vand.u32 2147483647, %v1636
        %vm1648 = vcmp.eq.f32.partialorder %v1647, 8.507059e+37
        %v1649 = vand.u32 %v1636, 2147483648
        %v1650 = vor.u32 1.1754944e-38, %v1649
        %v1651 = vsel %vm1648, %v1650, %v1646
        %v1652 = vmul.f32 1.0, %v1651
        %v1653 = vrcp.pop %v1637
        %v1654 = vmul.f32 %v1637, %v1653
        %v1655 = vsub.f32 1.0, %v1654
        %v1656 = vmul.f32 %v1653, %v1655
        %v1657 = vadd.f32 %v1653, %v1656
        %vm1658 = vweird.f32 %v1637
        %vm1659 = vweird.f32 %v1653
        %vm1660 = vmor %vm1658, %vm1659
        %v1661 = vsel %vm1660, %v1653, %v1657
        %v1662 = vand.u32 2147483647, %v1637
        %vm1663 = vcmp.eq.f32.partialorder %v1662, 8.507059e+37
        %v1664 = vand.u32 %v1637, 2147483648
        %v1665 = vor.u32 1.1754944e-38, %v1664
        %v1666 = vsel %vm1663, %v1665, %v1661
        %v1667 = vmul.f32 1.0, %v1666
        %v1668 = vsub.f32 %v1624, %v1416
        %v1669 = vmul.f32 %v1668, %v1652
        %v1670 = vadd.f32 %v1416, %v1669
        %v1671 = vsub.f32 %v1414, %v1408
        %v1672 = vmul.f32 %v1671, %v1667
        %v1673 = vadd.f32 %v1408, %v1672
        %v1674 = vmul.f32 %v1673, 1.8
        %v1675 = vadd.f32 %v1674, 0.1
        %v1676 = vsub.f32 %v1670, %v1675
        %vm1677 = vcmp.gt.f32.partialorder %v1676, 0.0
        %v1678 = vsel %vm1677, 1, 0
        %v1679 = vcvt.s32.f32 %v1678
        %v1680 = vsub.f32 1.0, %v1679
        %v1681 = vmul.f32 %v1680, %v1670
        %1682 = vmatpush.msra.mxu0 %v902
        %1683 = vmatpush.msra.mxu0 %v901
        %1684 = vmatpush.msra.mxu0 %v900
        %1685 = vmatpush.msra.mxu0 %v899
        %1686 = vmatpush.msra.mxu0 %v898
        %1687 = vmatpush.msra.mxu0 %v897
        %1688 = vmatpush.msra.mxu0 %v896
        %1689 = vmatpush.msra.mxu0 %v895
        %1690 = vmatpush.msra.mxu0 %v894
        %1691 = vmatpush.msra.mxu0 %v893
        %1692 = vmatpush.msra.mxu0 %v892
        %1693 = vmatpush.msra.mxu0 %v891
        %1694 = vmatpush.msra.mxu0 %v890
        %1695 = vmatpush.msra.mxu0 %v889
        %1696 = vmatpush.msra.mxu0 %v888
        %1697 = vmatpush.msra.mxu0 %v887
        %1698 = vmatmul.f32.gmra.mxu0 %v1679
        %v1699 = vpop.f32.mrf.mxu0
        %v1700 = vadd.f32 %v1148, %v1699
        %1701 = vdwg.mxu0
        %v1702 = vsub.f32 %v1700, %v1439
        %v1703 = vmul.f32 %v1702, %v1172
        %v1704 = vadd.f32 %v1439, %v1703
        %s1705 = scalar_lea.vmem %s671, 16 [#allocation4]
        %1706 = vst [vmem:[%s1705] sm:$0xff] %v1704
        %1707 = vmatpush.msra.mxu0 %v788
        %1708 = vmatpush.msra.mxu0 %v785
        %1709 = vmatpush.msra.mxu0 %v782
        %1710 = vmatpush.msra.mxu0 %v779
        %1711 = vmatpush.msra.mxu0 %v776
        %1712 = vmatpush.msra.mxu0 %v773
        %1713 = vmatpush.msra.mxu0 %v770
        %1714 = vmatpush.msra.mxu0 %v767
        %1715 = vmatpush.msra.mxu0 %v764
        %1716 = vmatpush.msra.mxu0 %v761
        %1717 = vmatpush.msra.mxu0 %v758
        %1718 = vmatpush.msra.mxu0 %v755
        %1719 = vmatpush.msra.mxu0 %v752
        %1720 = vmatpush.msra.mxu0 %v749
        %1721 = vmatpush.msra.mxu0 %v746
        %1722 = vmatpush.msra.mxu0 %v743
        %1723 = vmatmul.f32.gmra.mxu0 %v1679
        %v1724 = vpop.f32.mrf.mxu0
        %v1725 = vadd.f32 0.0, %v1724
        %1726 = vdwg.mxu0
        %1727 = vmatpush.msra.mxu0 %v836
        %1728 = vmatpush.msra.mxu0 %v833
        %1729 = vmatpush.msra.mxu0 %v830
        %1730 = vmatpush.msra.mxu0 %v827
        %1731 = vmatpush.msra.mxu0 %v824
        %1732 = vmatpush.msra.mxu0 %v821
        %1733 = vmatpush.msra.mxu0 %v818
        %1734 = vmatpush.msra.mxu0 %v815
        %1735 = vmatpush.msra.mxu0 %v812
        %1736 = vmatpush.msra.mxu0 %v809
        %1737 = vmatpush.msra.mxu0 %v806
        %1738 = vmatpush.msra.mxu0 %v803
        %1739 = vmatpush.msra.mxu0 %v800
        %1740 = vmatpush.msra.mxu0 %v797
        %1741 = vmatpush.msra.mxu0 %v794
        %1742 = vmatpush.msra.mxu0 %v791
        %1743 = vmatmul.f32.gmra.mxu0 %v1681
        %v1744 = vpop.f32.mrf.mxu0
        %v1745 = vadd.f32 %v1725, %v1744
        %1746 = vdwg.mxu0
        %1747 = vmatpush.msra.mxu0 %v884
        %1748 = vmatpush.msra.mxu0 %v881
        %1749 = vmatpush.msra.mxu0 %v878
        %1750 = vmatpush.msra.mxu0 %v875
        %1751 = vmatpush.msra.mxu0 %v872
        %1752 = vmatpush.msra.mxu0 %v869
        %1753 = vmatpush.msra.mxu0 %v866
        %1754 = vmatpush.msra.mxu0 %v863
        %1755 = vmatpush.msra.mxu0 %v860
        %1756 = vmatpush.msra.mxu0 %v857
        %1757 = vmatpush.msra.mxu0 %v854
        %1758 = vmatpush.msra.mxu0 %v851
        %1759 = vmatpush.msra.mxu0 %v848
        %1760 = vmatpush.msra.mxu0 %v845
        %1761 = vmatpush.msra.mxu0 %v842
        %1762 = vmatpush.msra.mxu0 %v839
        %1763 = vmatmul.f32.gmra.mxu0 %v1673
        %v1764 = vpop.f32.mrf.mxu0
        %v1765 = vadd.f32 %v1745, %v1764
        %1766 = vdwg.mxu0
        %1767 = vmatpush.msra.mxu0 %v789
        %1768 = vmatpush.msra.mxu0 %v786
        %1769 = vmatpush.msra.mxu0 %v783
        %1770 = vmatpush.msra.mxu0 %v780
        %1771 = vmatpush.msra.mxu0 %v777
        %1772 = vmatpush.msra.mxu0 %v774
        %1773 = vmatpush.msra.mxu0 %v771
        %1774 = vmatpush.msra.mxu0 %v768
        %1775 = vmatpush.msra.mxu0 %v765
        %1776 = vmatpush.msra.mxu0 %v762
        %1777 = vmatpush.msra.mxu0 %v759
        %1778 = vmatpush.msra.mxu0 %v756
        %1779 = vmatpush.msra.mxu0 %v753
        %1780 = vmatpush.msra.mxu0 %v750
        %1781 = vmatpush.msra.mxu0 %v747
        %1782 = vmatpush.msra.mxu0 %v744
        %1783 = vmatmul.f32.gmra.mxu0 %v1679
        %v1784 = vpop.f32.mrf.mxu0
        %v1785 = vadd.f32 0.0, %v1784
        %1786 = vdwg.mxu0
        %1787 = vmatpush.msra.mxu0 %v837
        %1788 = vmatpush.msra.mxu0 %v834
        %1789 = vmatpush.msra.mxu0 %v831
        %1790 = vmatpush.msra.mxu0 %v828
        %1791 = vmatpush.msra.mxu0 %v825
        %1792 = vmatpush.msra.mxu0 %v822
        %1793 = vmatpush.msra.mxu0 %v819
        %1794 = vmatpush.msra.mxu0 %v816
        %1795 = vmatpush.msra.mxu0 %v813
        %1796 = vmatpush.msra.mxu0 %v810
        %1797 = vmatpush.msra.mxu0 %v807
        %1798 = vmatpush.msra.mxu0 %v804
        %1799 = vmatpush.msra.mxu0 %v801
        %1800 = vmatpush.msra.mxu0 %v798
        %1801 = vmatpush.msra.mxu0 %v795
        %1802 = vmatpush.msra.mxu0 %v792
        %1803 = vmatmul.f32.gmra.mxu0 %v1681
        %v1804 = vpop.f32.mrf.mxu0
        %v1805 = vadd.f32 %v1785, %v1804
        %1806 = vdwg.mxu0
        %1807 = vmatpush.msra.mxu0 %v885
        %1808 = vmatpush.msra.mxu0 %v882
        %1809 = vmatpush.msra.mxu0 %v879
        %1810 = vmatpush.msra.mxu0 %v876
        %1811 = vmatpush.msra.mxu0 %v873
        %1812 = vmatpush.msra.mxu0 %v870
        %1813 = vmatpush.msra.mxu0 %v867
        %1814 = vmatpush.msra.mxu0 %v864
        %1815 = vmatpush.msra.mxu0 %v861
        %1816 = vmatpush.msra.mxu0 %v858
        %1817 = vmatpush.msra.mxu0 %v855
        %1818 = vmatpush.msra.mxu0 %v852
        %1819 = vmatpush.msra.mxu0 %v849
        %1820 = vmatpush.msra.mxu0 %v846
        %1821 = vmatpush.msra.mxu0 %v843
        %1822 = vmatpush.msra.mxu0 %v840
        %1823 = vmatmul.f32.gmra.mxu0 %v1673
        %v1824 = vpop.f32.mrf.mxu0
        %v1825 = vadd.f32 %v1805, %v1824
        %1826 = vdwg.mxu0
        %1827 = vmatpush.msra.mxu0 %v790
        %1828 = vmatpush.msra.mxu0 %v787
        %1829 = vmatpush.msra.mxu0 %v784
        %1830 = vmatpush.msra.mxu0 %v781
        %1831 = vmatpush.msra.mxu0 %v778
        %1832 = vmatpush.msra.mxu0 %v775
        %1833 = vmatpush.msra.mxu0 %v772
        %1834 = vmatpush.msra.mxu0 %v769
        %1835 = vmatpush.msra.mxu0 %v766
        %1836 = vmatpush.msra.mxu0 %v763
        %1837 = vmatpush.msra.mxu0 %v760
        %1838 = vmatpush.msra.mxu0 %v757
        %1839 = vmatpush.msra.mxu0 %v754
        %1840 = vmatpush.msra.mxu0 %v751
        %1841 = vmatpush.msra.mxu0 %v748
        %1842 = vmatpush.msra.mxu0 %v745
        %1843 = vmatmul.f32.gmra.mxu0 %v1679
        %v1844 = vpop.f32.mrf.mxu0
        %v1845 = vadd.f32 0.0, %v1844
        %1846 = vdwg.mxu0
        %1847 = vmatpush.msra.mxu0 %v838
        %1848 = vmatpush.msra.mxu0 %v835
        %1849 = vmatpush.msra.mxu0 %v832
        %1850 = vmatpush.msra.mxu0 %v829
        %1851 = vmatpush.msra.mxu0 %v826
        %1852 = vmatpush.msra.mxu0 %v823
        %1853 = vmatpush.msra.mxu0 %v820
        %1854 = vmatpush.msra.mxu0 %v817
        %1855 = vmatpush.msra.mxu0 %v814
        %1856 = vmatpush.msra.mxu0 %v811
        %1857 = vmatpush.msra.mxu0 %v808
        %1858 = vmatpush.msra.mxu0 %v805
        %1859 = vmatpush.msra.mxu0 %v802
        %1860 = vmatpush.msra.mxu0 %v799
        %1861 = vmatpush.msra.mxu0 %v796
        %1862 = vmatpush.msra.mxu0 %v793
        %1863 = vmatmul.f32.gmra.mxu0 %v1681
        %v1864 = vpop.f32.mrf.mxu0
        %v1865 = vadd.f32 %v1845, %v1864
        %1866 = vdwg.mxu0
        %1867 = vmatpush.msra.mxu0 %v886
        %1868 = vmatpush.msra.mxu0 %v883
        %1869 = vmatpush.msra.mxu0 %v880
        %1870 = vmatpush.msra.mxu0 %v877
        %1871 = vmatpush.msra.mxu0 %v874
        %1872 = vmatpush.msra.mxu0 %v871
        %1873 = vmatpush.msra.mxu0 %v868
        %1874 = vmatpush.msra.mxu0 %v865
        %1875 = vmatpush.msra.mxu0 %v862
        %1876 = vmatpush.msra.mxu0 %v859
        %1877 = vmatpush.msra.mxu0 %v856
        %1878 = vmatpush.msra.mxu0 %v853
        %1879 = vmatpush.msra.mxu0 %v850
        %1880 = vmatpush.msra.mxu0 %v847
        %1881 = vmatpush.msra.mxu0 %v844
        %1882 = vmatpush.msra.mxu0 %v841
        %1883 = vmatmul.f32.gmra.mxu0 %v1673
        %v1884 = vpop.f32.mrf.mxu0
        %v1885 = vadd.f32 %v1865, %v1884
        %1886 = vdwg.mxu0
        %s1887 = scalar_lea.vmem %s611, 24 [#allocation2]
        %v1888 = vld [vmem:[%s1887] sm:$0xff]
        %v1889 = vadd.f32 %v1888, %v1765
        %s1890 = scalar_lea.vmem %s618, 48 [#allocation3]
        %v1891 = vld [vmem:[%s1890] sm:$0xff]
        %v1892 = vld [vmem:[%s1890 + $0x8] sm:$0xff]
        %v1893 = vadd.f32 %v1891, %v1825
        %v1894 = vadd.f32 %v1892, %v1885
        %v1895 = vxor.u32 %v1893, 2147483648
        %v1896 = vxor.u32 %v1894, 2147483648
        %v1897 = vmul.f32 %v1895, 1.442695
        %v1898 = vpow.pop %v1897
        %v1899 = vmul.f32 %v1896, 1.442695
        %v1900 = vpow.pop %v1899
        %v1901 = vadd.f32 %v1898, 1.0
        %v1902 = vadd.f32 %v1900, 1.0
        %v1903 = vrcp.pop %v1901
        %v1904 = vmul.f32 %v1901, %v1903
        %v1905 = vsub.f32 1.0, %v1904
        %v1906 = vmul.f32 %v1903, %v1905
        %v1907 = vadd.f32 %v1903, %v1906
        %vm1908 = vweird.f32 %v1901
        %vm1909 = vweird.f32 %v1903
        %vm1910 = vmor %vm1908, %vm1909
        %v1911 = vsel %vm1910, %v1903, %v1907
        %v1912 = vand.u32 2147483647, %v1901
        %vm1913 = vcmp.eq.f32.partialorder %v1912, 8.507059e+37
        %v1914 = vand.u32 %v1901, 2147483648
        %v1915 = vor.u32 1.1754944e-38, %v1914
        %v1916 = vsel %vm1913, %v1915, %v1911
        %v1917 = vmul.f32 1.0, %v1916
        %v1918 = vrcp.pop %v1902
        %v1919 = vmul.f32 %v1902, %v1918
        %v1920 = vsub.f32 1.0, %v1919
        %v1921 = vmul.f32 %v1918, %v1920
        %v1922 = vadd.f32 %v1918, %v1921
        %vm1923 = vweird.f32 %v1902
        %vm1924 = vweird.f32 %v1918
        %vm1925 = vmor %vm1923, %vm1924
        %v1926 = vsel %vm1925, %v1918, %v1922
        %v1927 = vand.u32 2147483647, %v1902
        %vm1928 = vcmp.eq.f32.partialorder %v1927, 8.507059e+37
        %v1929 = vand.u32 %v1902, 2147483648
        %v1930 = vor.u32 1.1754944e-38, %v1929
        %v1931 = vsel %vm1928, %v1930, %v1926
        %v1932 = vmul.f32 1.0, %v1931
        %v1933 = vsub.f32 %v1889, %v1681
        %v1934 = vmul.f32 %v1933, %v1917
        %v1935 = vadd.f32 %v1681, %v1934
        %v1936 = vsub.f32 %v1679, %v1673
        %v1937 = vmul.f32 %v1936, %v1932
        %v1938 = vadd.f32 %v1673, %v1937
        %v1939 = vmul.f32 %v1938, 1.8
        %v1940 = vadd.f32 %v1939, 0.1
        %v1941 = vsub.f32 %v1935, %v1940
        %vm1942 = vcmp.gt.f32.partialorder %v1941, 0.0
        %v1943 = vsel %vm1942, 1, 0
        %v1944 = vcvt.s32.f32 %v1943
        %v1945 = vsub.f32 1.0, %v1944
        %v1946 = vmul.f32 %v1945, %v1935
        %1947 = vmatpush.msra.mxu0 %v902
        %1948 = vmatpush.msra.mxu0 %v901
        %1949 = vmatpush.msra.mxu0 %v900
        %1950 = vmatpush.msra.mxu0 %v899
        %1951 = vmatpush.msra.mxu0 %v898
        %1952 = vmatpush.msra.mxu0 %v897
        %1953 = vmatpush.msra.mxu0 %v896
        %1954 = vmatpush.msra.mxu0 %v895
        %1955 = vmatpush.msra.mxu0 %v894
        %1956 = vmatpush.msra.mxu0 %v893
        %1957 = vmatpush.msra.mxu0 %v892
        %1958 = vmatpush.msra.mxu0 %v891
        %1959 = vmatpush.msra.mxu0 %v890
        %1960 = vmatpush.msra.mxu0 %v889
        %1961 = vmatpush.msra.mxu0 %v888
        %1962 = vmatpush.msra.mxu0 %v887
        %1963 = vmatmul.f32.gmra.mxu0 %v1944
        %v1964 = vpop.f32.mrf.mxu0
        %v1965 = vadd.f32 %v1148, %v1964
        %1966 = vdwg.mxu0
        %v1967 = vsub.f32 %v1965, %v1704
        %v1968 = vmul.f32 %v1967, %v1172
        %v1969 = vadd.f32 %v1704, %v1968
        %s1970 = scalar_lea.vmem %s671, 24 [#allocation4]
        %1971 = vst [vmem:[%s1970] sm:$0xff] %v1969
        %1972 = vmatpush.msra.mxu0 %v788
        %1973 = vmatpush.msra.mxu0 %v785
        %1974 = vmatpush.msra.mxu0 %v782
        %1975 = vmatpush.msra.mxu0 %v779
        %1976 = vmatpush.msra.mxu0 %v776
        %1977 = vmatpush.msra.mxu0 %v773
        %1978 = vmatpush.msra.mxu0 %v770
        %1979 = vmatpush.msra.mxu0 %v767
        %1980 = vmatpush.msra.mxu0 %v764
        %1981 = vmatpush.msra.mxu0 %v761
        %1982 = vmatpush.msra.mxu0 %v758
        %1983 = vmatpush.msra.mxu0 %v755
        %1984 = vmatpush.msra.mxu0 %v752
        %1985 = vmatpush.msra.mxu0 %v749
        %1986 = vmatpush.msra.mxu0 %v746
        %1987 = vmatpush.msra.mxu0 %v743
        %1988 = vmatmul.f32.gmra.mxu0 %v1944
        %v1989 = vpop.f32.mrf.mxu0
        %v1990 = vadd.f32 0.0, %v1989
        %1991 = vdwg.mxu0
        %1992 = vmatpush.msra.mxu0 %v836
        %1993 = vmatpush.msra.mxu0 %v833
        %1994 = vmatpush.msra.mxu0 %v830
        %1995 = vmatpush.msra.mxu0 %v827
        %1996 = vmatpush.msra.mxu0 %v824
        %1997 = vmatpush.msra.mxu0 %v821
        %1998 = vmatpush.msra.mxu0 %v818
        %1999 = vmatpush.msra.mxu0 %v815
        %2000 = vmatpush.msra.mxu0 %v812
        %2001 = vmatpush.msra.mxu0 %v809
        %2002 = vmatpush.msra.mxu0 %v806
        %2003 = vmatpush.msra.mxu0 %v803
        %2004 = vmatpush.msra.mxu0 %v800
        %2005 = vmatpush.msra.mxu0 %v797
        %2006 = vmatpush.msra.mxu0 %v794
        %2007 = vmatpush.msra.mxu0 %v791
        %2008 = vmatmul.f32.gmra.mxu0 %v1946
        %v2009 = vpop.f32.mrf.mxu0
        %v2010 = vadd.f32 %v1990, %v2009
        %2011 = vdwg.mxu0
        %2012 = vmatpush.msra.mxu0 %v884
        %2013 = vmatpush.msra.mxu0 %v881
        %2014 = vmatpush.msra.mxu0 %v878
        %2015 = vmatpush.msra.mxu0 %v875
        %2016 = vmatpush.msra.mxu0 %v872
        %2017 = vmatpush.msra.mxu0 %v869
        %2018 = vmatpush.msra.mxu0 %v866
        %2019 = vmatpush.msra.mxu0 %v863
        %2020 = vmatpush.msra.mxu0 %v860
        %2021 = vmatpush.msra.mxu0 %v857
        %2022 = vmatpush.msra.mxu0 %v854
        %2023 = vmatpush.msra.mxu0 %v851
        %2024 = vmatpush.msra.mxu0 %v848
        %2025 = vmatpush.msra.mxu0 %v845
        %2026 = vmatpush.msra.mxu0 %v842
        %2027 = vmatpush.msra.mxu0 %v839
        %2028 = vmatmul.f32.gmra.mxu0 %v1938
        %v2029 = vpop.f32.mrf.mxu0
        %v2030 = vadd.f32 %v2010, %v2029
        %2031 = vdwg.mxu0
        %2032 = vmatpush.msra.mxu0 %v789
        %2033 = vmatpush.msra.mxu0 %v786
        %2034 = vmatpush.msra.mxu0 %v783
        %2035 = vmatpush.msra.mxu0 %v780
        %2036 = vmatpush.msra.mxu0 %v777
        %2037 = vmatpush.msra.mxu0 %v774
        %2038 = vmatpush.msra.mxu0 %v771
        %2039 = vmatpush.msra.mxu0 %v768
        %2040 = vmatpush.msra.mxu0 %v765
        %2041 = vmatpush.msra.mxu0 %v762
        %2042 = vmatpush.msra.mxu0 %v759
        %2043 = vmatpush.msra.mxu0 %v756
        %2044 = vmatpush.msra.mxu0 %v753
        %2045 = vmatpush.msra.mxu0 %v750
        %2046 = vmatpush.msra.mxu0 %v747
        %2047 = vmatpush.msra.mxu0 %v744
        %2048 = vmatmul.f32.gmra.mxu0 %v1944
        %v2049 = vpop.f32.mrf.mxu0
        %v2050 = vadd.f32 0.0, %v2049
        %2051 = vdwg.mxu0
        %2052 = vmatpush.msra.mxu0 %v837
        %2053 = vmatpush.msra.mxu0 %v834
        %2054 = vmatpush.msra.mxu0 %v831
        %2055 = vmatpush.msra.mxu0 %v828
        %2056 = vmatpush.msra.mxu0 %v825
        %2057 = vmatpush.msra.mxu0 %v822
        %2058 = vmatpush.msra.mxu0 %v819
        %2059 = vmatpush.msra.mxu0 %v816
        %2060 = vmatpush.msra.mxu0 %v813
        %2061 = vmatpush.msra.mxu0 %v810
        %2062 = vmatpush.msra.mxu0 %v807
        %2063 = vmatpush.msra.mxu0 %v804
        %2064 = vmatpush.msra.mxu0 %v801
        %2065 = vmatpush.msra.mxu0 %v798
        %2066 = vmatpush.msra.mxu0 %v795
        %2067 = vmatpush.msra.mxu0 %v792
        %2068 = vmatmul.f32.gmra.mxu0 %v1946
        %v2069 = vpop.f32.mrf.mxu0
        %v2070 = vadd.f32 %v2050, %v2069
        %2071 = vdwg.mxu0
        %2072 = vmatpush.msra.mxu0 %v885
        %2073 = vmatpush.msra.mxu0 %v882
        %2074 = vmatpush.msra.mxu0 %v879
        %2075 = vmatpush.msra.mxu0 %v876
        %2076 = vmatpush.msra.mxu0 %v873
        %2077 = vmatpush.msra.mxu0 %v870
        %2078 = vmatpush.msra.mxu0 %v867
        %2079 = vmatpush.msra.mxu0 %v864
        %2080 = vmatpush.msra.mxu0 %v861
        %2081 = vmatpush.msra.mxu0 %v858
        %2082 = vmatpush.msra.mxu0 %v855
        %2083 = vmatpush.msra.mxu0 %v852
        %2084 = vmatpush.msra.mxu0 %v849
        %2085 = vmatpush.msra.mxu0 %v846
        %2086 = vmatpush.msra.mxu0 %v843
        %2087 = vmatpush.msra.mxu0 %v840
        %2088 = vmatmul.f32.gmra.mxu0 %v1938
        %v2089 = vpop.f32.mrf.mxu0
        %v2090 = vadd.f32 %v2070, %v2089
        %2091 = vdwg.mxu0
        %2092 = vmatpush.msra.mxu0 %v790
        %2093 = vmatpush.msra.mxu0 %v787
        %2094 = vmatpush.msra.mxu0 %v784
        %2095 = vmatpush.msra.mxu0 %v781
        %2096 = vmatpush.msra.mxu0 %v778
        %2097 = vmatpush.msra.mxu0 %v775
        %2098 = vmatpush.msra.mxu0 %v772
        %2099 = vmatpush.msra.mxu0 %v769
        %2100 = vmatpush.msra.mxu0 %v766
        %2101 = vmatpush.msra.mxu0 %v763
        %2102 = vmatpush.msra.mxu0 %v760
        %2103 = vmatpush.msra.mxu0 %v757
        %2104 = vmatpush.msra.mxu0 %v754
        %2105 = vmatpush.msra.mxu0 %v751
        %2106 = vmatpush.msra.mxu0 %v748
        %2107 = vmatpush.msra.mxu0 %v745
        %2108 = vmatmul.f32.gmra.mxu0 %v1944
        %v2109 = vpop.f32.mrf.mxu0
        %v2110 = vadd.f32 0.0, %v2109
        %2111 = vdwg.mxu0
        %2112 = vmatpush.msra.mxu0 %v838
        %2113 = vmatpush.msra.mxu0 %v835
        %2114 = vmatpush.msra.mxu0 %v832
        %2115 = vmatpush.msra.mxu0 %v829
        %2116 = vmatpush.msra.mxu0 %v826
        %2117 = vmatpush.msra.mxu0 %v823
        %2118 = vmatpush.msra.mxu0 %v820
        %2119 = vmatpush.msra.mxu0 %v817
        %2120 = vmatpush.msra.mxu0 %v814
        %2121 = vmatpush.msra.mxu0 %v811
        %2122 = vmatpush.msra.mxu0 %v808
        %2123 = vmatpush.msra.mxu0 %v805
        %2124 = vmatpush.msra.mxu0 %v802
        %2125 = vmatpush.msra.mxu0 %v799
        %2126 = vmatpush.msra.mxu0 %v796
        %2127 = vmatpush.msra.mxu0 %v793
        %2128 = vmatmul.f32.gmra.mxu0 %v1946
        %v2129 = vpop.f32.mrf.mxu0
        %v2130 = vadd.f32 %v2110, %v2129
        %2131 = vdwg.mxu0
        %2132 = vmatpush.msra.mxu0 %v886
        %2133 = vmatpush.msra.mxu0 %v883
        %2134 = vmatpush.msra.mxu0 %v880
        %2135 = vmatpush.msra.mxu0 %v877
        %2136 = vmatpush.msra.mxu0 %v874
        %2137 = vmatpush.msra.mxu0 %v871
        %2138 = vmatpush.msra.mxu0 %v868
        %2139 = vmatpush.msra.mxu0 %v865
        %2140 = vmatpush.msra.mxu0 %v862
        %2141 = vmatpush.msra.mxu0 %v859
        %2142 = vmatpush.msra.mxu0 %v856
        %2143 = vmatpush.msra.mxu0 %v853
        %2144 = vmatpush.msra.mxu0 %v850
        %2145 = vmatpush.msra.mxu0 %v847
        %2146 = vmatpush.msra.mxu0 %v844
        %2147 = vmatpush.msra.mxu0 %v841
        %2148 = vmatmul.f32.gmra.mxu0 %v1938
        %v2149 = vpop.f32.mrf.mxu0
        %v2150 = vadd.f32 %v2130, %v2149
        %2151 = vdwg.mxu0
        %s2152 = scalar_lea.vmem %s611, 32 [#allocation2]
        %v2153 = vld [vmem:[%s2152] sm:$0xff]
        %v2154 = vadd.f32 %v2153, %v2030
        %s2155 = scalar_lea.vmem %s618, 64 [#allocation3]
        %v2156 = vld [vmem:[%s2155] sm:$0xff]
        %v2157 = vld [vmem:[%s2155 + $0x8] sm:$0xff]
        %v2158 = vadd.f32 %v2156, %v2090
        %v2159 = vadd.f32 %v2157, %v2150
        %v2160 = vxor.u32 %v2158, 2147483648
        %v2161 = vxor.u32 %v2159, 2147483648
        %v2162 = vmul.f32 %v2160, 1.442695
        %v2163 = vpow.pop %v2162
        %v2164 = vmul.f32 %v2161, 1.442695
        %v2165 = vpow.pop %v2164
        %v2166 = vadd.f32 %v2163, 1.0
        %v2167 = vadd.f32 %v2165, 1.0
        %v2168 = vrcp.pop %v2166
        %v2169 = vmul.f32 %v2166, %v2168
        %v2170 = vsub.f32 1.0, %v2169
        %v2171 = vmul.f32 %v2168, %v2170
        %v2172 = vadd.f32 %v2168, %v2171
        %vm2173 = vweird.f32 %v2166
        %vm2174 = vweird.f32 %v2168
        %vm2175 = vmor %vm2173, %vm2174
        %v2176 = vsel %vm2175, %v2168, %v2172
        %v2177 = vand.u32 2147483647, %v2166
        %vm2178 = vcmp.eq.f32.partialorder %v2177, 8.507059e+37
        %v2179 = vand.u32 %v2166, 2147483648
        %v2180 = vor.u32 1.1754944e-38, %v2179
        %v2181 = vsel %vm2178, %v2180, %v2176
        %v2182 = vmul.f32 1.0, %v2181
        %v2183 = vrcp.pop %v2167
        %v2184 = vmul.f32 %v2167, %v2183
        %v2185 = vsub.f32 1.0, %v2184
        %v2186 = vmul.f32 %v2183, %v2185
        %v2187 = vadd.f32 %v2183, %v2186
        %vm2188 = vweird.f32 %v2167
        %vm2189 = vweird.f32 %v2183
        %vm2190 = vmor %vm2188, %vm2189
        %v2191 = vsel %vm2190, %v2183, %v2187
        %v2192 = vand.u32 2147483647, %v2167
        %vm2193 = vcmp.eq.f32.partialorder %v2192, 8.507059e+37
        %v2194 = vand.u32 %v2167, 2147483648
        %v2195 = vor.u32 1.1754944e-38, %v2194
        %v2196 = vsel %vm2193, %v2195, %v2191
        %v2197 = vmul.f32 1.0, %v2196
        %v2198 = vsub.f32 %v2154, %v1946
        %v2199 = vmul.f32 %v2198, %v2182
        %v2200 = vadd.f32 %v1946, %v2199
        %v2201 = vsub.f32 %v1944, %v1938
        %v2202 = vmul.f32 %v2201, %v2197
        %v2203 = vadd.f32 %v1938, %v2202
        %v2204 = vmul.f32 %v2203, 1.8
        %v2205 = vadd.f32 %v2204, 0.1
        %v2206 = vsub.f32 %v2200, %v2205
        %vm2207 = vcmp.gt.f32.partialorder %v2206, 0.0
        %v2208 = vsel %vm2207, 1, 0
        %v2209 = vcvt.s32.f32 %v2208
        %v2210 = vsub.f32 1.0, %v2209
        %v2211 = vmul.f32 %v2210, %v2200
        %2212 = vmatpush.msra.mxu0 %v902
        %2213 = vmatpush.msra.mxu0 %v901
        %2214 = vmatpush.msra.mxu0 %v900
        %2215 = vmatpush.msra.mxu0 %v899
        %2216 = vmatpush.msra.mxu0 %v898
        %2217 = vmatpush.msra.mxu0 %v897
        %2218 = vmatpush.msra.mxu0 %v896
        %2219 = vmatpush.msra.mxu0 %v895
        %2220 = vmatpush.msra.mxu0 %v894
        %2221 = vmatpush.msra.mxu0 %v893
        %2222 = vmatpush.msra.mxu0 %v892
        %2223 = vmatpush.msra.mxu0 %v891
        %2224 = vmatpush.msra.mxu0 %v890
        %2225 = vmatpush.msra.mxu0 %v889
        %2226 = vmatpush.msra.mxu0 %v888
        %2227 = vmatpush.msra.mxu0 %v887
        %2228 = vmatmul.f32.gmra.mxu0 %v2209
        %v2229 = vpop.f32.mrf.mxu0
        %v2230 = vadd.f32 %v1148, %v2229
        %2231 = vdwg.mxu0
        %v2232 = vsub.f32 %v2230, %v1969
        %v2233 = vmul.f32 %v2232, %v1172
        %v2234 = vadd.f32 %v1969, %v2233
        %s2235 = scalar_lea.vmem %s671, 32 [#allocation4]
        %2236 = vst [vmem:[%s2235] sm:$0xff] %v2234
        %2237 = vmatpush.msra.mxu0 %v788
        %2238 = vmatpush.msra.mxu0 %v785
        %2239 = vmatpush.msra.mxu0 %v782
        %2240 = vmatpush.msra.mxu0 %v779
        %2241 = vmatpush.msra.mxu0 %v776
        %2242 = vmatpush.msra.mxu0 %v773
        %2243 = vmatpush.msra.mxu0 %v770
        %2244 = vmatpush.msra.mxu0 %v767
        %2245 = vmatpush.msra.mxu0 %v764
        %2246 = vmatpush.msra.mxu0 %v761
        %2247 = vmatpush.msra.mxu0 %v758
        %2248 = vmatpush.msra.mxu0 %v755
        %2249 = vmatpush.msra.mxu0 %v752
        %2250 = vmatpush.msra.mxu0 %v749
        %2251 = vmatpush.msra.mxu0 %v746
        %2252 = vmatpush.msra.mxu0 %v743
        %2253 = vmatmul.f32.gmra.mxu0 %v2209
        %v2254 = vpop.f32.mrf.mxu0
        %v2255 = vadd.f32 0.0, %v2254
        %2256 = vdwg.mxu0
        %2257 = vmatpush.msra.mxu0 %v836
        %2258 = vmatpush.msra.mxu0 %v833
        %2259 = vmatpush.msra.mxu0 %v830
        %2260 = vmatpush.msra.mxu0 %v827
        %2261 = vmatpush.msra.mxu0 %v824
        %2262 = vmatpush.msra.mxu0 %v821
        %2263 = vmatpush.msra.mxu0 %v818
        %2264 = vmatpush.msra.mxu0 %v815
        %2265 = vmatpush.msra.mxu0 %v812
        %2266 = vmatpush.msra.mxu0 %v809
        %2267 = vmatpush.msra.mxu0 %v806
        %2268 = vmatpush.msra.mxu0 %v803
        %2269 = vmatpush.msra.mxu0 %v800
        %2270 = vmatpush.msra.mxu0 %v797
        %2271 = vmatpush.msra.mxu0 %v794
        %2272 = vmatpush.msra.mxu0 %v791
        %2273 = vmatmul.f32.gmra.mxu0 %v2211
        %v2274 = vpop.f32.mrf.mxu0
        %v2275 = vadd.f32 %v2255, %v2274
        %2276 = vdwg.mxu0
        %2277 = vmatpush.msra.mxu0 %v884
        %2278 = vmatpush.msra.mxu0 %v881
        %2279 = vmatpush.msra.mxu0 %v878
        %2280 = vmatpush.msra.mxu0 %v875
        %2281 = vmatpush.msra.mxu0 %v872
        %2282 = vmatpush.msra.mxu0 %v869
        %2283 = vmatpush.msra.mxu0 %v866
        %2284 = vmatpush.msra.mxu0 %v863
        %2285 = vmatpush.msra.mxu0 %v860
        %2286 = vmatpush.msra.mxu0 %v857
        %2287 = vmatpush.msra.mxu0 %v854
        %2288 = vmatpush.msra.mxu0 %v851
        %2289 = vmatpush.msra.mxu0 %v848
        %2290 = vmatpush.msra.mxu0 %v845
        %2291 = vmatpush.msra.mxu0 %v842
        %2292 = vmatpush.msra.mxu0 %v839
        %2293 = vmatmul.f32.gmra.mxu0 %v2203
        %v2294 = vpop.f32.mrf.mxu0
        %v2295 = vadd.f32 %v2275, %v2294
        %2296 = vdwg.mxu0
        %2297 = vmatpush.msra.mxu0 %v789
        %2298 = vmatpush.msra.mxu0 %v786
        %2299 = vmatpush.msra.mxu0 %v783
        %2300 = vmatpush.msra.mxu0 %v780
        %2301 = vmatpush.msra.mxu0 %v777
        %2302 = vmatpush.msra.mxu0 %v774
        %2303 = vmatpush.msra.mxu0 %v771
        %2304 = vmatpush.msra.mxu0 %v768
        %2305 = vmatpush.msra.mxu0 %v765
        %2306 = vmatpush.msra.mxu0 %v762
        %2307 = vmatpush.msra.mxu0 %v759
        %2308 = vmatpush.msra.mxu0 %v756
        %2309 = vmatpush.msra.mxu0 %v753
        %2310 = vmatpush.msra.mxu0 %v750
        %2311 = vmatpush.msra.mxu0 %v747
        %2312 = vmatpush.msra.mxu0 %v744
        %2313 = vmatmul.f32.gmra.mxu0 %v2209
        %v2314 = vpop.f32.mrf.mxu0
        %v2315 = vadd.f32 0.0, %v2314
        %2316 = vdwg.mxu0
        %2317 = vmatpush.msra.mxu0 %v837
        %2318 = vmatpush.msra.mxu0 %v834
        %2319 = vmatpush.msra.mxu0 %v831
        %2320 = vmatpush.msra.mxu0 %v828
        %2321 = vmatpush.msra.mxu0 %v825
        %2322 = vmatpush.msra.mxu0 %v822
        %2323 = vmatpush.msra.mxu0 %v819
        %2324 = vmatpush.msra.mxu0 %v816
        %2325 = vmatpush.msra.mxu0 %v813
        %2326 = vmatpush.msra.mxu0 %v810
        %2327 = vmatpush.msra.mxu0 %v807
        %2328 = vmatpush.msra.mxu0 %v804
        %2329 = vmatpush.msra.mxu0 %v801
        %2330 = vmatpush.msra.mxu0 %v798
        %2331 = vmatpush.msra.mxu0 %v795
        %2332 = vmatpush.msra.mxu0 %v792
        %2333 = vmatmul.f32.gmra.mxu0 %v2211
        %v2334 = vpop.f32.mrf.mxu0
        %v2335 = vadd.f32 %v2315, %v2334
        %2336 = vdwg.mxu0
        %2337 = vmatpush.msra.mxu0 %v885
        %2338 = vmatpush.msra.mxu0 %v882
        %2339 = vmatpush.msra.mxu0 %v879
        %2340 = vmatpush.msra.mxu0 %v876
        %2341 = vmatpush.msra.mxu0 %v873
        %2342 = vmatpush.msra.mxu0 %v870
        %2343 = vmatpush.msra.mxu0 %v867
        %2344 = vmatpush.msra.mxu0 %v864
        %2345 = vmatpush.msra.mxu0 %v861
        %2346 = vmatpush.msra.mxu0 %v858
        %2347 = vmatpush.msra.mxu0 %v855
        %2348 = vmatpush.msra.mxu0 %v852
        %2349 = vmatpush.msra.mxu0 %v849
        %2350 = vmatpush.msra.mxu0 %v846
        %2351 = vmatpush.msra.mxu0 %v843
        %2352 = vmatpush.msra.mxu0 %v840
        %2353 = vmatmul.f32.gmra.mxu0 %v2203
        %v2354 = vpop.f32.mrf.mxu0
        %v2355 = vadd.f32 %v2335, %v2354
        %2356 = vdwg.mxu0
        %2357 = vmatpush.msra.mxu0 %v790
        %2358 = vmatpush.msra.mxu0 %v787
        %2359 = vmatpush.msra.mxu0 %v784
        %2360 = vmatpush.msra.mxu0 %v781
        %2361 = vmatpush.msra.mxu0 %v778
        %2362 = vmatpush.msra.mxu0 %v775
        %2363 = vmatpush.msra.mxu0 %v772
        %2364 = vmatpush.msra.mxu0 %v769
        %2365 = vmatpush.msra.mxu0 %v766
        %2366 = vmatpush.msra.mxu0 %v763
        %2367 = vmatpush.msra.mxu0 %v760
        %2368 = vmatpush.msra.mxu0 %v757
        %2369 = vmatpush.msra.mxu0 %v754
        %2370 = vmatpush.msra.mxu0 %v751
        %2371 = vmatpush.msra.mxu0 %v748
        %2372 = vmatpush.msra.mxu0 %v745
        %2373 = vmatmul.f32.gmra.mxu0 %v2209
        %v2374 = vpop.f32.mrf.mxu0
        %v2375 = vadd.f32 0.0, %v2374
        %2376 = vdwg.mxu0
        %2377 = vmatpush.msra.mxu0 %v838
        %2378 = vmatpush.msra.mxu0 %v835
        %2379 = vmatpush.msra.mxu0 %v832
        %2380 = vmatpush.msra.mxu0 %v829
        %2381 = vmatpush.msra.mxu0 %v826
        %2382 = vmatpush.msra.mxu0 %v823
        %2383 = vmatpush.msra.mxu0 %v820
        %2384 = vmatpush.msra.mxu0 %v817
        %2385 = vmatpush.msra.mxu0 %v814
        %2386 = vmatpush.msra.mxu0 %v811
        %2387 = vmatpush.msra.mxu0 %v808
        %2388 = vmatpush.msra.mxu0 %v805
        %2389 = vmatpush.msra.mxu0 %v802
        %2390 = vmatpush.msra.mxu0 %v799
        %2391 = vmatpush.msra.mxu0 %v796
        %2392 = vmatpush.msra.mxu0 %v793
        %2393 = vmatmul.f32.gmra.mxu0 %v2211
        %v2394 = vpop.f32.mrf.mxu0
        %v2395 = vadd.f32 %v2375, %v2394
        %2396 = vdwg.mxu0
        %2397 = vmatpush.msra.mxu0 %v886
        %2398 = vmatpush.msra.mxu0 %v883
        %2399 = vmatpush.msra.mxu0 %v880
        %2400 = vmatpush.msra.mxu0 %v877
        %2401 = vmatpush.msra.mxu0 %v874
        %2402 = vmatpush.msra.mxu0 %v871
        %2403 = vmatpush.msra.mxu0 %v868
        %2404 = vmatpush.msra.mxu0 %v865
        %2405 = vmatpush.msra.mxu0 %v862
        %2406 = vmatpush.msra.mxu0 %v859
        %2407 = vmatpush.msra.mxu0 %v856
        %2408 = vmatpush.msra.mxu0 %v853
        %2409 = vmatpush.msra.mxu0 %v850
        %2410 = vmatpush.msra.mxu0 %v847
        %2411 = vmatpush.msra.mxu0 %v844
        %2412 = vmatpush.msra.mxu0 %v841
        %2413 = vmatmul.f32.gmra.mxu0 %v2203
        %v2414 = vpop.f32.mrf.mxu0
        %v2415 = vadd.f32 %v2395, %v2414
        %2416 = vdwg.mxu0
        %s2417 = scalar_lea.vmem %s611, 40 [#allocation2]
        %v2418 = vld [vmem:[%s2417] sm:$0xff]
        %v2419 = vadd.f32 %v2418, %v2295
        %s2420 = scalar_lea.vmem %s618, 80 [#allocation3]
        %v2421 = vld [vmem:[%s2420] sm:$0xff]
        %v2422 = vld [vmem:[%s2420 + $0x8] sm:$0xff]
        %v2423 = vadd.f32 %v2421, %v2355
        %v2424 = vadd.f32 %v2422, %v2415
        %v2425 = vxor.u32 %v2423, 2147483648
        %v2426 = vxor.u32 %v2424, 2147483648
        %v2427 = vmul.f32 %v2425, 1.442695
        %v2428 = vpow.pop %v2427
        %v2429 = vmul.f32 %v2426, 1.442695
        %v2430 = vpow.pop %v2429
        %v2431 = vadd.f32 %v2428, 1.0
        %v2432 = vadd.f32 %v2430, 1.0
        %v2433 = vrcp.pop %v2431
        %v2434 = vmul.f32 %v2431, %v2433
        %v2435 = vsub.f32 1.0, %v2434
        %v2436 = vmul.f32 %v2433, %v2435
        %v2437 = vadd.f32 %v2433, %v2436
        %vm2438 = vweird.f32 %v2431
        %vm2439 = vweird.f32 %v2433
        %vm2440 = vmor %vm2438, %vm2439
        %v2441 = vsel %vm2440, %v2433, %v2437
        %v2442 = vand.u32 2147483647, %v2431
        %vm2443 = vcmp.eq.f32.partialorder %v2442, 8.507059e+37
        %v2444 = vand.u32 %v2431, 2147483648
        %v2445 = vor.u32 1.1754944e-38, %v2444
        %v2446 = vsel %vm2443, %v2445, %v2441
        %v2447 = vmul.f32 1.0, %v2446
        %v2448 = vrcp.pop %v2432
        %v2449 = vmul.f32 %v2432, %v2448
        %v2450 = vsub.f32 1.0, %v2449
        %v2451 = vmul.f32 %v2448, %v2450
        %v2452 = vadd.f32 %v2448, %v2451
        %vm2453 = vweird.f32 %v2432
        %vm2454 = vweird.f32 %v2448
        %vm2455 = vmor %vm2453, %vm2454
        %v2456 = vsel %vm2455, %v2448, %v2452
        %v2457 = vand.u32 2147483647, %v2432
        %vm2458 = vcmp.eq.f32.partialorder %v2457, 8.507059e+37
        %v2459 = vand.u32 %v2432, 2147483648
        %v2460 = vor.u32 1.1754944e-38, %v2459
        %v2461 = vsel %vm2458, %v2460, %v2456
        %v2462 = vmul.f32 1.0, %v2461
        %v2463 = vsub.f32 %v2419, %v2211
        %v2464 = vmul.f32 %v2463, %v2447
        %v2465 = vadd.f32 %v2211, %v2464
        %v2466 = vsub.f32 %v2209, %v2203
        %v2467 = vmul.f32 %v2466, %v2462
        %v2468 = vadd.f32 %v2203, %v2467
        %v2469 = vmul.f32 %v2468, 1.8
        %v2470 = vadd.f32 %v2469, 0.1
        %v2471 = vsub.f32 %v2465, %v2470
        %vm2472 = vcmp.gt.f32.partialorder %v2471, 0.0
        %v2473 = vsel %vm2472, 1, 0
        %v2474 = vcvt.s32.f32 %v2473
        %v2475 = vsub.f32 1.0, %v2474
        %v2476 = vmul.f32 %v2475, %v2465
        %2477 = vmatpush.msra.mxu0 %v902
        %2478 = vmatpush.msra.mxu0 %v901
        %2479 = vmatpush.msra.mxu0 %v900
        %2480 = vmatpush.msra.mxu0 %v899
        %2481 = vmatpush.msra.mxu0 %v898
        %2482 = vmatpush.msra.mxu0 %v897
        %2483 = vmatpush.msra.mxu0 %v896
        %2484 = vmatpush.msra.mxu0 %v895
        %2485 = vmatpush.msra.mxu0 %v894
        %2486 = vmatpush.msra.mxu0 %v893
        %2487 = vmatpush.msra.mxu0 %v892
        %2488 = vmatpush.msra.mxu0 %v891
        %2489 = vmatpush.msra.mxu0 %v890
        %2490 = vmatpush.msra.mxu0 %v889
        %2491 = vmatpush.msra.mxu0 %v888
        %2492 = vmatpush.msra.mxu0 %v887
        %2493 = vmatmul.f32.gmra.mxu0 %v2474
        %v2494 = vpop.f32.mrf.mxu0
        %v2495 = vadd.f32 %v1148, %v2494
        %2496 = vdwg.mxu0
        %v2497 = vsub.f32 %v2495, %v2234
        %v2498 = vmul.f32 %v2497, %v1172
        %v2499 = vadd.f32 %v2234, %v2498
        %s2500 = scalar_lea.vmem %s671, 40 [#allocation4]
        %2501 = vst [vmem:[%s2500] sm:$0xff] %v2499
        %2502 = vmatpush.msra.mxu0 %v788
        %2503 = vmatpush.msra.mxu0 %v785
        %2504 = vmatpush.msra.mxu0 %v782
        %2505 = vmatpush.msra.mxu0 %v779
        %2506 = vmatpush.msra.mxu0 %v776
        %2507 = vmatpush.msra.mxu0 %v773
        %2508 = vmatpush.msra.mxu0 %v770
        %2509 = vmatpush.msra.mxu0 %v767
        %2510 = vmatpush.msra.mxu0 %v764
        %2511 = vmatpush.msra.mxu0 %v761
        %2512 = vmatpush.msra.mxu0 %v758
        %2513 = vmatpush.msra.mxu0 %v755
        %2514 = vmatpush.msra.mxu0 %v752
        %2515 = vmatpush.msra.mxu0 %v749
        %2516 = vmatpush.msra.mxu0 %v746
        %2517 = vmatpush.msra.mxu0 %v743
        %2518 = vmatmul.f32.gmra.mxu0 %v2474
        %v2519 = vpop.f32.mrf.mxu0
        %v2520 = vadd.f32 0.0, %v2519
        %2521 = vdwg.mxu0
        %2522 = vmatpush.msra.mxu0 %v836
        %2523 = vmatpush.msra.mxu0 %v833
        %2524 = vmatpush.msra.mxu0 %v830
        %2525 = vmatpush.msra.mxu0 %v827
        %2526 = vmatpush.msra.mxu0 %v824
        %2527 = vmatpush.msra.mxu0 %v821
        %2528 = vmatpush.msra.mxu0 %v818
        %2529 = vmatpush.msra.mxu0 %v815
        %2530 = vmatpush.msra.mxu0 %v812
        %2531 = vmatpush.msra.mxu0 %v809
        %2532 = vmatpush.msra.mxu0 %v806
        %2533 = vmatpush.msra.mxu0 %v803
        %2534 = vmatpush.msra.mxu0 %v800
        %2535 = vmatpush.msra.mxu0 %v797
        %2536 = vmatpush.msra.mxu0 %v794
        %2537 = vmatpush.msra.mxu0 %v791
        %2538 = vmatmul.f32.gmra.mxu0 %v2476
        %v2539 = vpop.f32.mrf.mxu0
        %v2540 = vadd.f32 %v2520, %v2539
        %2541 = vdwg.mxu0
        %2542 = vmatpush.msra.mxu0 %v884
        %2543 = vmatpush.msra.mxu0 %v881
        %2544 = vmatpush.msra.mxu0 %v878
        %2545 = vmatpush.msra.mxu0 %v875
        %2546 = vmatpush.msra.mxu0 %v872
        %2547 = vmatpush.msra.mxu0 %v869
        %2548 = vmatpush.msra.mxu0 %v866
        %2549 = vmatpush.msra.mxu0 %v863
        %2550 = vmatpush.msra.mxu0 %v860
        %2551 = vmatpush.msra.mxu0 %v857
        %2552 = vmatpush.msra.mxu0 %v854
        %2553 = vmatpush.msra.mxu0 %v851
        %2554 = vmatpush.msra.mxu0 %v848
        %2555 = vmatpush.msra.mxu0 %v845
        %2556 = vmatpush.msra.mxu0 %v842
        %2557 = vmatpush.msra.mxu0 %v839
        %2558 = vmatmul.f32.gmra.mxu0 %v2468
        %v2559 = vpop.f32.mrf.mxu0
        %v2560 = vadd.f32 %v2540, %v2559
        %2561 = vdwg.mxu0
        %2562 = vmatpush.msra.mxu0 %v789
        %2563 = vmatpush.msra.mxu0 %v786
        %2564 = vmatpush.msra.mxu0 %v783
        %2565 = vmatpush.msra.mxu0 %v780
        %2566 = vmatpush.msra.mxu0 %v777
        %2567 = vmatpush.msra.mxu0 %v774
        %2568 = vmatpush.msra.mxu0 %v771
        %2569 = vmatpush.msra.mxu0 %v768
        %2570 = vmatpush.msra.mxu0 %v765
        %2571 = vmatpush.msra.mxu0 %v762
        %2572 = vmatpush.msra.mxu0 %v759
        %2573 = vmatpush.msra.mxu0 %v756
        %2574 = vmatpush.msra.mxu0 %v753
        %2575 = vmatpush.msra.mxu0 %v750
        %2576 = vmatpush.msra.mxu0 %v747
        %2577 = vmatpush.msra.mxu0 %v744
        %2578 = vmatmul.f32.gmra.mxu0 %v2474
        %v2579 = vpop.f32.mrf.mxu0
        %v2580 = vadd.f32 0.0, %v2579
        %2581 = vdwg.mxu0
        %2582 = vmatpush.msra.mxu0 %v837
        %2583 = vmatpush.msra.mxu0 %v834
        %2584 = vmatpush.msra.mxu0 %v831
        %2585 = vmatpush.msra.mxu0 %v828
        %2586 = vmatpush.msra.mxu0 %v825
        %2587 = vmatpush.msra.mxu0 %v822
        %2588 = vmatpush.msra.mxu0 %v819
        %2589 = vmatpush.msra.mxu0 %v816
        %2590 = vmatpush.msra.mxu0 %v813
        %2591 = vmatpush.msra.mxu0 %v810
        %2592 = vmatpush.msra.mxu0 %v807
        %2593 = vmatpush.msra.mxu0 %v804
        %2594 = vmatpush.msra.mxu0 %v801
        %2595 = vmatpush.msra.mxu0 %v798
        %2596 = vmatpush.msra.mxu0 %v795
        %2597 = vmatpush.msra.mxu0 %v792
        %2598 = vmatmul.f32.gmra.mxu0 %v2476
        %v2599 = vpop.f32.mrf.mxu0
        %v2600 = vadd.f32 %v2580, %v2599
        %2601 = vdwg.mxu0
        %2602 = vmatpush.msra.mxu0 %v885
        %2603 = vmatpush.msra.mxu0 %v882
        %2604 = vmatpush.msra.mxu0 %v879
        %2605 = vmatpush.msra.mxu0 %v876
        %2606 = vmatpush.msra.mxu0 %v873
        %2607 = vmatpush.msra.mxu0 %v870
        %2608 = vmatpush.msra.mxu0 %v867
        %2609 = vmatpush.msra.mxu0 %v864
        %2610 = vmatpush.msra.mxu0 %v861
        %2611 = vmatpush.msra.mxu0 %v858
        %2612 = vmatpush.msra.mxu0 %v855
        %2613 = vmatpush.msra.mxu0 %v852
        %2614 = vmatpush.msra.mxu0 %v849
        %2615 = vmatpush.msra.mxu0 %v846
        %2616 = vmatpush.msra.mxu0 %v843
        %2617 = vmatpush.msra.mxu0 %v840
        %2618 = vmatmul.f32.gmra.mxu0 %v2468
        %v2619 = vpop.f32.mrf.mxu0
        %v2620 = vadd.f32 %v2600, %v2619
        %2621 = vdwg.mxu0
        %2622 = vmatpush.msra.mxu0 %v790
        %2623 = vmatpush.msra.mxu0 %v787
        %2624 = vmatpush.msra.mxu0 %v784
        %2625 = vmatpush.msra.mxu0 %v781
        %2626 = vmatpush.msra.mxu0 %v778
        %2627 = vmatpush.msra.mxu0 %v775
        %2628 = vmatpush.msra.mxu0 %v772
        %2629 = vmatpush.msra.mxu0 %v769
        %2630 = vmatpush.msra.mxu0 %v766
        %2631 = vmatpush.msra.mxu0 %v763
        %2632 = vmatpush.msra.mxu0 %v760
        %2633 = vmatpush.msra.mxu0 %v757
        %2634 = vmatpush.msra.mxu0 %v754
        %2635 = vmatpush.msra.mxu0 %v751
        %2636 = vmatpush.msra.mxu0 %v748
        %2637 = vmatpush.msra.mxu0 %v745
        %2638 = vmatmul.f32.gmra.mxu0 %v2474
        %v2639 = vpop.f32.mrf.mxu0
        %v2640 = vadd.f32 0.0, %v2639
        %2641 = vdwg.mxu0
        %2642 = vmatpush.msra.mxu0 %v838
        %2643 = vmatpush.msra.mxu0 %v835
        %2644 = vmatpush.msra.mxu0 %v832
        %2645 = vmatpush.msra.mxu0 %v829
        %2646 = vmatpush.msra.mxu0 %v826
        %2647 = vmatpush.msra.mxu0 %v823
        %2648 = vmatpush.msra.mxu0 %v820
        %2649 = vmatpush.msra.mxu0 %v817
        %2650 = vmatpush.msra.mxu0 %v814
        %2651 = vmatpush.msra.mxu0 %v811
        %2652 = vmatpush.msra.mxu0 %v808
        %2653 = vmatpush.msra.mxu0 %v805
        %2654 = vmatpush.msra.mxu0 %v802
        %2655 = vmatpush.msra.mxu0 %v799
        %2656 = vmatpush.msra.mxu0 %v796
        %2657 = vmatpush.msra.mxu0 %v793
        %2658 = vmatmul.f32.gmra.mxu0 %v2476
        %v2659 = vpop.f32.mrf.mxu0
        %v2660 = vadd.f32 %v2640, %v2659
        %2661 = vdwg.mxu0
        %2662 = vmatpush.msra.mxu0 %v886
        %2663 = vmatpush.msra.mxu0 %v883
        %2664 = vmatpush.msra.mxu0 %v880
        %2665 = vmatpush.msra.mxu0 %v877
        %2666 = vmatpush.msra.mxu0 %v874
        %2667 = vmatpush.msra.mxu0 %v871
        %2668 = vmatpush.msra.mxu0 %v868
        %2669 = vmatpush.msra.mxu0 %v865
        %2670 = vmatpush.msra.mxu0 %v862
        %2671 = vmatpush.msra.mxu0 %v859
        %2672 = vmatpush.msra.mxu0 %v856
        %2673 = vmatpush.msra.mxu0 %v853
        %2674 = vmatpush.msra.mxu0 %v850
        %2675 = vmatpush.msra.mxu0 %v847
        %2676 = vmatpush.msra.mxu0 %v844
        %2677 = vmatpush.msra.mxu0 %v841
        %2678 = vmatmul.f32.gmra.mxu0 %v2468
        %v2679 = vpop.f32.mrf.mxu0
        %v2680 = vadd.f32 %v2660, %v2679
        %2681 = vdwg.mxu0
        %s2682 = scalar_lea.vmem %s611, 48 [#allocation2]
        %v2683 = vld [vmem:[%s2682] sm:$0xff]
        %v2684 = vadd.f32 %v2683, %v2560
        %s2685 = scalar_lea.vmem %s618, 96 [#allocation3]
        %v2686 = vld [vmem:[%s2685] sm:$0xff]
        %v2687 = vld [vmem:[%s2685 + $0x8] sm:$0xff]
        %v2688 = vadd.f32 %v2686, %v2620
        %v2689 = vadd.f32 %v2687, %v2680
        %v2690 = vxor.u32 %v2688, 2147483648
        %v2691 = vxor.u32 %v2689, 2147483648
        %v2692 = vmul.f32 %v2690, 1.442695
        %v2693 = vpow.pop %v2692
        %v2694 = vmul.f32 %v2691, 1.442695
        %v2695 = vpow.pop %v2694
        %v2696 = vadd.f32 %v2693, 1.0
        %v2697 = vadd.f32 %v2695, 1.0
        %v2698 = vrcp.pop %v2696
        %v2699 = vmul.f32 %v2696, %v2698
        %v2700 = vsub.f32 1.0, %v2699
        %v2701 = vmul.f32 %v2698, %v2700
        %v2702 = vadd.f32 %v2698, %v2701
        %vm2703 = vweird.f32 %v2696
        %vm2704 = vweird.f32 %v2698
        %vm2705 = vmor %vm2703, %vm2704
        %v2706 = vsel %vm2705, %v2698, %v2702
        %v2707 = vand.u32 2147483647, %v2696
        %vm2708 = vcmp.eq.f32.partialorder %v2707, 8.507059e+37
        %v2709 = vand.u32 %v2696, 2147483648
        %v2710 = vor.u32 1.1754944e-38, %v2709
        %v2711 = vsel %vm2708, %v2710, %v2706
        %v2712 = vmul.f32 1.0, %v2711
        %v2713 = vrcp.pop %v2697
        %v2714 = vmul.f32 %v2697, %v2713
        %v2715 = vsub.f32 1.0, %v2714
        %v2716 = vmul.f32 %v2713, %v2715
        %v2717 = vadd.f32 %v2713, %v2716
        %vm2718 = vweird.f32 %v2697
        %vm2719 = vweird.f32 %v2713
        %vm2720 = vmor %vm2718, %vm2719
        %v2721 = vsel %vm2720, %v2713, %v2717
        %v2722 = vand.u32 2147483647, %v2697
        %vm2723 = vcmp.eq.f32.partialorder %v2722, 8.507059e+37
        %v2724 = vand.u32 %v2697, 2147483648
        %v2725 = vor.u32 1.1754944e-38, %v2724
        %v2726 = vsel %vm2723, %v2725, %v2721
        %v2727 = vmul.f32 1.0, %v2726
        %v2728 = vsub.f32 %v2684, %v2476
        %v2729 = vmul.f32 %v2728, %v2712
        %v2730 = vadd.f32 %v2476, %v2729
        %v2731 = vsub.f32 %v2474, %v2468
        %v2732 = vmul.f32 %v2731, %v2727
        %v2733 = vadd.f32 %v2468, %v2732
        %v2734 = vmul.f32 %v2733, 1.8
        %v2735 = vadd.f32 %v2734, 0.1
        %v2736 = vsub.f32 %v2730, %v2735
        %vm2737 = vcmp.gt.f32.partialorder %v2736, 0.0
        %v2738 = vsel %vm2737, 1, 0
        %v2739 = vcvt.s32.f32 %v2738
        %v2740 = vsub.f32 1.0, %v2739
        %v2741 = vmul.f32 %v2740, %v2730
        %2742 = vmatpush.msra.mxu0 %v902
        %2743 = vmatpush.msra.mxu0 %v901
        %2744 = vmatpush.msra.mxu0 %v900
        %2745 = vmatpush.msra.mxu0 %v899
        %2746 = vmatpush.msra.mxu0 %v898
        %2747 = vmatpush.msra.mxu0 %v897
        %2748 = vmatpush.msra.mxu0 %v896
        %2749 = vmatpush.msra.mxu0 %v895
        %2750 = vmatpush.msra.mxu0 %v894
        %2751 = vmatpush.msra.mxu0 %v893
        %2752 = vmatpush.msra.mxu0 %v892
        %2753 = vmatpush.msra.mxu0 %v891
        %2754 = vmatpush.msra.mxu0 %v890
        %2755 = vmatpush.msra.mxu0 %v889
        %2756 = vmatpush.msra.mxu0 %v888
        %2757 = vmatpush.msra.mxu0 %v887
        %2758 = vmatmul.f32.gmra.mxu0 %v2739
        %v2759 = vpop.f32.mrf.mxu0
        %v2760 = vadd.f32 %v1148, %v2759
        %2761 = vdwg.mxu0
        %v2762 = vsub.f32 %v2760, %v2499
        %v2763 = vmul.f32 %v2762, %v1172
        %v2764 = vadd.f32 %v2499, %v2763
        %s2765 = scalar_lea.vmem %s671, 48 [#allocation4]
        %2766 = vst [vmem:[%s2765] sm:$0xff] %v2764
        %2767 = vmatpush.msra.mxu0 %v788
        %2768 = vmatpush.msra.mxu0 %v785
        %2769 = vmatpush.msra.mxu0 %v782
        %2770 = vmatpush.msra.mxu0 %v779
        %2771 = vmatpush.msra.mxu0 %v776
        %2772 = vmatpush.msra.mxu0 %v773
        %2773 = vmatpush.msra.mxu0 %v770
        %2774 = vmatpush.msra.mxu0 %v767
        %2775 = vmatpush.msra.mxu0 %v764
        %2776 = vmatpush.msra.mxu0 %v761
        %2777 = vmatpush.msra.mxu0 %v758
        %2778 = vmatpush.msra.mxu0 %v755
        %2779 = vmatpush.msra.mxu0 %v752
        %2780 = vmatpush.msra.mxu0 %v749
        %2781 = vmatpush.msra.mxu0 %v746
        %2782 = vmatpush.msra.mxu0 %v743
        %2783 = vmatmul.f32.gmra.mxu0 %v2739
        %v2784 = vpop.f32.mrf.mxu0
        %v2785 = vadd.f32 0.0, %v2784
        %2786 = vdwg.mxu0
        %2787 = vmatpush.msra.mxu0 %v836
        %2788 = vmatpush.msra.mxu0 %v833
        %2789 = vmatpush.msra.mxu0 %v830
        %2790 = vmatpush.msra.mxu0 %v827
        %2791 = vmatpush.msra.mxu0 %v824
        %2792 = vmatpush.msra.mxu0 %v821
        %2793 = vmatpush.msra.mxu0 %v818
        %2794 = vmatpush.msra.mxu0 %v815
        %2795 = vmatpush.msra.mxu0 %v812
        %2796 = vmatpush.msra.mxu0 %v809
        %2797 = vmatpush.msra.mxu0 %v806
        %2798 = vmatpush.msra.mxu0 %v803
        %2799 = vmatpush.msra.mxu0 %v800
        %2800 = vmatpush.msra.mxu0 %v797
        %2801 = vmatpush.msra.mxu0 %v794
        %2802 = vmatpush.msra.mxu0 %v791
        %2803 = vmatmul.f32.gmra.mxu0 %v2741
        %v2804 = vpop.f32.mrf.mxu0
        %v2805 = vadd.f32 %v2785, %v2804
        %2806 = vdwg.mxu0
        %2807 = vmatpush.msra.mxu0 %v884
        %2808 = vmatpush.msra.mxu0 %v881
        %2809 = vmatpush.msra.mxu0 %v878
        %2810 = vmatpush.msra.mxu0 %v875
        %2811 = vmatpush.msra.mxu0 %v872
        %2812 = vmatpush.msra.mxu0 %v869
        %2813 = vmatpush.msra.mxu0 %v866
        %2814 = vmatpush.msra.mxu0 %v863
        %2815 = vmatpush.msra.mxu0 %v860
        %2816 = vmatpush.msra.mxu0 %v857
        %2817 = vmatpush.msra.mxu0 %v854
        %2818 = vmatpush.msra.mxu0 %v851
        %2819 = vmatpush.msra.mxu0 %v848
        %2820 = vmatpush.msra.mxu0 %v845
        %2821 = vmatpush.msra.mxu0 %v842
        %2822 = vmatpush.msra.mxu0 %v839
        %2823 = vmatmul.f32.gmra.mxu0 %v2733
        %v2824 = vpop.f32.mrf.mxu0
        %v2825 = vadd.f32 %v2805, %v2824
        %2826 = vdwg.mxu0
        %2827 = vmatpush.msra.mxu0 %v789
        %2828 = vmatpush.msra.mxu0 %v786
        %2829 = vmatpush.msra.mxu0 %v783
        %2830 = vmatpush.msra.mxu0 %v780
        %2831 = vmatpush.msra.mxu0 %v777
        %2832 = vmatpush.msra.mxu0 %v774
        %2833 = vmatpush.msra.mxu0 %v771
        %2834 = vmatpush.msra.mxu0 %v768
        %2835 = vmatpush.msra.mxu0 %v765
        %2836 = vmatpush.msra.mxu0 %v762
        %2837 = vmatpush.msra.mxu0 %v759
        %2838 = vmatpush.msra.mxu0 %v756
        %2839 = vmatpush.msra.mxu0 %v753
        %2840 = vmatpush.msra.mxu0 %v750
        %2841 = vmatpush.msra.mxu0 %v747
        %2842 = vmatpush.msra.mxu0 %v744
        %2843 = vmatmul.f32.gmra.mxu0 %v2739
        %v2844 = vpop.f32.mrf.mxu0
        %v2845 = vadd.f32 0.0, %v2844
        %2846 = vdwg.mxu0
        %2847 = vmatpush.msra.mxu0 %v837
        %2848 = vmatpush.msra.mxu0 %v834
        %2849 = vmatpush.msra.mxu0 %v831
        %2850 = vmatpush.msra.mxu0 %v828
        %2851 = vmatpush.msra.mxu0 %v825
        %2852 = vmatpush.msra.mxu0 %v822
        %2853 = vmatpush.msra.mxu0 %v819
        %2854 = vmatpush.msra.mxu0 %v816
        %2855 = vmatpush.msra.mxu0 %v813
        %2856 = vmatpush.msra.mxu0 %v810
        %2857 = vmatpush.msra.mxu0 %v807
        %2858 = vmatpush.msra.mxu0 %v804
        %2859 = vmatpush.msra.mxu0 %v801
        %2860 = vmatpush.msra.mxu0 %v798
        %2861 = vmatpush.msra.mxu0 %v795
        %2862 = vmatpush.msra.mxu0 %v792
        %2863 = vmatmul.f32.gmra.mxu0 %v2741
        %v2864 = vpop.f32.mrf.mxu0
        %v2865 = vadd.f32 %v2845, %v2864
        %2866 = vdwg.mxu0
        %2867 = vmatpush.msra.mxu0 %v885
        %2868 = vmatpush.msra.mxu0 %v882
        %2869 = vmatpush.msra.mxu0 %v879
        %2870 = vmatpush.msra.mxu0 %v876
        %2871 = vmatpush.msra.mxu0 %v873
        %2872 = vmatpush.msra.mxu0 %v870
        %2873 = vmatpush.msra.mxu0 %v867
        %2874 = vmatpush.msra.mxu0 %v864
        %2875 = vmatpush.msra.mxu0 %v861
        %2876 = vmatpush.msra.mxu0 %v858
        %2877 = vmatpush.msra.mxu0 %v855
        %2878 = vmatpush.msra.mxu0 %v852
        %2879 = vmatpush.msra.mxu0 %v849
        %2880 = vmatpush.msra.mxu0 %v846
        %2881 = vmatpush.msra.mxu0 %v843
        %2882 = vmatpush.msra.mxu0 %v840
        %2883 = vmatmul.f32.gmra.mxu0 %v2733
        %v2884 = vpop.f32.mrf.mxu0
        %v2885 = vadd.f32 %v2865, %v2884
        %2886 = vdwg.mxu0
        %2887 = vmatpush.msra.mxu0 %v790
        %2888 = vmatpush.msra.mxu0 %v787
        %2889 = vmatpush.msra.mxu0 %v784
        %2890 = vmatpush.msra.mxu0 %v781
        %2891 = vmatpush.msra.mxu0 %v778
        %2892 = vmatpush.msra.mxu0 %v775
        %2893 = vmatpush.msra.mxu0 %v772
        %2894 = vmatpush.msra.mxu0 %v769
        %2895 = vmatpush.msra.mxu0 %v766
        %2896 = vmatpush.msra.mxu0 %v763
        %2897 = vmatpush.msra.mxu0 %v760
        %2898 = vmatpush.msra.mxu0 %v757
        %2899 = vmatpush.msra.mxu0 %v754
        %2900 = vmatpush.msra.mxu0 %v751
        %2901 = vmatpush.msra.mxu0 %v748
        %2902 = vmatpush.msra.mxu0 %v745
        %2903 = vmatmul.f32.gmra.mxu0 %v2739
        %v2904 = vpop.f32.mrf.mxu0
        %v2905 = vadd.f32 0.0, %v2904
        %2906 = vdwg.mxu0
        %2907 = vmatpush.msra.mxu0 %v838
        %2908 = vmatpush.msra.mxu0 %v835
        %2909 = vmatpush.msra.mxu0 %v832
        %2910 = vmatpush.msra.mxu0 %v829
        %2911 = vmatpush.msra.mxu0 %v826
        %2912 = vmatpush.msra.mxu0 %v823
        %2913 = vmatpush.msra.mxu0 %v820
        %2914 = vmatpush.msra.mxu0 %v817
        %2915 = vmatpush.msra.mxu0 %v814
        %2916 = vmatpush.msra.mxu0 %v811
        %2917 = vmatpush.msra.mxu0 %v808
        %2918 = vmatpush.msra.mxu0 %v805
        %2919 = vmatpush.msra.mxu0 %v802
        %2920 = vmatpush.msra.mxu0 %v799
        %2921 = vmatpush.msra.mxu0 %v796
        %2922 = vmatpush.msra.mxu0 %v793
        %2923 = vmatmul.f32.gmra.mxu0 %v2741
        %v2924 = vpop.f32.mrf.mxu0
        %v2925 = vadd.f32 %v2905, %v2924
        %2926 = vdwg.mxu0
        %2927 = vmatpush.msra.mxu0 %v886
        %2928 = vmatpush.msra.mxu0 %v883
        %2929 = vmatpush.msra.mxu0 %v880
        %2930 = vmatpush.msra.mxu0 %v877
        %2931 = vmatpush.msra.mxu0 %v874
        %2932 = vmatpush.msra.mxu0 %v871
        %2933 = vmatpush.msra.mxu0 %v868
        %2934 = vmatpush.msra.mxu0 %v865
        %2935 = vmatpush.msra.mxu0 %v862
        %2936 = vmatpush.msra.mxu0 %v859
        %2937 = vmatpush.msra.mxu0 %v856
        %2938 = vmatpush.msra.mxu0 %v853
        %2939 = vmatpush.msra.mxu0 %v850
        %2940 = vmatpush.msra.mxu0 %v847
        %2941 = vmatpush.msra.mxu0 %v844
        %2942 = vmatpush.msra.mxu0 %v841
        %2943 = vmatmul.f32.gmra.mxu0 %v2733
        %v2944 = vpop.f32.mrf.mxu0
        %v2945 = vadd.f32 %v2925, %v2944
        %2946 = vdwg.mxu0
        %s2947 = scalar_lea.vmem %s611, 56 [#allocation2]
        %v2948 = vld [vmem:[%s2947] sm:$0xff]
        %v2949 = vadd.f32 %v2948, %v2825
        %s2950 = scalar_lea.vmem %s618, 112 [#allocation3]
        %v2951 = vld [vmem:[%s2950] sm:$0xff]
        %v2952 = vld [vmem:[%s2950 + $0x8] sm:$0xff]
        %v2953 = vadd.f32 %v2951, %v2885
        %v2954 = vadd.f32 %v2952, %v2945
        %v2955 = vxor.u32 %v2953, 2147483648
        %v2956 = vxor.u32 %v2954, 2147483648
        %v2957 = vmul.f32 %v2955, 1.442695
        %v2958 = vpow.pop %v2957
        %v2959 = vmul.f32 %v2956, 1.442695
        %v2960 = vpow.pop %v2959
        %v2961 = vadd.f32 %v2958, 1.0
        %v2962 = vadd.f32 %v2960, 1.0
        %v2963 = vrcp.pop %v2961
        %v2964 = vmul.f32 %v2961, %v2963
        %v2965 = vsub.f32 1.0, %v2964
        %v2966 = vmul.f32 %v2963, %v2965
        %v2967 = vadd.f32 %v2963, %v2966
        %vm2968 = vweird.f32 %v2961
        %vm2969 = vweird.f32 %v2963
        %vm2970 = vmor %vm2968, %vm2969
        %v2971 = vsel %vm2970, %v2963, %v2967
        %v2972 = vand.u32 2147483647, %v2961
        %vm2973 = vcmp.eq.f32.partialorder %v2972, 8.507059e+37
        %v2974 = vand.u32 %v2961, 2147483648
        %v2975 = vor.u32 1.1754944e-38, %v2974
        %v2976 = vsel %vm2973, %v2975, %v2971
        %v2977 = vmul.f32 1.0, %v2976
        %v2978 = vrcp.pop %v2962
        %v2979 = vmul.f32 %v2962, %v2978
        %v2980 = vsub.f32 1.0, %v2979
        %v2981 = vmul.f32 %v2978, %v2980
        %v2982 = vadd.f32 %v2978, %v2981
        %vm2983 = vweird.f32 %v2962
        %vm2984 = vweird.f32 %v2978
        %vm2985 = vmor %vm2983, %vm2984
        %v2986 = vsel %vm2985, %v2978, %v2982
        %v2987 = vand.u32 2147483647, %v2962
        %vm2988 = vcmp.eq.f32.partialorder %v2987, 8.507059e+37
        %v2989 = vand.u32 %v2962, 2147483648
        %v2990 = vor.u32 1.1754944e-38, %v2989
        %v2991 = vsel %vm2988, %v2990, %v2986
        %v2992 = vmul.f32 1.0, %v2991
        %v2993 = vsub.f32 %v2949, %v2741
        %v2994 = vmul.f32 %v2993, %v2977
        %v2995 = vadd.f32 %v2741, %v2994
        %v2996 = vsub.f32 %v2739, %v2733
        %v2997 = vmul.f32 %v2996, %v2992
        %v2998 = vadd.f32 %v2733, %v2997
        %v2999 = vmul.f32 %v2998, 1.8
        %v3000 = vadd.f32 %v2999, 0.1
        %v3001 = vsub.f32 %v2995, %v3000
        %vm3002 = vcmp.gt.f32.partialorder %v3001, 0.0
        %v3003 = vsel %vm3002, 1, 0
        %v3004 = vcvt.s32.f32 %v3003
        %v3005 = vsub.f32 1.0, %v3004
        %v3006 = vmul.f32 %v3005, %v2995
        %3007 = vmatpush.msra.mxu0 %v902
        %3008 = vmatpush.msra.mxu0 %v901
        %3009 = vmatpush.msra.mxu0 %v900
        %3010 = vmatpush.msra.mxu0 %v899
        %3011 = vmatpush.msra.mxu0 %v898
        %3012 = vmatpush.msra.mxu0 %v897
        %3013 = vmatpush.msra.mxu0 %v896
        %3014 = vmatpush.msra.mxu0 %v895
        %3015 = vmatpush.msra.mxu0 %v894
        %3016 = vmatpush.msra.mxu0 %v893
        %3017 = vmatpush.msra.mxu0 %v892
        %3018 = vmatpush.msra.mxu0 %v891
        %3019 = vmatpush.msra.mxu0 %v890
        %3020 = vmatpush.msra.mxu0 %v889
        %3021 = vmatpush.msra.mxu0 %v888
        %3022 = vmatpush.msra.mxu0 %v887
        %3023 = vmatmul.f32.gmra.mxu0 %v3004
        %v3024 = vpop.f32.mrf.mxu0
        %v3025 = vadd.f32 %v1148, %v3024
        %3026 = vdwg.mxu0
        %v3027 = vsub.f32 %v3025, %v2764
        %v3028 = vmul.f32 %v3027, %v1172
        %v3029 = vadd.f32 %v2764, %v3028
        %s3030 = scalar_lea.vmem %s671, 56 [#allocation4]
        %3031 = vst [vmem:[%s3030] sm:$0xff] %v3029
        %3032 = vst [vmem:[%s718] sm:$0xff] %v3006
        %3033 = vst [vmem:[%s722] sm:$0xff] %v3004
        %3034 = vst [vmem:[%s726] sm:$0xff] %v2998
        %3035 = vst [vmem:[%s730] sm:$0xff] %v3029
        %s3036 = sand.u32 %s292, 1
        %s3037 = sand.u32 %s292, 1
        %s3038 = smul.addr %s3037, 64
        %s3039 = scalar_lea.vmem [#allocation4], %s3038
        %p3040 = scmp.lt.s32.totalorder %s30, 1
        %s3041 = scalar_select %p3040, %s30, 1
        %s3042 = smul.addr %s3041, 8
        %s3043 = scalar_lea.vmem %s11, %s3042
        %p3044 = scmp.lt.s32.totalorder %s30, 1
        %s3045 = scalar_select %p3044, %s30, 1
        %s3046 = smul.addr %s3045, 8
        %s3047 = scalar_lea.vmem %s12, %s3046
        %p3048 = scmp.lt.s32.totalorder %s30, 1
        %s3049 = scalar_select %p3048, %s30, 1
        %s3050 = smul.addr %s3049, 8
        %s3051 = scalar_lea.vmem %s13, %s3050
        %p3052 = scmp.lt.s32.totalorder %s30, 1
        %s3053 = scalar_select %p3052, %s30, 1
        %s3054 = smul.addr %s3053, 8
        %s3055 = scalar_lea.vmem %s14, %s3054
        // Predicated region
        $region126: #{seq_model_forward.1} parent=112 // pred_check
          %p3056 = pneg %p302
        $region127: #{seq_model_forward.1} parent=112 // pred_check_branch
          %3058 = sbr.rel (%p3056) target = $region129
        $region128: #{seq_model_forward.1} parent=112 // pred_region
          %s3059 = smul.u32 8, %s31
          %s3060 = smul.addr %s3059, 2
          %s3061 = sadd.s32 %s30, %s3060
          %s3062 = smul.addr %s3061, 8
          %s3063 = scalar_lea.vmem %s10, %s3062
          // Predicated region
          $region130: #{seq_model_forward.1} parent=128 // pred_check
            _
          $region131: #{seq_model_forward.1} parent=128 // pred_check_branch
            %3065 = sbr.rel (0) target = $region133
          $region132: #{seq_model_forward.1} parent=128 // pred_region
            // Predicated region
            $region134: #{seq_model_forward.1} parent=132 // pred_check
              _
            $region135: #{seq_model_forward.1} parent=132 // pred_check_branch
              %3067 = sbr.rel (0) target = $region137
            $region136: #{seq_model_forward.1} parent=132 // pred_region
              // Predicated region
              $region149: #{seq_model_forward.1} parent=136 // pred_check
                _
              $region150: #{seq_model_forward.1} parent=136 // pred_check_branch
                %3097 = sbr.rel (0) target = $region152
              $region151: #{seq_model_forward.1} parent=136 // pred_region
                loop: start=0, step=1, limit=1
                $region153: #{seq_model_forward.1} parent=151 // loop_pre_header
                  _
                $region154: #{seq_model_forward.1} parent=151 // loop_header
                  %s3099 = sphi 0, %s3103
                  %p3100 = scmp.ge.s32.totalorder %s3099, 1
                  %s3104 = sphi %s3039, %s3039
                  %s3105 = sphi %s3063, %s3063
                $region155: #{seq_model_forward.1} parent=151 // loop_header_branch
                  %3102 = sbr.rel (%p3100) target = $region159
                $region156: #{seq_model_forward.1} parent=151 // loop_body
                  %v3106 = vld [vmem:[%s3104] sm:$0xff]
                  %3107 = vst [vmem:[%s3105] sm:$0xff] %v3106
                  %v3108 = vld [vmem:[%s3104 + $0x8] sm:$0xff]
                  %3109 = vst [vmem:[%s3105 + $0x10] sm:$0xff] %v3108
                  %v3110 = vld [vmem:[%s3104 + $0x10] sm:$0xff]
                  %3111 = vst [vmem:[%s3105 + $0x20] sm:$0xff] %v3110
                  %v3112 = vld [vmem:[%s3104 + $0x18] sm:$0xff]
                  %3113 = vst [vmem:[%s3105 + $0x30] sm:$0xff] %v3112
                  %v3114 = vld [vmem:[%s3104 + $0x20] sm:$0xff]
                  %3115 = vst [vmem:[%s3105 + $0x40] sm:$0xff] %v3114
                  %v3116 = vld [vmem:[%s3104 + $0x28] sm:$0xff]
                  %3117 = vst [vmem:[%s3105 + $0x50] sm:$0xff] %v3116
                  %v3118 = vld [vmem:[%s3104 + $0x30] sm:$0xff]
                  %3119 = vst [vmem:[%s3105 + $0x60] sm:$0xff] %v3118
                  %v3120 = vld [vmem:[%s3104 + $0x38] sm:$0xff]
                  %3121 = vst [vmem:[%s3105 + $0x70] sm:$0xff] %v3120
                $region157: #{seq_model_forward.1} parent=151 // loop_footer
                  %s3103 = sadd.s32 1, %s3099
                $region158: #{seq_model_forward.1} parent=151 // loop_footer_branch
                  %3098 = sbr.rel target = $region154
                $region159: #{seq_model_forward.1} parent=151 // loop_exit
                  _
              $region152: #{seq_model_forward.1} parent=136 // pred_fallthru
                _
              // Predicated region
              $region160: #{seq_model_forward.1} parent=136 // pred_check
                _
              $region161: #{seq_model_forward.1} parent=136 // pred_check_branch
                %3123 = sbr.rel target = $region163
              $region162: #{seq_model_forward.1} parent=136 // pred_region
                _
              $region163: #{seq_model_forward.1} parent=136 // pred_fallthru
                _
            $region137: #{seq_model_forward.1} parent=132 // pred_fallthru
              _
            // Predicated region
            $region138: #{seq_model_forward.1} parent=132 // pred_check
              _
            $region139: #{seq_model_forward.1} parent=132 // pred_check_branch
              %3069 = sbr.rel target = $region141
            $region140: #{seq_model_forward.1} parent=132 // pred_region
              %s3071 = ssub.s32 256, 1
              loop: start=0, step=1, limit=1
              $region142: #{seq_model_forward.1} parent=140 // loop_pre_header
                _
              $region143: #{seq_model_forward.1} parent=140 // loop_header
                %s3073 = sphi 0, %s3077
                %p3074 = scmp.ge.s32.totalorder %s3073, 1
                %s3078 = sphi %s3039, %s3039
                %s3079 = sphi %s3063, %s3063
              $region144: #{seq_model_forward.1} parent=140 // loop_header_branch
                %3076 = sbr.rel (%p3074) target = $region148
              $region145: #{seq_model_forward.1} parent=140 // loop_body
                %v3080 = vld [vmem:[%s3078] sm:%s3071]
                %3081 = vst [vmem:[%s3079] sm:%s3071] %v3080
                %v3082 = vld [vmem:[%s3078 + $0x8] sm:%s3071]
                %3083 = vst [vmem:[%s3079 + $0x10] sm:%s3071] %v3082
                %v3084 = vld [vmem:[%s3078 + $0x10] sm:%s3071]
                %3085 = vst [vmem:[%s3079 + $0x20] sm:%s3071] %v3084
                %v3086 = vld [vmem:[%s3078 + $0x18] sm:%s3071]
                %3087 = vst [vmem:[%s3079 + $0x30] sm:%s3071] %v3086
                %v3088 = vld [vmem:[%s3078 + $0x20] sm:%s3071]
                %3089 = vst [vmem:[%s3079 + $0x40] sm:%s3071] %v3088
                %v3090 = vld [vmem:[%s3078 + $0x28] sm:%s3071]
                %3091 = vst [vmem:[%s3079 + $0x50] sm:%s3071] %v3090
                %v3092 = vld [vmem:[%s3078 + $0x30] sm:%s3071]
                %3093 = vst [vmem:[%s3079 + $0x60] sm:%s3071] %v3092
                %v3094 = vld [vmem:[%s3078 + $0x38] sm:%s3071]
                %3095 = vst [vmem:[%s3079 + $0x70] sm:%s3071] %v3094
              $region146: #{seq_model_forward.1} parent=140 // loop_footer
                %s3077 = sadd.s32 1, %s3073
              $region147: #{seq_model_forward.1} parent=140 // loop_footer_branch
                %3072 = sbr.rel target = $region143
              $region148: #{seq_model_forward.1} parent=140 // loop_exit
                _
            $region141: #{seq_model_forward.1} parent=132 // pred_fallthru
              _
          $region133: #{seq_model_forward.1} parent=128 // pred_fallthru
            _
          %3124 = vnop
        $region129: #{seq_model_forward.1} parent=112 // pred_fallthru
          _
        // Predicated region
        $region164: #{seq_model_forward.1} parent=112 // pred_check
          %p3125 = pneg %p328
        $region165: #{seq_model_forward.1} parent=112 // pred_check_branch
          %3127 = sbr.rel (%p3125) target = $region167
        $region166: #{seq_model_forward.1} parent=112 // pred_region
          _
        $region167: #{seq_model_forward.1} parent=112 // pred_fallthru
          _
        // Predicated region
        $region168: #{seq_model_forward.1} parent=112 // pred_check
          %p3128 = pneg %p354
        $region169: #{seq_model_forward.1} parent=112 // pred_check_branch
          %3130 = sbr.rel (%p3128) target = $region171
        $region170: #{seq_model_forward.1} parent=112 // pred_region
          _
        $region171: #{seq_model_forward.1} parent=112 // pred_fallthru
          _
        // Predicated region
        $region172: #{seq_model_forward.1} parent=112 // pred_check
          %p3131 = pneg %p380
        $region173: #{seq_model_forward.1} parent=112 // pred_check_branch
          %3133 = sbr.rel (%p3131) target = $region175
        $region174: #{seq_model_forward.1} parent=112 // pred_region
          _
        $region175: #{seq_model_forward.1} parent=112 // pred_fallthru
          _
        // Predicated region
        $region176: #{seq_model_forward.1} parent=112 // pred_check
          %p3134 = pneg %p406
        $region177: #{seq_model_forward.1} parent=112 // pred_check_branch
          %3136 = sbr.rel (%p3134) target = $region179
        $region178: #{seq_model_forward.1} parent=112 // pred_region
          _
        $region179: #{seq_model_forward.1} parent=112 // pred_fallthru
          _
      $region113: #{seq_model_forward.1} parent=5 // pred_fallthru
        _
      %p3137 = scmp.le.s32.totalorder 2, %s21
      // Predicated region
      $region180: #{seq_model_forward.1} parent=5 // pred_check
        %p3138 = pneg %p3137
      $region181: #{seq_model_forward.1} parent=5 // pred_check_branch
        %3140 = sbr.rel (%p3138) target = $region183
      $region182: #{seq_model_forward.1} parent=5 // pred_region
        %s3141 = ssub.s32 %s21, 2
        // Predicated region
        $region184: #{seq_model_forward.1} parent=182 // pred_check
          %p3142 = pneg %p308
        $region185: #{seq_model_forward.1} parent=182 // pred_check_branch
          %3144 = sbr.rel (%p3142) target = $region187
        $region186: #{seq_model_forward.1} parent=182 // pred_region
          %s3145 = sand.u32 %s293, 1
          %s3146 = sand.u32 %s293, 1
          %s3147 = smul.addr %s3146, 64
          %s3148 = scalar_lea.vmem [#allocation4], %s3147
        $region187: #{seq_model_forward.1} parent=182 // pred_fallthru
          _
        // Predicated region
        $region188: #{seq_model_forward.1} parent=182 // pred_check
          %p3149 = pneg %p334
        $region189: #{seq_model_forward.1} parent=182 // pred_check_branch
          %3151 = sbr.rel (%p3149) target = $region191
        $region190: #{seq_model_forward.1} parent=182 // pred_region
          %p3152 = scmp.lt.s32.totalorder %s32, 1
          %s3153 = scalar_select %p3152, %s32, 1
          %s3154 = smul.addr %s3153, 8
          %s3155 = scalar_lea.vmem %s11, %s3154
        $region191: #{seq_model_forward.1} parent=182 // pred_fallthru
          _
        // Predicated region
        $region192: #{seq_model_forward.1} parent=182 // pred_check
          %p3156 = pneg %p360
        $region193: #{seq_model_forward.1} parent=182 // pred_check_branch
          %3158 = sbr.rel (%p3156) target = $region195
        $region194: #{seq_model_forward.1} parent=182 // pred_region
          %p3159 = scmp.lt.s32.totalorder %s32, 1
          %s3160 = scalar_select %p3159, %s32, 1
          %s3161 = smul.addr %s3160, 8
          %s3162 = scalar_lea.vmem %s12, %s3161
        $region195: #{seq_model_forward.1} parent=182 // pred_fallthru
          _
        // Predicated region
        $region196: #{seq_model_forward.1} parent=182 // pred_check
          %p3163 = pneg %p386
        $region197: #{seq_model_forward.1} parent=182 // pred_check_branch
          %3165 = sbr.rel (%p3163) target = $region199
        $region198: #{seq_model_forward.1} parent=182 // pred_region
          %p3166 = scmp.lt.s32.totalorder %s32, 1
          %s3167 = scalar_select %p3166, %s32, 1
          %s3168 = smul.addr %s3167, 8
          %s3169 = scalar_lea.vmem %s13, %s3168
        $region199: #{seq_model_forward.1} parent=182 // pred_fallthru
          _
        // Predicated region
        $region200: #{seq_model_forward.1} parent=182 // pred_check
          %p3170 = pneg %p412
        $region201: #{seq_model_forward.1} parent=182 // pred_check_branch
          %3172 = sbr.rel (%p3170) target = $region203
        $region202: #{seq_model_forward.1} parent=182 // pred_region
          %p3173 = scmp.lt.s32.totalorder %s32, 1
          %s3174 = scalar_select %p3173, %s32, 1
          %s3175 = smul.addr %s3174, 8
          %s3176 = scalar_lea.vmem %s14, %s3175
        $region203: #{seq_model_forward.1} parent=182 // pred_fallthru
          _
      $region183: #{seq_model_forward.1} parent=5 // pred_fallthru
        _
    $region6: #{seq_model_forward.1} parent=1 // loop_footer
      %s25 = sadd.s32 1, %s21
    $region7: #{seq_model_forward.1} parent=1 // loop_footer_branch
      %20 = sbr.rel target = $region3
    $region8: #{seq_model_forward.1} parent=1 // loop_exit
      _

</llo_original>
